<compile_context>
chip_gen: v7x
topology: tpu7x:2x2x1
jax: 0.10.0
libtpu: 0.0.40
codegen_flags: <defaults>
</compile_context>

<pallas_src>
import functools

import jax
import jax.numpy as jnp
from jax import lax
from jax.experimental import pallas as pl
from jax.experimental.pallas import tpu as pltpu


def _vq_kernel(x_ref, emb_ref, half_esq_ref,
               quant_ref, idx_ref, sse_ref, encsum_ref,
               *, hw, n_hw_tiles, ragged, bf16_distances):
    x = x_ref[...]                                    # (C, TH), input dtype
    emb = emb_ref[...]                                # (K, D) f32
    half_esq = half_esq_ref[...]                      # (K, 1) f32 = 0.5*|e_k|^2

    k = emb.shape[0]
    th = x.shape[1]

    x_f32 = x.astype(jnp.float32)

    if bf16_distances:
        lhs = emb.astype(jnp.bfloat16)
        rhs = x.astype(jnp.bfloat16)
        prec = None                                   # single bf16 MXU pass
    else:
        lhs = emb
        rhs = x_f32
        prec = lax.Precision.HIGHEST                  # exact f32 path

    # cross[k, p] = e_k . x_p  (MXU, f32 accumulation)
    cross = lax.dot_general(lhs, rhs, (((1,), (0,)), ((), ())),
                            preferred_element_type=jnp.float32,
                            precision=prec)           # (K, TH)

    # argmin_k |x - e_k|^2 == argmin_k (0.5*|e_k|^2 - x . e_k)
    dists = half_esq - cross                          # (K, TH)
    min_d = jnp.min(dists, axis=0, keepdims=True)     # (1, TH)

    # First-match argmin (matches torch.argmin tie-breaking) -> one-hot cols.
    k_iota = lax.broadcasted_iota(jnp.int32, (k, th), 0)
    cand = jnp.where(dists == min_d, k_iota, k)
    argmin = jnp.min(cand, axis=0, keepdims=True)     # (1, TH) int32
    enc = (k_iota == argmin).astype(jnp.float32)      # (K, TH)

    # quantized column block = embedding^T @ one-hot (exact codebook rows).
    quant = lax.dot_general(emb, enc, (((0,), (0,)), ((), ())),
                            preferred_element_type=jnp.float32,
                            precision=lax.Precision.HIGHEST)   # (C, TH)
    quant_ref[...] = quant.astype(quant_ref.dtype)
    idx_ref[...] = argmin                             # lane-dense int32 row

    # Per-position SSE from the min distance: |x|^2 + 2*min(0.5|e|^2 - x.e).
    x_sq = jnp.sum(x_f32 * x_f32, axis=0, keepdims=True)        # (1, TH)
    row_sse = jnp.maximum(x_sq + 2.0 * min_d, 0.0)               # (1, TH)

    # Fast path: unmasked per-tile partial reductions (interior tiles).
    sse_ref[...] = jnp.sum(row_sse).reshape(1, 1)
    encsum_ref[...] = jnp.sum(enc, axis=1, keepdims=True)        # (K, 1)

    if ragged:
        # Only the last H*W tile has out-of-range columns (garbage input
        # columns); rewrite its partials with those columns masked out.
        j = pl.program_id(1)

        @pl.when(j == n_hw_tiles - 1)
        def _():
            pos = j * th + lax.broadcasted_iota(jnp.int32, (1, th), 1)
            valid = pos < hw                                     # (1, TH)
            sse_ref[...] = jnp.sum(
                jnp.where(valid, row_sse, 0.0)).reshape(1, 1)
            encsum_ref[...] = jnp.sum(
                enc * valid.astype(jnp.float32), axis=1, keepdims=True)


@functools.partial(jax.jit,
                   static_argnames=("tile_hw", "bf16_distances",
                                    "return_dense_encodings"))
def vector_quantizer_ema_forward(x, embedding_w, commitment_cost=0.25, *,
                                 tile_hw=2048, bf16_distances=True,
                                 return_dense_encodings=False):
    """Eval-mode VectorQuantizerEMA forward.

    x: (B, C, H, W) NCHW (PyTorch layout), C == embedding_dim.
    embedding_w: (num_embeddings, embedding_dim).
    Returns (loss, quantized (B, C, H, W) in x.dtype, perplexity, encodings)
    where `encodings` is the dense (N, K) one-hot if return_dense_encodings,
    otherwise the compact int32 nearest-code indices of shape (N,).
    """
    B, C, H, W = x.shape
    K, D = embedding_w.shape
    assert C == D, "channel dim must equal embedding_dim"
    HW = H * W
    N = B * HW

    emb = embedding_w.astype(jnp.float32)
    half_esq = 0.5 * jnp.sum(emb * emb, axis=1, keepdims=True)   # (K, 1)

    # Tile over the flattened spatial (lane) axis: full extent when it fits
    # (no ragged edge at all), otherwise a lane-dense multiple of 128.
    tile_hw = max(int(tile_hw), 128)
    th = HW if HW <= tile_hw else (tile_hw // 128) * 128
    nt = -(-HW // th)
    ragged = (HW % th) != 0

    x3 = x.reshape(B, C, HW)          # free view of the NCHW tensor

    kernel = functools.partial(_vq_kernel, hw=HW, n_hw_tiles=nt,
                               ragged=ragged, bf16_distances=bf16_distances)

    quant3, idx_p, sse_p, encsum_p = pl.pallas_call(
        kernel,
        out_shape=(
            jax.ShapeDtypeStruct((B, C, HW), x.dtype),          # quantized NCHW
            jax.ShapeDtypeStruct((B, nt, 1, th), jnp.int32),    # lane-dense idx
            jax.ShapeDtypeStruct((B, nt, 1, 1), jnp.float32),   # SSE partials
            jax.ShapeDtypeStruct((B, nt, K, 1), jnp.float32),   # enc-sum partials
        ),
        grid_spec=pltpu.PrefetchScalarGridSpec(
            num_scalar_prefetch=0,
            grid=(B, nt),
            in_specs=[
                pl.BlockSpec((None, C, th), lambda b, j: (b, 0, j)),
                pl.BlockSpec((K, D), lambda b, j: (0, 0)),
                pl.BlockSpec((K, 1), lambda b, j: (0, 0)),
            ],
            out_specs=[
                pl.BlockSpec((None, C, th), lambda b, j: (b, 0, j)),
                pl.BlockSpec((None, None, 1, th), lambda b, j: (b, j, 0, 0)),
                pl.BlockSpec((None, None, 1, 1), lambda b, j: (b, j, 0, 0)),
                pl.BlockSpec((None, None, K, 1), lambda b, j: (b, j, 0, 0)),
            ],
        ),
        compiler_params=pltpu.CompilerParams(
            # NOTE: on v7x, consider pltpu.CORE_PARALLEL on a leading axis to
            # guarantee sharding across the 2 TensorCores.
            dimension_semantics=("parallel", "parallel"),
            vmem_limit_bytes=48 * 1024 * 1024),
    )(x3, emb, half_esq)

    # Reduce per-tile partials.
    sse = jnp.sum(sse_p)
    encsum = jnp.sum(encsum_p, axis=(0, 1, 3))                   # (K,)

    e_latent_loss = sse / jnp.float32(N * D)
    loss = commitment_cost * e_latent_loss

    avg_probs = encsum / jnp.float32(N)
    perplexity = jnp.exp(-jnp.sum(avg_probs * jnp.log(avg_probs + 1e-10)))

    # Straight-through estimator: forward value equals the quantized rows.
    quantized = quant3.reshape(B, C, H, W)

    indices = idx_p.reshape(B, nt * th)
    if nt * th != HW:
        indices = indices[:, :HW]
    indices = indices.reshape(N)

    if return_dense_encodings:
        # Dense one-hot only on request (it is a large HBM write: N*K floats).
        encodings = jax.nn.one_hot(indices, K, dtype=jnp.float32)
        return loss, quantized, perplexity, encodings
    return loss, quantized, perplexity, indices


def _reference(x_nchw, embedding_w, commitment_cost):
    """Pure-JAX port of the PyTorch forward (eval mode), f32 throughout."""
    B, C, H, W = x_nchw.shape
    K, D = embedding_w.shape
    inputs = jnp.transpose(x_nchw, (0, 2, 3, 1)).astype(jnp.float32)
    flat = inputs.reshape(-1, D)
    d = (jnp.sum(flat ** 2, axis=1, keepdims=True)
         + jnp.sum(embedding_w ** 2, axis=1)
         - 2.0 * jnp.dot(flat, embedding_w.T,
                         precision=lax.Precision.HIGHEST))
    idx = jnp.argmin(d, axis=1)
    enc = jax.nn.one_hot(idx, K, dtype=jnp.float32)
    quant = jnp.dot(enc, embedding_w, precision=lax.Precision.HIGHEST)
    loss = commitment_cost * jnp.mean((quant - flat) ** 2)
    p = jnp.mean(enc, axis=0)
    perp = jnp.exp(-jnp.sum(p * jnp.log(p + 1e-10)))
    quant_nchw = jnp.transpose(quant.reshape(B, H, W, D), (0, 3, 1, 2))
    return loss, quant_nchw, perp, enc, idx, d


if __name__ == "__main__":
    num_embeddings = 128
    embedding_dim = 64
    commitment_cost = 0.25

    key = jax.random.PRNGKey(0)
    k_x1, k_x2, k_emb = jax.random.split(key, 3)

    # Deterministic parameter init (embedding.weight.data.normal_()).
    embedding_w = jax.random.normal(
        k_emb, (num_embeddings, embedding_dim), dtype=jnp.float32)

    # Case 1: (2, 64, 16, 16) -> HW = 256, two 128-wide tiles, no ragged edge.
    x1 = jax.random.normal(k_x1, (2, embedding_dim, 16, 16), dtype=jnp.float32)
    # Case 2: (2, 64, 12, 12) -> HW = 144, ragged last tile (128 + 16).
    x2 = jax.random.normal(k_x2, (2, embedding_dim, 12, 12), dtype=jnp.float32)

    # --- Exact checks: f32-distance path, dense encodings for API parity ---
    for x in (x1, x2):
        loss, quant, perp, enc = vector_quantizer_ema_forward(
            x, embedding_w, commitment_cost, tile_hw=128,
            bf16_distances=False, return_dense_encodings=True)
        jax.block_until_ready((loss, quant, perp, enc))

        loss_r, quant_r, perp_r, enc_r, idx_r, d_r = _reference(
            x, embedding_w, commitment_cost)
        B, C, H, W = x.shape
        N = B * H * W
        idx = jnp.argmax(enc, axis=1)

        # The chosen code must achieve the minimal distance (robust to ties).
        d_choice = d_r[jnp.arange(N), idx]
        assert jnp.allclose(d_choice, jnp.min(d_r, axis=1),
                            atol=1e-3, rtol=1e-4)
        # Straight-through value == exact codebook rows of the chosen codes.
        quant_expected = jnp.transpose(
            embedding_w[idx].reshape(B, H, W, C), (0, 3, 1, 2))
        assert quant.shape == x.shape
        assert jnp.allclose(quant, quant_expected, atol=1e-5, rtol=1e-5)
        # Scalars vs. torch-equivalent reference.
        assert jnp.allclose(loss, loss_r, atol=1e-5, rtol=1e-3)
        assert jnp.allclose(perp, perp_r, atol=1e-2, rtol=1e-2)
        # Index agreement with the reference argmin.
        assert float(jnp.mean((idx == idx_r).astype(jnp.float32))) >= 0.99
        assert enc.shape == (N, num_embeddings)

    # --- Default fast path: bf16 distance matmul, compact int32 indices ---
    loss_b, quant_b, perp_b, idx_b = vector_quantizer_ema_forward(
        x1, embedding_w, commitment_cost)
    jax.block_until_ready((loss_b, quant_b, perp_b, idx_b))
    _, _, _, _, idx_r1, _ = _reference(x1, embedding_w, commitment_cost)
    assert quant_b.shape == x1.shape
    assert bool(jnp.isfinite(loss_b)) and bool(jnp.isfinite(perp_b))
    # bf16 distances may flip rare near-ties; the vast majority must match.
    assert float(jnp.mean((idx_b == idx_r1).astype(jnp.float32))) >= 0.90

    print("KERNEL_OK")
</pallas_src>

<mosaic_0001>
module attributes {stable_mosaic.version = 11 : i64} {
  func.func @_vq_kernel(%arg0: i32, %arg1: i32, %arg2: memref<1x64x128xf32, #tpu.memory_space<vmem>>, %arg3: memref<128x64xf32, #tpu.memory_space<vmem>>, %arg4: memref<128x1xf32, #tpu.memory_space<vmem>>, %arg5: memref<1x64x128xf32, #tpu.memory_space<vmem>>, %arg6: memref<1x1x1x128xi32, #tpu.memory_space<vmem>>, %arg7: memref<1x1x1x1xf32, #tpu.memory_space<vmem>>, %arg8: memref<1x1x128x1xf32, #tpu.memory_space<vmem>>) attributes {dimension_semantics = [#tpu.dimension_semantics<parallel>, #tpu.dimension_semantics<parallel>], iteration_bounds = array<i64: 2, 2>, scalar_prefetch = 0 : i64, scratch_operands = 0 : i64, tpu.core_type = #tpu.core_type<tc>, window_params = [{transform_indices = @transform_0, window_bounds = array<i64: 1, 64, 128>}, {pipeline_mode = #tpu.pipeline_mode<synchronous>, transform_indices = @transform_1, window_bounds = array<i64: 128, 64>}, {pipeline_mode = #tpu.pipeline_mode<synchronous>, transform_indices = @transform_2, window_bounds = array<i64: 128, 1>}, {transform_indices = @transform_3, window_bounds = array<i64: 1, 64, 128>}, {transform_indices = @transform_4, window_bounds = array<i64: 1, 1, 1, 128>}, {transform_indices = @transform_5, window_bounds = array<i64: 1, 1, 1, 1>}, {transform_indices = @transform_6, window_bounds = array<i64: 1, 1, 128, 1>}]} {
    %c0 = arith.constant 0 : index
    %c0_0 = arith.constant 0 : index
    %c0_1 = arith.constant 0 : index
    %0 = vector.load %arg2[%c0, %c0_0, %c0_1] : memref<1x64x128xf32, #tpu.memory_space<vmem>>, vector<1x64x128xf32>
    %1 = vector.shape_cast %0 : vector<1x64x128xf32> to vector<64x128xf32>
    %c0_2 = arith.constant 0 : index
    %c0_3 = arith.constant 0 : index
    %2 = vector.load %arg3[%c0_2, %c0_3] : memref<128x64xf32, #tpu.memory_space<vmem>>, vector<128x64xf32>
    %c0_4 = arith.constant 0 : index
    %c0_5 = arith.constant 0 : index
    %3 = vector.load %arg4[%c0_4, %c0_5] : memref<128x1xf32, #tpu.memory_space<vmem>>, vector<128x1xf32>
    %cst = arith.constant dense<0.000000e+00> : vector<128x128xf32>
    %4 = tpu.matmul %2, %1, %cst {dimension_numbers = #tpu.dot_dimension_numbers<[1], [0], [0], [1], [0, 0, 1, 1], [], []>, precision = #tpu.contract_precision<fp32>} : vector<128x64xf32>, vector<64x128xf32>, vector<128x128xf32> -> vector<128x128xf32>
    %5 = vector.broadcast %3 : vector<128x1xf32> to vector<128x128xf32>
    %6 = arith.subf %5, %4 : vector<128x128xf32>
    %cst_6 = arith.constant dense<0x7F800000> : vector<128xf32>
    %7 = vector.multi_reduction <minimumf>, %6, %cst_6 [0] : vector<128x128xf32> to vector<128xf32>
    %8 = vector.shape_cast %7 : vector<128xf32> to vector<1x128xf32>
    %9 = tpu.iota {dimensions = array<i32: 0>} : vector<128x128xi32>
    %10 = vector.broadcast %8 : vector<1x128xf32> to vector<128x128xf32>
    %11 = arith.cmpf oeq, %6, %10 : vector<128x128xf32>
    %c128_i32 = arith.constant 128 : i32
    %12 = vector.broadcast %c128_i32 : i32 to vector<128x128xi32>
    %13 = arith.select %11, %9, %12 : vector<128x128xi1>, vector<128x128xi32>
    %cst_7 = arith.constant dense<2147483647> : vector<128xi32>
    %14 = vector.multi_reduction <minsi>, %13, %cst_7 [0] : vector<128x128xi32> to vector<128xi32>
    %15 = vector.shape_cast %14 : vector<128xi32> to vector<1x128xi32>
    %16 = vector.broadcast %15 : vector<1x128xi32> to vector<128x128xi32>
    %17 = arith.cmpi eq, %9, %16 : vector<128x128xi32>
    %18 = arith.extui %17 : vector<128x128xi1> to vector<128x128xi32>
    %19 = arith.sitofp %18 : vector<128x128xi32> to vector<128x128xf32>
    %cst_8 = arith.constant dense<0.000000e+00> : vector<64x128xf32>
    %20 = tpu.matmul %2, %19, %cst_8 {dimension_numbers = #tpu.dot_dimension_numbers<[0], [0], [1], [1], [0, 1, 1, 1], [], []>, precision = #tpu.contract_precision<fp32>} : vector<128x64xf32>, vector<128x128xf32>, vector<64x128xf32> -> vector<64x128xf32>
    %c0_9 = arith.constant 0 : index
    %c0_10 = arith.constant 0 : index
    %c0_11 = arith.constant 0 : index
    %21 = vector.load %arg5[%c0_9, %c0_10, %c0_11] : memref<1x64x128xf32, #tpu.memory_space<vmem>>, vector<1x64x128xf32>
    %22 = vector.shape_cast %21 : vector<1x64x128xf32> to vector<64x128xf32>
    %23 = vector.shape_cast %20 : vector<64x128xf32> to vector<1x64x128xf32>
    tpu.vector_store %arg5[%c0_9, %c0_10, %c0_11], %23 {strides = array<i32>} : memref<1x64x128xf32, #tpu.memory_space<vmem>>, vector<1x64x128xf32>,
    %c0_12 = arith.constant 0 : index
    %c0_13 = arith.constant 0 : index
    %c0_14 = arith.constant 0 : index
    %c0_15 = arith.constant 0 : index
    %24 = vector.load %arg6[%c0_12, %c0_13, %c0_14, %c0_15] : memref<1x1x1x128xi32, #tpu.memory_space<vmem>>, vector<1x1x1x128xi32>
    %25 = vector.shape_cast %24 : vector<1x1x1x128xi32> to vector<1x128xi32>
    %26 = vector.shape_cast %15 : vector<1x128xi32> to vector<1x1x1x128xi32>
    tpu.vector_store %arg6[%c0_12, %c0_13, %c0_14, %c0_15], %26 {strides = array<i32>} : memref<1x1x1x128xi32, #tpu.memory_space<vmem>>, vector<1x1x1x128xi32>,
    %27 = arith.mulf %1, %1 : vector<64x128xf32>
    %cst_16 = arith.constant dense<0.000000e+00> : vector<128xf32>
    %28 = vector.multi_reduction <add>, %27, %cst_16 [0] : vector<64x128xf32> to vector<128xf32>
    %29 = vector.shape_cast %28 : vector<128xf32> to vector<1x128xf32>
    %cst_17 = arith.constant 2.000000e+00 : f32
    %30 = vector.broadcast %cst_17 : f32 to vector<1x128xf32>
    %31 = arith.mulf %30, %8 : vector<1x128xf32>
    %32 = arith.addf %29, %31 : vector<1x128xf32>
    %cst_18 = arith.constant 0.000000e+00 : f32
    %33 = vector.broadcast %cst_18 : f32 to vector<1x128xf32>
    %34 = arith.maximumf %32, %33 : vector<1x128xf32>
    %35 = vector.shape_cast %34 : vector<1x128xf32> to vector<1x1x128xf32>
    %cst_19 = arith.constant dense<0.000000e+00> : vector<1xf32>
    %36 = vector.multi_reduction <add>, %35, %cst_19 [1, 2] : vector<1x1x128xf32> to vector<1xf32>
    %37 = vector.shape_cast %36 : vector<1xf32> to vector<1x1x1xf32>
    %38 = vector.extract %37[0, 0, 0] : f32 from vector<1x1x1xf32>
    %39 = vector.broadcast %38 : f32 to vector<1x1xf32>
    %c0_20 = arith.constant 0 : index
    %c0_21 = arith.constant 0 : index
    %c0_22 = arith.constant 0 : index
    %c0_23 = arith.constant 0 : index
    %40 = vector.load %arg7[%c0_20, %c0_21, %c0_22, %c0_23] : memref<1x1x1x1xf32, #tpu.memory_space<vmem>>, vector<1x1x1x1xf32>
    %41 = vector.shape_cast %40 : vector<1x1x1x1xf32> to vector<1x1xf32>
    %42 = vector.shape_cast %39 : vector<1x1xf32> to vector<1x1x1x1xf32>
    tpu.vector_store %arg7[%c0_20, %c0_21, %c0_22, %c0_23], %42 {strides = array<i32>} : memref<1x1x1x1xf32, #tpu.memory_space<vmem>>, vector<1x1x1x1xf32>,
    %cst_24 = arith.constant dense<0.000000e+00> : vector<128xf32>
    %43 = vector.multi_reduction <add>, %19, %cst_24 [1] : vector<128x128xf32> to vector<128xf32>
    %44 = vector.shape_cast %43 : vector<128xf32> to vector<128x1xf32>
    %c0_25 = arith.constant 0 : index
    %c0_26 = arith.constant 0 : index
    %c0_27 = arith.constant 0 : index
    %c0_28 = arith.constant 0 : index
    %45 = vector.load %arg8[%c0_25, %c0_26, %c0_27, %c0_28] : memref<1x1x128x1xf32, #tpu.memory_space<vmem>>, vector<1x1x128x1xf32>
    %46 = vector.shape_cast %45 : vector<1x1x128x1xf32> to vector<128x1xf32>
    %47 = vector.shape_cast %44 : vector<128x1xf32> to vector<1x1x128x1xf32>
    tpu.vector_store %arg8[%c0_25, %c0_26, %c0_27, %c0_28], %47 {strides = array<i32>} : memref<1x1x128x1xf32, #tpu.memory_space<vmem>>, vector<1x1x128x1xf32>,
    return
  }
  func.func @transform_0(%arg0: i32, %arg1: i32) -> (i32, i32, i32) {
    %c0_i32 = arith.constant 0 : i32
    %c0_i32_0 = arith.constant 0 : i32
    return %arg0, %c0_i32, %arg1 : i32, i32, i32
  }
  func.func @transform_1(%arg0: i32, %arg1: i32) -> (i32, i32) {
    %c0_i32 = arith.constant 0 : i32
    %c0_i32_0 = arith.constant 0 : i32
    %c0_i32_1 = arith.constant 0 : i32
    return %c0_i32, %c0_i32_0 : i32, i32
  }
  func.func @transform_2(%arg0: i32, %arg1: i32) -> (i32, i32) {
    %c0_i32 = arith.constant 0 : i32
    %c0_i32_0 = arith.constant 0 : i32
    %c0_i32_1 = arith.constant 0 : i32
    return %c0_i32, %c0_i32_0 : i32, i32
  }
  func.func @transform_3(%arg0: i32, %arg1: i32) -> (i32, i32, i32) {
    %c0_i32 = arith.constant 0 : i32
    %c0_i32_0 = arith.constant 0 : i32
    return %arg0, %c0_i32, %arg1 : i32, i32, i32
  }
  func.func @transform_4(%arg0: i32, %arg1: i32) -> (i32, i32, i32, i32) {
    %c0_i32 = arith.constant 0 : i32
    %c0_i32_0 = arith.constant 0 : i32
    %c0_i32_1 = arith.constant 0 : i32
    return %arg0, %arg1, %c0_i32, %c0_i32_0 : i32, i32, i32, i32
  }
  func.func @transform_5(%arg0: i32, %arg1: i32) -> (i32, i32, i32, i32) {
    %c0_i32 = arith.constant 0 : i32
    %c0_i32_0 = arith.constant 0 : i32
    %c0_i32_1 = arith.constant 0 : i32
    return %arg0, %arg1, %c0_i32, %c0_i32_0 : i32, i32, i32, i32
  }
  func.func @transform_6(%arg0: i32, %arg1: i32) -> (i32, i32, i32, i32) {
    %c0_i32 = arith.constant 0 : i32
    %c0_i32_0 = arith.constant 0 : i32
    %c0_i32_1 = arith.constant 0 : i32
    return %arg0, %arg1, %c0_i32, %c0_i32_0 : i32, i32, i32, i32
  }
}

</mosaic_0001>

<llo_original>
// kernel: vector_quantizer_ema_forward.1
$region0: #{vector_quantizer_ema_forward.1}
  #allocation0 [shape = 'u32[]', space=smem, size = 0x4, offset = 0x4, fixed_abs, tag = 'smem constant byte address 0x4 - core index']
  #allocation1 [shape = 'u32[144,128]{1,0:T(1,128)}', space=vmem, size = 0x12000, scoped, tag = 'internal scratch']
  %s0 = inlined_call_operand.vmem [shape: f32[2,64,256], index: 0, kind: input, shape index: {}]
  %s1 = inlined_call_operand.vmem [shape: f32[128,64], index: 1, kind: input, shape index: {}]
  %s2 = inlined_call_operand.vmem [shape: f32[128,1], index: 2, kind: input, shape index: {}]
  %s3 = inlined_call_operand.vmem [shape: f32[2,64,256], index: 3, kind: output, shape index: {0}]
  %s4 = inlined_call_operand.vmem [shape: s32[2,2,1,128], index: 4, kind: output, shape index: {1}]
  %s5 = inlined_call_operand.vmem [shape: f32[2,2,1,1], index: 5, kind: output, shape index: {2}]
  %s6 = inlined_call_operand.vmem [shape: f32[2,2,128,1], index: 6, kind: output, shape index: {3}]
  %7 = xla_tuple %s3, %s4, %s5, %s6
  %s8 = sld [smem:[#allocation0]]
  $region141: #{vector_quantizer_ema_forward.1} parent=0
    _
  %s10 = ssub.s32 1, %s8
  %s11 = scalar_select 0, %s10, %s8
  $region1: #{vector_quantizer_ema_forward.1} parent=0
    #allocation2 [shape = 'u8[65536]{0}', space=vmem, size = 0x10000, scoped, tag = 'input window, operand 0']
    #allocation3 [shape = 'u8[65536]{0}', space=vmem, size = 0x10000, scoped, tag = 'output window, operand 0']
    loop: start=0, step=1, limit=6
    $region2: #{vector_quantizer_ema_forward.1} parent=1 // loop_pre_header
      _
    $region3: #{vector_quantizer_ema_forward.1} parent=1 // loop_header
      %s13 = sphi 0, %s17
      %p14 = scmp.ge.s32.totalorder %s13, 6
      %s20 = sphi 0, %s32
      %s21 = sphi 0, %s28
      %s22 = sphi 0, %s20
      %s23 = sphi 0, %s21
      %s24 = sphi 0, %s22
      %s25 = sphi 0, %s23
      %s37 = sphi 0, %s39
      %s40 = sphi 0, %s37
      %s41 = sphi 0, %s40
      %s57 = sphi 0, %s41
      %s61 = sphi 0, %s61
      %s63 = sphi 0, %s61
      %s64 = sphi 0, %s63
      %s78 = sphi 0, %s64
      %s82 = sphi 0, %s82
      %s84 = sphi 0, %s82
      %s85 = sphi 0, %s84
      %s99 = sphi 0, %s85
      %s107 = sphi 0, %s109
      %s110 = sphi 0, %s107
      %s111 = sphi 0, %s110
      %s127 = sphi 0, %s111
      %s135 = sphi 0, %s137
      %s138 = sphi 0, %s135
      %s139 = sphi 0, %s138
      %s155 = sphi 0, %s139
      %s163 = sphi 0, %s165
      %s166 = sphi 0, %s163
      %s167 = sphi 0, %s166
      %s183 = sphi 0, %s167
      %s191 = sphi 0, %s193
      %s194 = sphi 0, %s191
      %s195 = sphi 0, %s194
      %s211 = sphi 0, %s195
    $region4: #{vector_quantizer_ema_forward.1} parent=1 // loop_header_branch
      %16 = sbr.rel (%p14) target = $region8
    $region5: #{vector_quantizer_ema_forward.1} parent=1 // loop_body
      %s18 = ssub.s32 %s13, 1
      %s19 = ssub.s32 %s13, 2
      %s26 = sadd.s32 1, %s21
      %p27 = scmp.ge.s32.totalorder %s26, 2
      %s28 = scalar_select %p27, 0, %s26
      %s29 = sadd.s32 1, %s20
      %s30 = scalar_select %p27, %s29, %s20
      %p31 = scmp.ge.s32.totalorder %s30, 2
      %s32 = scalar_select %p31, 0, %s30
      %s33 = ssub.s32 %s20, %s32
      %s34 = ssub.s32 %s21, %s28
      %s35 = sor.u32 %s33, %s34
      %p36 = scmp.eq.s32.totalorder %s35, 0
      %s38 = sadd.s32 %s37, 1
      %s39 = scalar_select %p36, %s37, %s38
      %p42 = pneg %p36
      %p43 = scmp.eq.s32.totalorder %s13, 3
      %p44 = por %p42, %p43
      %p45 = scmp.ne.s32.totalorder %s37, %s40
      %p46 = scmp.eq.s32.totalorder %s13, 0
      %p47 = por %p45, %p46
      %p48 = scmp.ne.s32.totalorder %s37, %s40
      %p49 = scmp.eq.s32.totalorder %s18, 3
      %p50 = por %p48, %p49
      %p51 = scmp.ne.s32.totalorder %s40, %s41
      %p52 = scmp.eq.s32.totalorder %s18, 0
      %p53 = por %p51, %p52
      %p54 = scmp.ne.s32.totalorder %s40, %s41
      %p55 = scmp.eq.s32.totalorder %s19, 3
      %p56 = por %p54, %p55
      %p58 = scmp.ne.s32.totalorder %s41, %s57
      %p59 = scmp.eq.s32.totalorder %s19, 0
      %p60 = por %p58, %p59
      %s62 = sadd.s32 %s61, 1
      %p65 = scmp.eq.s32.totalorder %s13, 3
      %p66 = scmp.ne.s32.totalorder %s61, %s63
      %p67 = scmp.eq.s32.totalorder %s13, 0
      %p68 = por %p66, %p67
      %p69 = scmp.ne.s32.totalorder %s61, %s63
      %p70 = scmp.eq.s32.totalorder %s18, 3
      %p71 = por %p69, %p70
      %p72 = scmp.ne.s32.totalorder %s63, %s64
      %p73 = scmp.eq.s32.totalorder %s18, 0
      %p74 = por %p72, %p73
      %p75 = scmp.ne.s32.totalorder %s63, %s64
      %p76 = scmp.eq.s32.totalorder %s19, 3
      %p77 = por %p75, %p76
      %p79 = scmp.ne.s32.totalorder %s64, %s78
      %p80 = scmp.eq.s32.totalorder %s19, 0
      %p81 = por %p79, %p80
      %s83 = sadd.s32 %s82, 1
      %p86 = scmp.eq.s32.totalorder %s13, 3
      %p87 = scmp.ne.s32.totalorder %s82, %s84
      %p88 = scmp.eq.s32.totalorder %s13, 0
      %p89 = por %p87, %p88
      %p90 = scmp.ne.s32.totalorder %s82, %s84
      %p91 = scmp.eq.s32.totalorder %s18, 3
      %p92 = por %p90, %p91
      %p93 = scmp.ne.s32.totalorder %s84, %s85
      %p94 = scmp.eq.s32.totalorder %s18, 0
      %p95 = por %p93, %p94
      %p96 = scmp.ne.s32.totalorder %s84, %s85
      %p97 = scmp.eq.s32.totalorder %s19, 3
      %p98 = por %p96, %p97
      %p100 = scmp.ne.s32.totalorder %s85, %s99
      %p101 = scmp.eq.s32.totalorder %s19, 0
      %p102 = por %p100, %p101
      %s103 = ssub.s32 %s20, %s32
      %s104 = ssub.s32 %s21, %s28
      %s105 = sor.u32 %s103, %s104
      %p106 = scmp.eq.s32.totalorder %s105, 0
      %s108 = sadd.s32 %s107, 1
      %s109 = scalar_select %p106, %s107, %s108
      %p112 = pneg %p106
      %p113 = scmp.eq.s32.totalorder %s13, 3
      %p114 = por %p112, %p113
      %p115 = scmp.ne.s32.totalorder %s107, %s110
      %p116 = scmp.eq.s32.totalorder %s13, 0
      %p117 = por %p115, %p116
      %p118 = scmp.ne.s32.totalorder %s107, %s110
      %p119 = scmp.eq.s32.totalorder %s18, 3
      %p120 = por %p118, %p119
      %p121 = scmp.ne.s32.totalorder %s110, %s111
      %p122 = scmp.eq.s32.totalorder %s18, 0
      %p123 = por %p121, %p122
      %p124 = scmp.ne.s32.totalorder %s110, %s111
      %p125 = scmp.eq.s32.totalorder %s19, 3
      %p126 = por %p124, %p125
      %p128 = scmp.ne.s32.totalorder %s111, %s127
      %p129 = scmp.eq.s32.totalorder %s19, 0
      %p130 = por %p128, %p129
      %s131 = ssub.s32 %s20, %s32
      %s132 = ssub.s32 %s21, %s28
      %s133 = sor.u32 %s131, %s132
      %p134 = scmp.eq.s32.totalorder %s133, 0
      %s136 = sadd.s32 %s135, 1
      %s137 = scalar_select %p134, %s135, %s136
      %p140 = pneg %p134
      %p141 = scmp.eq.s32.totalorder %s13, 3
      %p142 = por %p140, %p141
      %p143 = scmp.ne.s32.totalorder %s135, %s138
      %p144 = scmp.eq.s32.totalorder %s13, 0
      %p145 = por %p143, %p144
      %p146 = scmp.ne.s32.totalorder %s135, %s138
      %p147 = scmp.eq.s32.totalorder %s18, 3
      %p148 = por %p146, %p147
      %p149 = scmp.ne.s32.totalorder %s138, %s139
      %p150 = scmp.eq.s32.totalorder %s18, 0
      %p151 = por %p149, %p150
      %p152 = scmp.ne.s32.totalorder %s138, %s139
      %p153 = scmp.eq.s32.totalorder %s19, 3
      %p154 = por %p152, %p153
      %p156 = scmp.ne.s32.totalorder %s139, %s155
      %p157 = scmp.eq.s32.totalorder %s19, 0
      %p158 = por %p156, %p157
      %s159 = ssub.s32 %s20, %s32
      %s160 = ssub.s32 %s21, %s28
      %s161 = sor.u32 %s159, %s160
      %p162 = scmp.eq.s32.totalorder %s161, 0
      %s164 = sadd.s32 %s163, 1
      %s165 = scalar_select %p162, %s163, %s164
      %p168 = pneg %p162
      %p169 = scmp.eq.s32.totalorder %s13, 3
      %p170 = por %p168, %p169
      %p171 = scmp.ne.s32.totalorder %s163, %s166
      %p172 = scmp.eq.s32.totalorder %s13, 0
      %p173 = por %p171, %p172
      %p174 = scmp.ne.s32.totalorder %s163, %s166
      %p175 = scmp.eq.s32.totalorder %s18, 3
      %p176 = por %p174, %p175
      %p177 = scmp.ne.s32.totalorder %s166, %s167
      %p178 = scmp.eq.s32.totalorder %s18, 0
      %p179 = por %p177, %p178
      %p180 = scmp.ne.s32.totalorder %s166, %s167
      %p181 = scmp.eq.s32.totalorder %s19, 3
      %p182 = por %p180, %p181
      %p184 = scmp.ne.s32.totalorder %s167, %s183
      %p185 = scmp.eq.s32.totalorder %s19, 0
      %p186 = por %p184, %p185
      %s187 = ssub.s32 %s20, %s32
      %s188 = ssub.s32 %s21, %s28
      %s189 = sor.u32 %s187, %s188
      %p190 = scmp.eq.s32.totalorder %s189, 0
      %s192 = sadd.s32 %s191, 1
      %s193 = scalar_select %p190, %s191, %s192
      %p196 = pneg %p190
      %p197 = scmp.eq.s32.totalorder %s13, 3
      %p198 = por %p196, %p197
      %p199 = scmp.ne.s32.totalorder %s191, %s194
      %p200 = scmp.eq.s32.totalorder %s13, 0
      %p201 = por %p199, %p200
      %p202 = scmp.ne.s32.totalorder %s191, %s194
      %p203 = scmp.eq.s32.totalorder %s18, 3
      %p204 = por %p202, %p203
      %p205 = scmp.ne.s32.totalorder %s194, %s195
      %p206 = scmp.eq.s32.totalorder %s18, 0
      %p207 = por %p205, %p206
      %p208 = scmp.ne.s32.totalorder %s194, %s195
      %p209 = scmp.eq.s32.totalorder %s19, 3
      %p210 = por %p208, %p209
      %p212 = scmp.ne.s32.totalorder %s195, %s211
      %p213 = scmp.eq.s32.totalorder %s19, 0
      %p214 = por %p212, %p213
      %p215 = scmp.le.s32.totalorder 1, %s13
      %p216 = scmp.lt.s32.totalorder %s13, 5
      %p217 = pnand %p215, %p216
      %p218 = pneg %p217
      // Predicated region
      $region9: #{vector_quantizer_ema_forward.1} parent=5 // pred_check
        _
      $region10: #{vector_quantizer_ema_forward.1} parent=5 // pred_check_branch
        %220 = sbr.rel (%p217) target = $region12
      $region11: #{vector_quantizer_ema_forward.1} parent=5 // pred_region
        %s221 = ssub.s32 %s13, 1
        // Predicated region
        $region13: #{vector_quantizer_ema_forward.1} parent=11 // pred_check
          %p222 = pneg %p74
        $region14: #{vector_quantizer_ema_forward.1} parent=11 // pred_check_branch
          %224 = sbr.rel (%p222) target = $region16
        $region15: #{vector_quantizer_ema_forward.1} parent=11 // pred_region
          _
        $region16: #{vector_quantizer_ema_forward.1} parent=11 // pred_fallthru
          _
        // Predicated region
        $region17: #{vector_quantizer_ema_forward.1} parent=11 // pred_check
          %p225 = pneg %p95
        $region18: #{vector_quantizer_ema_forward.1} parent=11 // pred_check_branch
          %227 = sbr.rel (%p225) target = $region20
        $region19: #{vector_quantizer_ema_forward.1} parent=11 // pred_region
          _
        $region20: #{vector_quantizer_ema_forward.1} parent=11 // pred_fallthru
          _
      $region12: #{vector_quantizer_ema_forward.1} parent=5 // pred_fallthru
        _
      %p228 = scmp.lt.s32.totalorder %s13, 4
      // Predicated region
      $region21: #{vector_quantizer_ema_forward.1} parent=5 // pred_check
        %p229 = pneg %p228
      $region22: #{vector_quantizer_ema_forward.1} parent=5 // pred_check_branch
        %231 = sbr.rel (%p229) target = $region24
      $region23: #{vector_quantizer_ema_forward.1} parent=5 // pred_region
        // Predicated region
        $region25: #{vector_quantizer_ema_forward.1} parent=23 // pred_check
          %p232 = pneg %p47
        $region26: #{vector_quantizer_ema_forward.1} parent=23 // pred_check_branch
          %234 = sbr.rel (%p232) target = $region28
        $region27: #{vector_quantizer_ema_forward.1} parent=23 // pred_region
          %s235 = sand.u32 %s37, 1
          %s236 = sand.u32 %s37, 1
          %s237 = smul.addr %s236, 64
          %s238 = scalar_lea.vmem [#allocation2], %s237
          %s239 = smul.addr %s20, 16
          %s240 = sadd.s32 %s21, %s239
          %s241 = smul.addr %s240, 8
          %s242 = scalar_lea.vmem %s0, %s241
          // Predicated region
          $region29: #{vector_quantizer_ema_forward.1} parent=27 // pred_check
            _
          $region30: #{vector_quantizer_ema_forward.1} parent=27 // pred_check_branch
            %244 = sbr.rel (0) target = $region32
          $region31: #{vector_quantizer_ema_forward.1} parent=27 // pred_region
            // Predicated region
            $region33: #{vector_quantizer_ema_forward.1} parent=31 // pred_check
              _
            $region34: #{vector_quantizer_ema_forward.1} parent=31 // pred_check_branch
              %246 = sbr.rel (0) target = $region36
            $region35: #{vector_quantizer_ema_forward.1} parent=31 // pred_region
              // Predicated region
              $region48: #{vector_quantizer_ema_forward.1} parent=35 // pred_check
                _
              $region49: #{vector_quantizer_ema_forward.1} parent=35 // pred_check_branch
                %275 = sbr.rel (0) target = $region51
              $region50: #{vector_quantizer_ema_forward.1} parent=35 // pred_region
                loop: start=0, step=1, limit=1
                $region52: #{vector_quantizer_ema_forward.1} parent=50 // loop_pre_header
                  _
                $region53: #{vector_quantizer_ema_forward.1} parent=50 // loop_header
                  %s277 = sphi 0, %s281
                  %p278 = scmp.ge.s32.totalorder %s277, 1
                  %s282 = sphi %s242, %s242
                  %s283 = sphi %s238, %s238
                $region54: #{vector_quantizer_ema_forward.1} parent=50 // loop_header_branch
                  %280 = sbr.rel (%p278) target = $region58
                $region55: #{vector_quantizer_ema_forward.1} parent=50 // loop_body
                  %v284 = vld [vmem:[%s282] sm:$0xff]
                  %285 = vst [vmem:[%s283] sm:$0xff] %v284
                  %v286 = vld [vmem:[%s282 + $0x10] sm:$0xff]
                  %287 = vst [vmem:[%s283 + $0x8] sm:$0xff] %v286
                  %v288 = vld [vmem:[%s282 + $0x20] sm:$0xff]
                  %289 = vst [vmem:[%s283 + $0x10] sm:$0xff] %v288
                  %v290 = vld [vmem:[%s282 + $0x30] sm:$0xff]
                  %291 = vst [vmem:[%s283 + $0x18] sm:$0xff] %v290
                  %v292 = vld [vmem:[%s282 + $0x40] sm:$0xff]
                  %293 = vst [vmem:[%s283 + $0x20] sm:$0xff] %v292
                  %v294 = vld [vmem:[%s282 + $0x50] sm:$0xff]
                  %295 = vst [vmem:[%s283 + $0x28] sm:$0xff] %v294
                  %v296 = vld [vmem:[%s282 + $0x60] sm:$0xff]
                  %297 = vst [vmem:[%s283 + $0x30] sm:$0xff] %v296
                  %v298 = vld [vmem:[%s282 + $0x70] sm:$0xff]
                  %299 = vst [vmem:[%s283 + $0x38] sm:$0xff] %v298
                $region56: #{vector_quantizer_ema_forward.1} parent=50 // loop_footer
                  %s281 = sadd.s32 1, %s277
                $region57: #{vector_quantizer_ema_forward.1} parent=50 // loop_footer_branch
                  %276 = sbr.rel target = $region53
                $region58: #{vector_quantizer_ema_forward.1} parent=50 // loop_exit
                  _
              $region51: #{vector_quantizer_ema_forward.1} parent=35 // pred_fallthru
                _
              // Predicated region
              $region59: #{vector_quantizer_ema_forward.1} parent=35 // pred_check
                _
              $region60: #{vector_quantizer_ema_forward.1} parent=35 // pred_check_branch
                %301 = sbr.rel target = $region62
              $region61: #{vector_quantizer_ema_forward.1} parent=35 // pred_region
                _
              $region62: #{vector_quantizer_ema_forward.1} parent=35 // pred_fallthru
                _
            $region36: #{vector_quantizer_ema_forward.1} parent=31 // pred_fallthru
              _
            // Predicated region
            $region37: #{vector_quantizer_ema_forward.1} parent=31 // pred_check
              _
            $region38: #{vector_quantizer_ema_forward.1} parent=31 // pred_check_branch
              %248 = sbr.rel target = $region40
            $region39: #{vector_quantizer_ema_forward.1} parent=31 // pred_region
              loop: start=0, step=1, limit=1
              $region41: #{vector_quantizer_ema_forward.1} parent=39 // loop_pre_header
                _
              $region42: #{vector_quantizer_ema_forward.1} parent=39 // loop_header
                %s251 = sphi 0, %s255
                %p252 = scmp.ge.s32.totalorder %s251, 1
                %s256 = sphi %s242, %s242
                %s257 = sphi %s238, %s238
              $region43: #{vector_quantizer_ema_forward.1} parent=39 // loop_header_branch
                %254 = sbr.rel (%p252) target = $region47
              $region44: #{vector_quantizer_ema_forward.1} parent=39 // loop_body
                %v258 = vld [vmem:[%s256] sm:$0xff]
                %259 = vst [vmem:[%s257] sm:$0xff] %v258
                %v260 = vld [vmem:[%s256 + $0x10] sm:$0xff]
                %261 = vst [vmem:[%s257 + $0x8] sm:$0xff] %v260
                %v262 = vld [vmem:[%s256 + $0x20] sm:$0xff]
                %263 = vst [vmem:[%s257 + $0x10] sm:$0xff] %v262
                %v264 = vld [vmem:[%s256 + $0x30] sm:$0xff]
                %265 = vst [vmem:[%s257 + $0x18] sm:$0xff] %v264
                %v266 = vld [vmem:[%s256 + $0x40] sm:$0xff]
                %267 = vst [vmem:[%s257 + $0x20] sm:$0xff] %v266
                %v268 = vld [vmem:[%s256 + $0x50] sm:$0xff]
                %269 = vst [vmem:[%s257 + $0x28] sm:$0xff] %v268
                %v270 = vld [vmem:[%s256 + $0x60] sm:$0xff]
                %271 = vst [vmem:[%s257 + $0x30] sm:$0xff] %v270
                %v272 = vld [vmem:[%s256 + $0x70] sm:$0xff]
                %273 = vst [vmem:[%s257 + $0x38] sm:$0xff] %v272
              $region45: #{vector_quantizer_ema_forward.1} parent=39 // loop_footer
                %s255 = sadd.s32 1, %s251
              $region46: #{vector_quantizer_ema_forward.1} parent=39 // loop_footer_branch
                %250 = sbr.rel target = $region42
              $region47: #{vector_quantizer_ema_forward.1} parent=39 // loop_exit
                _
            $region40: #{vector_quantizer_ema_forward.1} parent=31 // pred_fallthru
              _
          $region32: #{vector_quantizer_ema_forward.1} parent=27 // pred_fallthru
            _
          %302 = vnop
        $region28: #{vector_quantizer_ema_forward.1} parent=23 // pred_fallthru
          _
      $region24: #{vector_quantizer_ema_forward.1} parent=5 // pred_fallthru
        _
      %p303 = scmp.le.s32.totalorder 1, %s13
      %p304 = scmp.lt.s32.totalorder %s13, 5
      %p305 = pnand %p303, %p304
      %p306 = pneg %p305
      // Predicated region
      $region63: #{vector_quantizer_ema_forward.1} parent=5 // pred_check
        _
      $region64: #{vector_quantizer_ema_forward.1} parent=5 // pred_check_branch
        %308 = sbr.rel (%p305) target = $region66
      $region65: #{vector_quantizer_ema_forward.1} parent=5 // pred_region
        %s309 = ssub.s32 %s13, 1
        %s310 = sand.u32 %s40, 1
        %s311 = sand.u32 %s40, 1
        %s312 = smul.addr %s311, 64
        %s313 = scalar_lea.vmem [#allocation2], %s312
        // Predicated region
        $region67: #{vector_quantizer_ema_forward.1} parent=65 // pred_check
          %p314 = pneg %p53
        $region68: #{vector_quantizer_ema_forward.1} parent=65 // pred_check_branch
          %316 = sbr.rel (%p314) target = $region70
        $region69: #{vector_quantizer_ema_forward.1} parent=65 // pred_region
          _
        $region70: #{vector_quantizer_ema_forward.1} parent=65 // pred_fallthru
          _
        %s317 = sand.u32 %s40, 1
        %s318 = sand.u32 %s40, 1
        %s319 = smul.addr %s318, 64
        %s320 = scalar_lea.vmem [#allocation2], %s319
        %p321 = pneg %p53
        %p322 = pneg %p50
        %p323 = pneg %p74
        %p324 = pneg %p71
        %p325 = pneg %p95
        %p326 = pneg %p92
        %p327 = pneg %p123
        %p328 = pneg %p120
        %s329 = sand.u32 %s110, 1
        %s330 = sand.u32 %s110, 1
        %s331 = smul.addr %s330, 64
        %s332 = scalar_lea.vmem [#allocation3], %s331
        %p333 = pneg %p151
        %p334 = pneg %p148
        %p335 = scmp.lt.s32.totalorder %s22, 1
        %s336 = scalar_select %p335, %s22, 1
        %p337 = scmp.lt.s32.totalorder %s23, 1
        %s338 = scalar_select %p337, %s23, 1
        %s339 = smul.addr %s336, 2
        %s340 = sadd.s32 %s338, %s339
        %s341 = scalar_lea.vmem %s4, %s340
        %p342 = pneg %p179
        %p343 = pneg %p176
        %p344 = scmp.lt.s32.totalorder %s22, 1
        %s345 = scalar_select %p344, %s22, 1
        %p346 = scmp.lt.s32.totalorder %s23, 1
        %s347 = scalar_select %p346, %s23, 1
        %s348 = smul.addr %s345, 2
        %s349 = sadd.s32 %s347, %s348
        %s350 = scalar_lea.vmem %s5, %s349
        %p351 = pneg %p207
        %p352 = pneg %p204
        %p353 = scmp.lt.s32.totalorder %s22, 1
        %s354 = scalar_select %p353, %s22, 1
        %p355 = scmp.lt.s32.totalorder %s23, 1
        %s356 = scalar_select %p355, %s23, 1
        %s357 = smul.addr %s356, 16
        %s358 = smul.addr %s354, 32
        %s359 = sadd.s32 %s357, %s358
        %s360 = smul.addr %s359, 8
        %s361 = scalar_lea.vmem %s6, %s360
        %p362 = scmp.lt.s32.totalorder %s22, 1
        %s363 = scalar_select %p362, %s22, 1
        %p364 = scmp.lt.s32.totalorder %s23, 1
        %s365 = scalar_select %p364, %s23, 1
        %s366 = smul.addr %s363, 2
        %s367 = sadd.s32 %s365, %s366
        %s368 = scalar_lea.vmem %s4, %s367
        %p369 = scmp.lt.s32.totalorder %s22, 1
        %s370 = scalar_select %p369, %s22, 1
        %p371 = scmp.lt.s32.totalorder %s23, 1
        %s372 = scalar_select %p371, %s23, 1
        %s373 = smul.addr %s370, 2
        %s374 = sadd.s32 %s372, %s373
        %s375 = scalar_lea.vmem %s5, %s374
        %p376 = scmp.lt.s32.totalorder %s22, 1
        %s377 = scalar_select %p376, %s22, 1
        %p378 = scmp.lt.s32.totalorder %s23, 1
        %s379 = scalar_select %p378, %s23, 1
        %s380 = smul.addr %s379, 16
        %s381 = smul.addr %s377, 32
        %s382 = sadd.s32 %s380, %s381
        %s383 = smul.addr %s382, 8
        %s384 = scalar_lea.vmem %s6, %s383
        %v385 = vld [vmem:[%s313] sm:$0xff]
        %v386 = vld [vmem:[%s313 + $0x8] sm:$0xff]
        %v387 = vld [vmem:[%s313 + $0x10] sm:$0xff]
        %v388 = vld [vmem:[%s313 + $0x18] sm:$0xff]
        %v389 = vld [vmem:[%s313 + $0x20] sm:$0xff]
        %v390 = vld [vmem:[%s313 + $0x28] sm:$0xff]
        %v391 = vld [vmem:[%s313 + $0x30] sm:$0xff]
        %v392 = vld [vmem:[%s313 + $0x38] sm:$0xff]
        %v393 = vld [vmem:[%s1] sm:$0xff]
        %v394 = vld [vmem:[%s1 + $0x8] sm:$0xff]
        %v395 = vld [vmem:[%s1 + $0x10] sm:$0xff]
        %v396 = vld [vmem:[%s1 + $0x18] sm:$0xff]
        %v397 = vld [vmem:[%s1 + $0x20] sm:$0xff]
        %v398 = vld [vmem:[%s1 + $0x28] sm:$0xff]
        %v399 = vld [vmem:[%s1 + $0x30] sm:$0xff]
        %v400 = vld [vmem:[%s1 + $0x38] sm:$0xff]
        %v401 = vld [vmem:[%s1 + $0x40] sm:$0xff]
        %v402 = vld [vmem:[%s1 + $0x48] sm:$0xff]
        %v403 = vld [vmem:[%s1 + $0x50] sm:$0xff]
        %v404 = vld [vmem:[%s1 + $0x58] sm:$0xff]
        %v405 = vld [vmem:[%s1 + $0x60] sm:$0xff]
        %v406 = vld [vmem:[%s1 + $0x68] sm:$0xff]
        %v407 = vld [vmem:[%s1 + $0x70] sm:$0xff]
        %v408 = vld [vmem:[%s1 + $0x78] sm:$0xff]
        %v409 = vld [vmem:[%s2] sm:$0xff]
        %v410 = vld [vmem:[%s2 + $0x8] sm:$0xff]
        %v411 = vld [vmem:[%s2 + $0x10] sm:$0xff]
        %v412 = vld [vmem:[%s2 + $0x18] sm:$0xff]
        %v413 = vld [vmem:[%s2 + $0x20] sm:$0xff]
        %v414 = vld [vmem:[%s2 + $0x28] sm:$0xff]
        %v415 = vld [vmem:[%s2 + $0x30] sm:$0xff]
        %v416 = vld [vmem:[%s2 + $0x38] sm:$0xff]
        %v417 = vld [vmem:[%s2 + $0x40] sm:$0xff]
        %v418 = vld [vmem:[%s2 + $0x48] sm:$0xff]
        %v419 = vld [vmem:[%s2 + $0x50] sm:$0xff]
        %v420 = vld [vmem:[%s2 + $0x58] sm:$0xff]
        %v421 = vld [vmem:[%s2 + $0x60] sm:$0xff]
        %v422 = vld [vmem:[%s2 + $0x68] sm:$0xff]
        %v423 = vld [vmem:[%s2 + $0x70] sm:$0xff]
        %v424 = vld [vmem:[%s2 + $0x78] sm:$0xff]
        %vm425 = vcmask 523264
        %v427 = vsel %vm425, %v393, 0
        %v430 = vsel %vm425, %v394, 0
        %v433 = vsel %vm425, %v395, 0
        %v436 = vsel %vm425, %v396, 0
        %v439 = vsel %vm425, %v397, 0
        %v442 = vsel %vm425, %v398, 0
        %v445 = vsel %vm425, %v399, 0
        %v448 = vsel %vm425, %v400, 0
        %v451 = vsel %vm425, %v401, 0
        %v454 = vsel %vm425, %v402, 0
        %v457 = vsel %vm425, %v403, 0
        %v460 = vsel %vm425, %v404, 0
        %v463 = vsel %vm425, %v405, 0
        %v466 = vsel %vm425, %v406, 0
        %v469 = vsel %vm425, %v407, 0
        %v472 = vsel %vm425, %v408, 0
        %474 = vmatprep.subr.mxu0 0.0
        %v475 = vand.u32 %v385, 4294901760
        %476 = vmatpush1.msra.mxu0 %v475
        %477 = vmatprep.subr.mxu0 0.0
        %v478 = vand.u32 %v386, 4294901760
        %479 = vmatpush1.msra.mxu0 %v478
        %480 = vmatprep.subr.mxu0 0.0
        %v481 = vand.u32 %v387, 4294901760
        %482 = vmatpush1.msra.mxu0 %v481
        %483 = vmatprep.subr.mxu0 0.0
        %v484 = vand.u32 %v388, 4294901760
        %485 = vmatpush1.msra.mxu0 %v484
        %486 = vmatprep.subr.mxu0 0.0
        %v487 = vand.u32 %v389, 4294901760
        %488 = vmatpush1.msra.mxu0 %v487
        %489 = vmatprep.subr.mxu0 0.0
        %v490 = vand.u32 %v390, 4294901760
        %491 = vmatpush1.msra.mxu0 %v490
        %492 = vmatprep.subr.mxu0 0.0
        %v493 = vand.u32 %v391, 4294901760
        %494 = vmatpush1.msra.mxu0 %v493
        %495 = vmatprep.subr.mxu0 0.0
        %v496 = vand.u32 %v392, 4294901760
        %497 = vmatpush1.msra.mxu0 %v496
        %498 = vmatprep.subr.mxu0 0.0
        %499 = vmatpush1.msra.mxu0 0.0
        %500 = vmatprep.subr.mxu0 0.0
        %501 = vmatpush1.msra.mxu0 0.0
        %502 = vmatprep.subr.mxu0 0.0
        %503 = vmatpush1.msra.mxu0 0.0
        %504 = vmatprep.subr.mxu0 0.0
        %505 = vmatpush1.msra.mxu0 0.0
        %506 = vmatprep.subr.mxu0 0.0
        %507 = vmatpush1.msra.mxu0 0.0
        %508 = vmatprep.subr.mxu0 0.0
        %509 = vmatpush1.msra.mxu0 0.0
        %510 = vmatprep.subr.mxu0 0.0
        %511 = vmatpush1.msra.mxu0 0.0
        %512 = vmatprep.subr.mxu0 0.0
        %513 = vmatpush1.msra.mxu0 0.0
        %514 = vmatprep.subr.mxu0 0.0
        %515 = vmatpush1.msra.mxu0 0.0
        %516 = vmatprep.subr.mxu0 0.0
        %517 = vmatpush1.msra.mxu0 0.0
        %518 = vmatprep.subr.mxu0 0.0
        %519 = vmatpush1.msra.mxu0 0.0
        %520 = vmatprep.subr.mxu0 0.0
        %521 = vmatpush1.msra.mxu0 0.0
        %522 = vmatprep.subr.mxu0 0.0
        %523 = vmatpush1.msra.mxu0 0.0
        %524 = vmatprep.subr.mxu0 0.0
        %525 = vmatpush1.msra.mxu0 0.0
        %526 = vmatprep.subr.mxu0 0.0
        %527 = vmatpush1.msra.mxu0 0.0
        %528 = vmatprep.subr.mxu0 0.0
        %529 = vmatpush1.msra.mxu0 0.0
        %530 = vmatprep.subr.mxu0 0.0
        %531 = vmatpush1.msra.mxu0 0.0
        %532 = vmatprep.subr.mxu0 0.0
        %533 = vmatpush1.msra.mxu0 0.0
        %534 = vmatprep.subr.mxu0 0.0
        %535 = vmatpush1.msra.mxu0 0.0
        %536 = vmatprep.subr.mxu0 0.0
        %537 = vmatpush1.msra.mxu0 0.0
        %538 = vmatprep.subr.mxu0 0.0
        %539 = vmatpush1.msra.mxu0 0.0
        %540 = vmatprep.subr.mxu0 0.0
        %541 = vmatpush1.msra.mxu0 0.0
        %542 = vmatprep.subr.mxu0 0.0
        %543 = vmatpush1.msra.mxu0 0.0
        %544 = vmatprep.subr.mxu0 0.0
        %545 = vmatpush1.msra.mxu0 0.0
        %546 = vmatprep.mubr.f32.mxu0 0.0
        %v547 = vand.u32 %v427, 4294901760
        %v548 = vsub.f32 %v427, %v547
        %v549 = vand.u32 %v548, 4294901760
        %v550 = vsub.f32 %v548, %v549
        %v551 = vand.u32 %v550, 4294901760
        %552 = vmatmul.mubr.f32.gmra.mrb[0].mxu0 %v551
        %v553 = vpop.f32.mrb[0].mxu0
        %v554 = vadd.f32 0.0, %v553
        %v555 = vpop.f32.mrb[0].mxu0
        %556 = vmatprep.mubr.f32.mxu0 0.0
        %v557 = vand.u32 %v430, 4294901760
        %v558 = vsub.f32 %v430, %v557
        %v559 = vand.u32 %v558, 4294901760
        %v560 = vsub.f32 %v558, %v559
        %v561 = vand.u32 %v560, 4294901760
        %562 = vmatmul.mubr.f32.gmra.mrb[0].mxu0 %v561
        %v563 = vpop.f32.mrb[0].mxu0
        %v564 = vadd.f32 0.0, %v563
        %v565 = vpop.f32.mrb[0].mxu0
        %566 = vmatprep.mubr.f32.mxu0 0.0
        %v567 = vand.u32 %v433, 4294901760
        %v568 = vsub.f32 %v433, %v567
        %v569 = vand.u32 %v568, 4294901760
        %v570 = vsub.f32 %v568, %v569
        %v571 = vand.u32 %v570, 4294901760
        %572 = vmatmul.mubr.f32.gmra.mrb[0].mxu0 %v571
        %v573 = vpop.f32.mrb[0].mxu0
        %v574 = vadd.f32 0.0, %v573
        %v575 = vpop.f32.mrb[0].mxu0
        %576 = vmatprep.mubr.f32.mxu0 0.0
        %v577 = vand.u32 %v436, 4294901760
        %v578 = vsub.f32 %v436, %v577
        %v579 = vand.u32 %v578, 4294901760
        %v580 = vsub.f32 %v578, %v579
        %v581 = vand.u32 %v580, 4294901760
        %582 = vmatmul.mubr.f32.gmra.mrb[0].mxu0 %v581
        %v583 = vpop.f32.mrb[0].mxu0
        %v584 = vadd.f32 0.0, %v583
        %v585 = vpop.f32.mrb[0].mxu0
        %586 = vmatprep.mubr.f32.mxu0 0.0
        %v587 = vand.u32 %v439, 4294901760
        %v588 = vsub.f32 %v439, %v587
        %v589 = vand.u32 %v588, 4294901760
        %v590 = vsub.f32 %v588, %v589
        %v591 = vand.u32 %v590, 4294901760
        %592 = vmatmul.mubr.f32.gmra.mrb[0].mxu0 %v591
        %v593 = vpop.f32.mrb[0].mxu0
        %v594 = vadd.f32 0.0, %v593
        %v595 = vpop.f32.mrb[0].mxu0
        %596 = vmatprep.mubr.f32.mxu0 0.0
        %v597 = vand.u32 %v442, 4294901760
        %v598 = vsub.f32 %v442, %v597
        %v599 = vand.u32 %v598, 4294901760
        %v600 = vsub.f32 %v598, %v599
        %v601 = vand.u32 %v600, 4294901760
        %602 = vmatmul.mubr.f32.gmra.mrb[0].mxu0 %v601
        %v603 = vpop.f32.mrb[0].mxu0
        %v604 = vadd.f32 0.0, %v603
        %v605 = vpop.f32.mrb[0].mxu0
        %606 = vmatprep.mubr.f32.mxu0 0.0
        %v607 = vand.u32 %v445, 4294901760
        %v608 = vsub.f32 %v445, %v607
        %v609 = vand.u32 %v608, 4294901760
        %v610 = vsub.f32 %v608, %v609
        %v611 = vand.u32 %v610, 4294901760
        %612 = vmatmul.mubr.f32.gmra.mrb[0].mxu0 %v611
        %v613 = vpop.f32.mrb[0].mxu0
        %v614 = vadd.f32 0.0, %v613
        %v615 = vpop.f32.mrb[0].mxu0
        %616 = vmatprep.mubr.f32.mxu0 0.0
        %v617 = vand.u32 %v448, 4294901760
        %v618 = vsub.f32 %v448, %v617
        %v619 = vand.u32 %v618, 4294901760
        %v620 = vsub.f32 %v618, %v619
        %v621 = vand.u32 %v620, 4294901760
        %622 = vmatmul.mubr.f32.gmra.mrb[0].mxu0 %v621
        %v623 = vpop.f32.mrb[0].mxu0
        %v624 = vadd.f32 0.0, %v623
        %v625 = vpop.f32.mrb[0].mxu0
        %626 = vmatprep.mubr.f32.mxu0 0.0
        %v627 = vand.u32 %v451, 4294901760
        %v628 = vsub.f32 %v451, %v627
        %v629 = vand.u32 %v628, 4294901760
        %v630 = vsub.f32 %v628, %v629
        %v631 = vand.u32 %v630, 4294901760
        %632 = vmatmul.mubr.f32.gmra.mrb[0].mxu0 %v631
        %v633 = vpop.f32.mrb[0].mxu0
        %v634 = vadd.f32 0.0, %v633
        %v635 = vpop.f32.mrb[0].mxu0
        %636 = vmatprep.mubr.f32.mxu0 0.0
        %v637 = vand.u32 %v454, 4294901760
        %v638 = vsub.f32 %v454, %v637
        %v639 = vand.u32 %v638, 4294901760
        %v640 = vsub.f32 %v638, %v639
        %v641 = vand.u32 %v640, 4294901760
        %642 = vmatmul.mubr.f32.gmra.mrb[0].mxu0 %v641
        %v643 = vpop.f32.mrb[0].mxu0
        %v644 = vadd.f32 0.0, %v643
        %v645 = vpop.f32.mrb[0].mxu0
        %646 = vmatprep.mubr.f32.mxu0 0.0
        %v647 = vand.u32 %v457, 4294901760
        %v648 = vsub.f32 %v457, %v647
        %v649 = vand.u32 %v648, 4294901760
        %v650 = vsub.f32 %v648, %v649
        %v651 = vand.u32 %v650, 4294901760
        %652 = vmatmul.mubr.f32.gmra.mrb[0].mxu0 %v651
        %v653 = vpop.f32.mrb[0].mxu0
        %v654 = vadd.f32 0.0, %v653
        %v655 = vpop.f32.mrb[0].mxu0
        %656 = vmatprep.mubr.f32.mxu0 0.0
        %v657 = vand.u32 %v460, 4294901760
        %v658 = vsub.f32 %v460, %v657
        %v659 = vand.u32 %v658, 4294901760
        %v660 = vsub.f32 %v658, %v659
        %v661 = vand.u32 %v660, 4294901760
        %662 = vmatmul.mubr.f32.gmra.mrb[0].mxu0 %v661
        %v663 = vpop.f32.mrb[0].mxu0
        %v664 = vadd.f32 0.0, %v663
        %v665 = vpop.f32.mrb[0].mxu0
        %666 = vmatprep.mubr.f32.mxu0 0.0
        %v667 = vand.u32 %v463, 4294901760
        %v668 = vsub.f32 %v463, %v667
        %v669 = vand.u32 %v668, 4294901760
        %v670 = vsub.f32 %v668, %v669
        %v671 = vand.u32 %v670, 4294901760
        %672 = vmatmul.mubr.f32.gmra.mrb[0].mxu0 %v671
        %v673 = vpop.f32.mrb[0].mxu0
        %v674 = vadd.f32 0.0, %v673
        %v675 = vpop.f32.mrb[0].mxu0
        %676 = vmatprep.mubr.f32.mxu0 0.0
        %v677 = vand.u32 %v466, 4294901760
        %v678 = vsub.f32 %v466, %v677
        %v679 = vand.u32 %v678, 4294901760
        %v680 = vsub.f32 %v678, %v679
        %v681 = vand.u32 %v680, 4294901760
        %682 = vmatmul.mubr.f32.gmra.mrb[0].mxu0 %v681
        %v683 = vpop.f32.mrb[0].mxu0
        %v684 = vadd.f32 0.0, %v683
        %v685 = vpop.f32.mrb[0].mxu0
        %686 = vmatprep.mubr.f32.mxu0 0.0
        %v687 = vand.u32 %v469, 4294901760
        %v688 = vsub.f32 %v469, %v687
        %v689 = vand.u32 %v688, 4294901760
        %v690 = vsub.f32 %v688, %v689
        %v691 = vand.u32 %v690, 4294901760
        %692 = vmatmul.mubr.f32.gmra.mrb[0].mxu0 %v691
        %v693 = vpop.f32.mrb[0].mxu0
        %v694 = vadd.f32 0.0, %v693
        %v695 = vpop.f32.mrb[0].mxu0
        %696 = vmatprep.mubr.f32.mxu0 0.0
        %v697 = vand.u32 %v472, 4294901760
        %v698 = vsub.f32 %v472, %v697
        %v699 = vand.u32 %v698, 4294901760
        %v700 = vsub.f32 %v698, %v699
        %v701 = vand.u32 %v700, 4294901760
        %702 = vmatmul.mubr.f32.gmra.mrb[0].mxu0 %v701
        %v703 = vpop.f32.mrb[0].mxu0
        %v704 = vadd.f32 0.0, %v703
        %v705 = vpop.f32.mrb[0].mxu0
        %706 = vdwg.mxu0
        %707 = vmatprep.subr.mxu0 0.0
        %v708 = vand.u32 %v385, 4294901760
        %v709 = vsub.f32 %v385, %v708
        %v710 = vand.u32 %v709, 4294901760
        %v711 = vsub.f32 %v709, %v710
        %v712 = vand.u32 %v711, 4294901760
        %713 = vmatpush1.msra.mxu0 %v712
        %714 = vmatprep.subr.mxu0 0.0
        %v715 = vand.u32 %v386, 4294901760
        %v716 = vsub.f32 %v386, %v715
        %v717 = vand.u32 %v716, 4294901760
        %v718 = vsub.f32 %v716, %v717
        %v719 = vand.u32 %v718, 4294901760
        %720 = vmatpush1.msra.mxu0 %v719
        %721 = vmatprep.subr.mxu0 0.0
        %v722 = vand.u32 %v387, 4294901760
        %v723 = vsub.f32 %v387, %v722
        %v724 = vand.u32 %v723, 4294901760
        %v725 = vsub.f32 %v723, %v724
        %v726 = vand.u32 %v725, 4294901760
        %727 = vmatpush1.msra.mxu0 %v726
        %728 = vmatprep.subr.mxu0 0.0
        %v729 = vand.u32 %v388, 4294901760
        %v730 = vsub.f32 %v388, %v729
        %v731 = vand.u32 %v730, 4294901760
        %v732 = vsub.f32 %v730, %v731
        %v733 = vand.u32 %v732, 4294901760
        %734 = vmatpush1.msra.mxu0 %v733
        %735 = vmatprep.subr.mxu0 0.0
        %v736 = vand.u32 %v389, 4294901760
        %v737 = vsub.f32 %v389, %v736
        %v738 = vand.u32 %v737, 4294901760
        %v739 = vsub.f32 %v737, %v738
        %v740 = vand.u32 %v739, 4294901760
        %741 = vmatpush1.msra.mxu0 %v740
        %742 = vmatprep.subr.mxu0 0.0
        %v743 = vand.u32 %v390, 4294901760
        %v744 = vsub.f32 %v390, %v743
        %v745 = vand.u32 %v744, 4294901760
        %v746 = vsub.f32 %v744, %v745
        %v747 = vand.u32 %v746, 4294901760
        %748 = vmatpush1.msra.mxu0 %v747
        %749 = vmatprep.subr.mxu0 0.0
        %v750 = vand.u32 %v391, 4294901760
        %v751 = vsub.f32 %v391, %v750
        %v752 = vand.u32 %v751, 4294901760
        %v753 = vsub.f32 %v751, %v752
        %v754 = vand.u32 %v753, 4294901760
        %755 = vmatpush1.msra.mxu0 %v754
        %756 = vmatprep.subr.mxu0 0.0
        %v757 = vand.u32 %v392, 4294901760
        %v758 = vsub.f32 %v392, %v757
        %v759 = vand.u32 %v758, 4294901760
        %v760 = vsub.f32 %v758, %v759
        %v761 = vand.u32 %v760, 4294901760
        %762 = vmatpush1.msra.mxu0 %v761
        %763 = vmatprep.subr.mxu0 0.0
        %764 = vmatpush1.msra.mxu0 0.0
        %765 = vmatprep.subr.mxu0 0.0
        %766 = vmatpush1.msra.mxu0 0.0
        %767 = vmatprep.subr.mxu0 0.0
        %768 = vmatpush1.msra.mxu0 0.0
        %769 = vmatprep.subr.mxu0 0.0
        %770 = vmatpush1.msra.mxu0 0.0
        %771 = vmatprep.subr.mxu0 0.0
        %772 = vmatpush1.msra.mxu0 0.0
        %773 = vmatprep.subr.mxu0 0.0
        %774 = vmatpush1.msra.mxu0 0.0
        %775 = vmatprep.subr.mxu0 0.0
        %776 = vmatpush1.msra.mxu0 0.0
        %777 = vmatprep.subr.mxu0 0.0
        %778 = vmatpush1.msra.mxu0 0.0
        %779 = vmatprep.subr.mxu0 0.0
        %780 = vmatpush1.msra.mxu0 0.0
        %781 = vmatprep.subr.mxu0 0.0
        %782 = vmatpush1.msra.mxu0 0.0
        %783 = vmatprep.subr.mxu0 0.0
        %784 = vmatpush1.msra.mxu0 0.0
        %785 = vmatprep.subr.mxu0 0.0
        %786 = vmatpush1.msra.mxu0 0.0
        %787 = vmatprep.subr.mxu0 0.0
        %788 = vmatpush1.msra.mxu0 0.0
        %789 = vmatprep.subr.mxu0 0.0
        %790 = vmatpush1.msra.mxu0 0.0
        %791 = vmatprep.subr.mxu0 0.0
        %792 = vmatpush1.msra.mxu0 0.0
        %793 = vmatprep.subr.mxu0 0.0
        %794 = vmatpush1.msra.mxu0 0.0
        %795 = vmatprep.subr.mxu0 0.0
        %796 = vmatpush1.msra.mxu0 0.0
        %797 = vmatprep.subr.mxu0 0.0
        %798 = vmatpush1.msra.mxu0 0.0
        %799 = vmatprep.subr.mxu0 0.0
        %800 = vmatpush1.msra.mxu0 0.0
        %801 = vmatprep.subr.mxu0 0.0
        %802 = vmatpush1.msra.mxu0 0.0
        %803 = vmatprep.subr.mxu0 0.0
        %804 = vmatpush1.msra.mxu0 0.0
        %805 = vmatprep.subr.mxu0 0.0
        %806 = vmatpush1.msra.mxu0 0.0
        %807 = vmatprep.subr.mxu0 0.0
        %808 = vmatpush1.msra.mxu0 0.0
        %809 = vmatprep.subr.mxu0 0.0
        %810 = vmatpush1.msra.mxu0 0.0
        %811 = vmatprep.mubr.f32.mxu0 0.0
        %v812 = vand.u32 %v427, 4294901760
        %813 = vmatmul.mubr.f32.gmra.mrb[0].mxu0 %v812
        %v814 = vpop.f32.mrb[0].mxu0
        %v815 = vadd.f32 %v554, %v814
        %v816 = vpop.f32.mrb[0].mxu0
        %817 = vmatprep.mubr.f32.mxu0 0.0
        %v818 = vand.u32 %v430, 4294901760
        %819 = vmatmul.mubr.f32.gmra.mrb[0].mxu0 %v818
        %v820 = vpop.f32.mrb[0].mxu0
        %v821 = vadd.f32 %v564, %v820
        %v822 = vpop.f32.mrb[0].mxu0
        %823 = vmatprep.mubr.f32.mxu0 0.0
        %v824 = vand.u32 %v433, 4294901760
        %825 = vmatmul.mubr.f32.gmra.mrb[0].mxu0 %v824
        %v826 = vpop.f32.mrb[0].mxu0
        %v827 = vadd.f32 %v574, %v826
        %v828 = vpop.f32.mrb[0].mxu0
        %829 = vmatprep.mubr.f32.mxu0 0.0
        %v830 = vand.u32 %v436, 4294901760
        %831 = vmatmul.mubr.f32.gmra.mrb[0].mxu0 %v830
        %v832 = vpop.f32.mrb[0].mxu0
        %v833 = vadd.f32 %v584, %v832
        %v834 = vpop.f32.mrb[0].mxu0
        %835 = vmatprep.mubr.f32.mxu0 0.0
        %v836 = vand.u32 %v439, 4294901760
        %837 = vmatmul.mubr.f32.gmra.mrb[0].mxu0 %v836
        %v838 = vpop.f32.mrb[0].mxu0
        %v839 = vadd.f32 %v594, %v838
        %v840 = vpop.f32.mrb[0].mxu0
        %841 = vmatprep.mubr.f32.mxu0 0.0
        %v842 = vand.u32 %v442, 4294901760
        %843 = vmatmul.mubr.f32.gmra.mrb[0].mxu0 %v842
        %v844 = vpop.f32.mrb[0].mxu0
        %v845 = vadd.f32 %v604, %v844
        %v846 = vpop.f32.mrb[0].mxu0
        %847 = vmatprep.mubr.f32.mxu0 0.0
        %v848 = vand.u32 %v445, 4294901760
        %849 = vmatmul.mubr.f32.gmra.mrb[0].mxu0 %v848
        %v850 = vpop.f32.mrb[0].mxu0
        %v851 = vadd.f32 %v614, %v850
        %v852 = vpop.f32.mrb[0].mxu0
        %853 = vmatprep.mubr.f32.mxu0 0.0
        %v854 = vand.u32 %v448, 4294901760
        %855 = vmatmul.mubr.f32.gmra.mrb[0].mxu0 %v854
        %v856 = vpop.f32.mrb[0].mxu0
        %v857 = vadd.f32 %v624, %v856
        %v858 = vpop.f32.mrb[0].mxu0
        %859 = vmatprep.mubr.f32.mxu0 0.0
        %v860 = vand.u32 %v451, 4294901760
        %861 = vmatmul.mubr.f32.gmra.mrb[0].mxu0 %v860
        %v862 = vpop.f32.mrb[0].mxu0
        %v863 = vadd.f32 %v634, %v862
        %v864 = vpop.f32.mrb[0].mxu0
        %865 = vmatprep.mubr.f32.mxu0 0.0
        %v866 = vand.u32 %v454, 4294901760
        %867 = vmatmul.mubr.f32.gmra.mrb[0].mxu0 %v866
        %v868 = vpop.f32.mrb[0].mxu0
        %v869 = vadd.f32 %v644, %v868
        %v870 = vpop.f32.mrb[0].mxu0
        %871 = vmatprep.mubr.f32.mxu0 0.0
        %v872 = vand.u32 %v457, 4294901760
        %873 = vmatmul.mubr.f32.gmra.mrb[0].mxu0 %v872
        %v874 = vpop.f32.mrb[0].mxu0
        %v875 = vadd.f32 %v654, %v874
        %v876 = vpop.f32.mrb[0].mxu0
        %877 = vmatprep.mubr.f32.mxu0 0.0
        %v878 = vand.u32 %v460, 4294901760
        %879 = vmatmul.mubr.f32.gmra.mrb[0].mxu0 %v878
        %v880 = vpop.f32.mrb[0].mxu0
        %v881 = vadd.f32 %v664, %v880
        %v882 = vpop.f32.mrb[0].mxu0
        %883 = vmatprep.mubr.f32.mxu0 0.0
        %v884 = vand.u32 %v463, 4294901760
        %885 = vmatmul.mubr.f32.gmra.mrb[0].mxu0 %v884
        %v886 = vpop.f32.mrb[0].mxu0
        %v887 = vadd.f32 %v674, %v886
        %v888 = vpop.f32.mrb[0].mxu0
        %889 = vmatprep.mubr.f32.mxu0 0.0
        %v890 = vand.u32 %v466, 4294901760
        %891 = vmatmul.mubr.f32.gmra.mrb[0].mxu0 %v890
        %v892 = vpop.f32.mrb[0].mxu0
        %v893 = vadd.f32 %v684, %v892
        %v894 = vpop.f32.mrb[0].mxu0
        %895 = vmatprep.mubr.f32.mxu0 0.0
        %v896 = vand.u32 %v469, 4294901760
        %897 = vmatmul.mubr.f32.gmra.mrb[0].mxu0 %v896
        %v898 = vpop.f32.mrb[0].mxu0
        %v899 = vadd.f32 %v694, %v898
        %v900 = vpop.f32.mrb[0].mxu0
        %901 = vmatprep.mubr.f32.mxu0 0.0
        %v902 = vand.u32 %v472, 4294901760
        %903 = vmatmul.mubr.f32.gmra.mrb[0].mxu0 %v902
        %v904 = vpop.f32.mrb[0].mxu0
        %v905 = vadd.f32 %v704, %v904
        %v906 = vpop.f32.mrb[0].mxu0
        %907 = vdwg.mxu0
        %908 = vmatprep.subr.mxu0 0.0
        %v909 = vand.u32 %v385, 4294901760
        %v910 = vsub.f32 %v385, %v909
        %911 = vmatpush1.msra.mxu0 %v910
        %912 = vmatprep.subr.mxu0 0.0
        %v913 = vand.u32 %v386, 4294901760
        %v914 = vsub.f32 %v386, %v913
        %915 = vmatpush1.msra.mxu0 %v914
        %916 = vmatprep.subr.mxu0 0.0
        %v917 = vand.u32 %v387, 4294901760
        %v918 = vsub.f32 %v387, %v917
        %919 = vmatpush1.msra.mxu0 %v918
        %920 = vmatprep.subr.mxu0 0.0
        %v921 = vand.u32 %v388, 4294901760
        %v922 = vsub.f32 %v388, %v921
        %923 = vmatpush1.msra.mxu0 %v922
        %924 = vmatprep.subr.mxu0 0.0
        %v925 = vand.u32 %v389, 4294901760
        %v926 = vsub.f32 %v389, %v925
        %927 = vmatpush1.msra.mxu0 %v926
        %928 = vmatprep.subr.mxu0 0.0
        %v929 = vand.u32 %v390, 4294901760
        %v930 = vsub.f32 %v390, %v929
        %931 = vmatpush1.msra.mxu0 %v930
        %932 = vmatprep.subr.mxu0 0.0
        %v933 = vand.u32 %v391, 4294901760
        %v934 = vsub.f32 %v391, %v933
        %935 = vmatpush1.msra.mxu0 %v934
        %936 = vmatprep.subr.mxu0 0.0
        %v937 = vand.u32 %v392, 4294901760
        %v938 = vsub.f32 %v392, %v937
        %939 = vmatpush1.msra.mxu0 %v938
        %940 = vmatprep.subr.mxu0 0.0
        %941 = vmatpush1.msra.mxu0 0.0
        %942 = vmatprep.subr.mxu0 0.0
        %943 = vmatpush1.msra.mxu0 0.0
        %944 = vmatprep.subr.mxu0 0.0
        %945 = vmatpush1.msra.mxu0 0.0
        %946 = vmatprep.subr.mxu0 0.0
        %947 = vmatpush1.msra.mxu0 0.0
        %948 = vmatprep.subr.mxu0 0.0
        %949 = vmatpush1.msra.mxu0 0.0
        %950 = vmatprep.subr.mxu0 0.0
        %951 = vmatpush1.msra.mxu0 0.0
        %952 = vmatprep.subr.mxu0 0.0
        %953 = vmatpush1.msra.mxu0 0.0
        %954 = vmatprep.subr.mxu0 0.0
        %955 = vmatpush1.msra.mxu0 0.0
        %956 = vmatprep.subr.mxu0 0.0
        %957 = vmatpush1.msra.mxu0 0.0
        %958 = vmatprep.subr.mxu0 0.0
        %959 = vmatpush1.msra.mxu0 0.0
        %960 = vmatprep.subr.mxu0 0.0
        %961 = vmatpush1.msra.mxu0 0.0
        %962 = vmatprep.subr.mxu0 0.0
        %963 = vmatpush1.msra.mxu0 0.0
        %964 = vmatprep.subr.mxu0 0.0
        %965 = vmatpush1.msra.mxu0 0.0
        %966 = vmatprep.subr.mxu0 0.0
        %967 = vmatpush1.msra.mxu0 0.0
        %968 = vmatprep.subr.mxu0 0.0
        %969 = vmatpush1.msra.mxu0 0.0
        %970 = vmatprep.subr.mxu0 0.0
        %971 = vmatpush1.msra.mxu0 0.0
        %972 = vmatprep.subr.mxu0 0.0
        %973 = vmatpush1.msra.mxu0 0.0
        %974 = vmatprep.subr.mxu0 0.0
        %975 = vmatpush1.msra.mxu0 0.0
        %976 = vmatprep.subr.mxu0 0.0
        %977 = vmatpush1.msra.mxu0 0.0
        %978 = vmatprep.subr.mxu0 0.0
        %979 = vmatpush1.msra.mxu0 0.0
        %980 = vmatprep.subr.mxu0 0.0
        %981 = vmatpush1.msra.mxu0 0.0
        %982 = vmatprep.subr.mxu0 0.0
        %983 = vmatpush1.msra.mxu0 0.0
        %984 = vmatprep.subr.mxu0 0.0
        %985 = vmatpush1.msra.mxu0 0.0
        %986 = vmatprep.subr.mxu0 0.0
        %987 = vmatpush1.msra.mxu0 0.0
        %988 = vmatprep.mubr.f32.mxu0 0.0
        %v989 = vand.u32 %v427, 4294901760
        %v990 = vsub.f32 %v427, %v989
        %991 = vmatmul.mubr.f32.gmra.mrb[0].mxu0 %v990
        %v992 = vpop.f32.mrb[0].mxu0
        %v993 = vadd.f32 %v815, %v992
        %v994 = vpop.f32.mrb[0].mxu0
        %995 = vmatprep.mubr.f32.mxu0 0.0
        %v996 = vand.u32 %v430, 4294901760
        %v997 = vsub.f32 %v430, %v996
        %998 = vmatmul.mubr.f32.gmra.mrb[0].mxu0 %v997
        %v999 = vpop.f32.mrb[0].mxu0
        %v1000 = vadd.f32 %v821, %v999
        %v1001 = vpop.f32.mrb[0].mxu0
        %1002 = vmatprep.mubr.f32.mxu0 0.0
        %v1003 = vand.u32 %v433, 4294901760
        %v1004 = vsub.f32 %v433, %v1003
        %1005 = vmatmul.mubr.f32.gmra.mrb[0].mxu0 %v1004
        %v1006 = vpop.f32.mrb[0].mxu0
        %v1007 = vadd.f32 %v827, %v1006
        %v1008 = vpop.f32.mrb[0].mxu0
        %1009 = vmatprep.mubr.f32.mxu0 0.0
        %v1010 = vand.u32 %v436, 4294901760
        %v1011 = vsub.f32 %v436, %v1010
        %1012 = vmatmul.mubr.f32.gmra.mrb[0].mxu0 %v1011
        %v1013 = vpop.f32.mrb[0].mxu0
        %v1014 = vadd.f32 %v833, %v1013
        %v1015 = vpop.f32.mrb[0].mxu0
        %1016 = vmatprep.mubr.f32.mxu0 0.0
        %v1017 = vand.u32 %v439, 4294901760
        %v1018 = vsub.f32 %v439, %v1017
        %1019 = vmatmul.mubr.f32.gmra.mrb[0].mxu0 %v1018
        %v1020 = vpop.f32.mrb[0].mxu0
        %v1021 = vadd.f32 %v839, %v1020
        %v1022 = vpop.f32.mrb[0].mxu0
        %1023 = vmatprep.mubr.f32.mxu0 0.0
        %v1024 = vand.u32 %v442, 4294901760
        %v1025 = vsub.f32 %v442, %v1024
        %1026 = vmatmul.mubr.f32.gmra.mrb[0].mxu0 %v1025
        %v1027 = vpop.f32.mrb[0].mxu0
        %v1028 = vadd.f32 %v845, %v1027
        %v1029 = vpop.f32.mrb[0].mxu0
        %1030 = vmatprep.mubr.f32.mxu0 0.0
        %v1031 = vand.u32 %v445, 4294901760
        %v1032 = vsub.f32 %v445, %v1031
        %1033 = vmatmul.mubr.f32.gmra.mrb[0].mxu0 %v1032
        %v1034 = vpop.f32.mrb[0].mxu0
        %v1035 = vadd.f32 %v851, %v1034
        %v1036 = vpop.f32.mrb[0].mxu0
        %1037 = vmatprep.mubr.f32.mxu0 0.0
        %v1038 = vand.u32 %v448, 4294901760
        %v1039 = vsub.f32 %v448, %v1038
        %1040 = vmatmul.mubr.f32.gmra.mrb[0].mxu0 %v1039
        %v1041 = vpop.f32.mrb[0].mxu0
        %v1042 = vadd.f32 %v857, %v1041
        %v1043 = vpop.f32.mrb[0].mxu0
        %1044 = vmatprep.mubr.f32.mxu0 0.0
        %v1045 = vand.u32 %v451, 4294901760
        %v1046 = vsub.f32 %v451, %v1045
        %1047 = vmatmul.mubr.f32.gmra.mrb[0].mxu0 %v1046
        %v1048 = vpop.f32.mrb[0].mxu0
        %v1049 = vadd.f32 %v863, %v1048
        %v1050 = vpop.f32.mrb[0].mxu0
        %1051 = vmatprep.mubr.f32.mxu0 0.0
        %v1052 = vand.u32 %v454, 4294901760
        %v1053 = vsub.f32 %v454, %v1052
        %1054 = vmatmul.mubr.f32.gmra.mrb[0].mxu0 %v1053
        %v1055 = vpop.f32.mrb[0].mxu0
        %v1056 = vadd.f32 %v869, %v1055
        %v1057 = vpop.f32.mrb[0].mxu0
        %1058 = vmatprep.mubr.f32.mxu0 0.0
        %v1059 = vand.u32 %v457, 4294901760
        %v1060 = vsub.f32 %v457, %v1059
        %1061 = vmatmul.mubr.f32.gmra.mrb[0].mxu0 %v1060
        %v1062 = vpop.f32.mrb[0].mxu0
        %v1063 = vadd.f32 %v875, %v1062
        %v1064 = vpop.f32.mrb[0].mxu0
        %1065 = vmatprep.mubr.f32.mxu0 0.0
        %v1066 = vand.u32 %v460, 4294901760
        %v1067 = vsub.f32 %v460, %v1066
        %1068 = vmatmul.mubr.f32.gmra.mrb[0].mxu0 %v1067
        %v1069 = vpop.f32.mrb[0].mxu0
        %v1070 = vadd.f32 %v881, %v1069
        %v1071 = vpop.f32.mrb[0].mxu0
        %1072 = vmatprep.mubr.f32.mxu0 0.0
        %v1073 = vand.u32 %v463, 4294901760
        %v1074 = vsub.f32 %v463, %v1073
        %1075 = vmatmul.mubr.f32.gmra.mrb[0].mxu0 %v1074
        %v1076 = vpop.f32.mrb[0].mxu0
        %v1077 = vadd.f32 %v887, %v1076
        %v1078 = vpop.f32.mrb[0].mxu0
        %1079 = vmatprep.mubr.f32.mxu0 0.0
        %v1080 = vand.u32 %v466, 4294901760
        %v1081 = vsub.f32 %v466, %v1080
        %1082 = vmatmul.mubr.f32.gmra.mrb[0].mxu0 %v1081
        %v1083 = vpop.f32.mrb[0].mxu0
        %v1084 = vadd.f32 %v893, %v1083
        %v1085 = vpop.f32.mrb[0].mxu0
        %1086 = vmatprep.mubr.f32.mxu0 0.0
        %v1087 = vand.u32 %v469, 4294901760
        %v1088 = vsub.f32 %v469, %v1087
        %1089 = vmatmul.mubr.f32.gmra.mrb[0].mxu0 %v1088
        %v1090 = vpop.f32.mrb[0].mxu0
        %v1091 = vadd.f32 %v899, %v1090
        %v1092 = vpop.f32.mrb[0].mxu0
        %1093 = vmatprep.mubr.f32.mxu0 0.0
        %v1094 = vand.u32 %v472, 4294901760
        %v1095 = vsub.f32 %v472, %v1094
        %1096 = vmatmul.mubr.f32.gmra.mrb[0].mxu0 %v1095
        %v1097 = vpop.f32.mrb[0].mxu0
        %v1098 = vadd.f32 %v905, %v1097
        %v1099 = vpop.f32.mrb[0].mxu0
        %1100 = vdwg.mxu0
        %1101 = vmatprep.subr.mxu0 0.0
        %v1102 = vand.u32 %v385, 4294901760
        %1103 = vmatpush1.msra.mxu0 %v1102
        %1104 = vmatprep.subr.mxu0 0.0
        %v1105 = vand.u32 %v386, 4294901760
        %1106 = vmatpush1.msra.mxu0 %v1105
        %1107 = vmatprep.subr.mxu0 0.0
        %v1108 = vand.u32 %v387, 4294901760
        %1109 = vmatpush1.msra.mxu0 %v1108
        %1110 = vmatprep.subr.mxu0 0.0
        %v1111 = vand.u32 %v388, 4294901760
        %1112 = vmatpush1.msra.mxu0 %v1111
        %1113 = vmatprep.subr.mxu0 0.0
        %v1114 = vand.u32 %v389, 4294901760
        %1115 = vmatpush1.msra.mxu0 %v1114
        %1116 = vmatprep.subr.mxu0 0.0
        %v1117 = vand.u32 %v390, 4294901760
        %1118 = vmatpush1.msra.mxu0 %v1117
        %1119 = vmatprep.subr.mxu0 0.0
        %v1120 = vand.u32 %v391, 4294901760
        %1121 = vmatpush1.msra.mxu0 %v1120
        %1122 = vmatprep.subr.mxu0 0.0
        %v1123 = vand.u32 %v392, 4294901760
        %1124 = vmatpush1.msra.mxu0 %v1123
        %1125 = vmatprep.subr.mxu0 0.0
        %1126 = vmatpush1.msra.mxu0 0.0
        %1127 = vmatprep.subr.mxu0 0.0
        %1128 = vmatpush1.msra.mxu0 0.0
        %1129 = vmatprep.subr.mxu0 0.0
        %1130 = vmatpush1.msra.mxu0 0.0
        %1131 = vmatprep.subr.mxu0 0.0
        %1132 = vmatpush1.msra.mxu0 0.0
        %1133 = vmatprep.subr.mxu0 0.0
        %1134 = vmatpush1.msra.mxu0 0.0
        %1135 = vmatprep.subr.mxu0 0.0
        %1136 = vmatpush1.msra.mxu0 0.0
        %1137 = vmatprep.subr.mxu0 0.0
        %1138 = vmatpush1.msra.mxu0 0.0
        %1139 = vmatprep.subr.mxu0 0.0
        %1140 = vmatpush1.msra.mxu0 0.0
        %1141 = vmatprep.subr.mxu0 0.0
        %1142 = vmatpush1.msra.mxu0 0.0
        %1143 = vmatprep.subr.mxu0 0.0
        %1144 = vmatpush1.msra.mxu0 0.0
        %1145 = vmatprep.subr.mxu0 0.0
        %1146 = vmatpush1.msra.mxu0 0.0
        %1147 = vmatprep.subr.mxu0 0.0
        %1148 = vmatpush1.msra.mxu0 0.0
        %1149 = vmatprep.subr.mxu0 0.0
        %1150 = vmatpush1.msra.mxu0 0.0
        %1151 = vmatprep.subr.mxu0 0.0
        %1152 = vmatpush1.msra.mxu0 0.0
        %1153 = vmatprep.subr.mxu0 0.0
        %1154 = vmatpush1.msra.mxu0 0.0
        %1155 = vmatprep.subr.mxu0 0.0
        %1156 = vmatpush1.msra.mxu0 0.0
        %1157 = vmatprep.subr.mxu0 0.0
        %1158 = vmatpush1.msra.mxu0 0.0
        %1159 = vmatprep.subr.mxu0 0.0
        %1160 = vmatpush1.msra.mxu0 0.0
        %1161 = vmatprep.subr.mxu0 0.0
        %1162 = vmatpush1.msra.mxu0 0.0
        %1163 = vmatprep.subr.mxu0 0.0
        %1164 = vmatpush1.msra.mxu0 0.0
        %1165 = vmatprep.subr.mxu0 0.0
        %1166 = vmatpush1.msra.mxu0 0.0
        %1167 = vmatprep.subr.mxu0 0.0
        %1168 = vmatpush1.msra.mxu0 0.0
        %1169 = vmatprep.subr.mxu0 0.0
        %1170 = vmatpush1.msra.mxu0 0.0
        %1171 = vmatprep.subr.mxu0 0.0
        %1172 = vmatpush1.msra.mxu0 0.0
        %1173 = vmatprep.mubr.f32.mxu0 0.0
        %v1174 = vand.u32 %v427, 4294901760
        %v1175 = vsub.f32 %v427, %v1174
        %v1176 = vand.u32 %v1175, 4294901760
        %1177 = vmatmul.mubr.f32.gmra.mrb[0].mxu0 %v1176
        %v1178 = vpop.f32.mrb[0].mxu0
        %v1179 = vadd.f32 %v993, %v1178
        %v1180 = vpop.f32.mrb[0].mxu0
        %1181 = vmatprep.mubr.f32.mxu0 0.0
        %v1182 = vand.u32 %v430, 4294901760
        %v1183 = vsub.f32 %v430, %v1182
        %v1184 = vand.u32 %v1183, 4294901760
        %1185 = vmatmul.mubr.f32.gmra.mrb[0].mxu0 %v1184
        %v1186 = vpop.f32.mrb[0].mxu0
        %v1187 = vadd.f32 %v1000, %v1186
        %v1188 = vpop.f32.mrb[0].mxu0
        %1189 = vmatprep.mubr.f32.mxu0 0.0
        %v1190 = vand.u32 %v433, 4294901760
        %v1191 = vsub.f32 %v433, %v1190
        %v1192 = vand.u32 %v1191, 4294901760
        %1193 = vmatmul.mubr.f32.gmra.mrb[0].mxu0 %v1192
        %v1194 = vpop.f32.mrb[0].mxu0
        %v1195 = vadd.f32 %v1007, %v1194
        %v1196 = vpop.f32.mrb[0].mxu0
        %1197 = vmatprep.mubr.f32.mxu0 0.0
        %v1198 = vand.u32 %v436, 4294901760
        %v1199 = vsub.f32 %v436, %v1198
        %v1200 = vand.u32 %v1199, 4294901760
        %1201 = vmatmul.mubr.f32.gmra.mrb[0].mxu0 %v1200
        %v1202 = vpop.f32.mrb[0].mxu0
        %v1203 = vadd.f32 %v1014, %v1202
        %v1204 = vpop.f32.mrb[0].mxu0
        %1205 = vmatprep.mubr.f32.mxu0 0.0
        %v1206 = vand.u32 %v439, 4294901760
        %v1207 = vsub.f32 %v439, %v1206
        %v1208 = vand.u32 %v1207, 4294901760
        %1209 = vmatmul.mubr.f32.gmra.mrb[0].mxu0 %v1208
        %v1210 = vpop.f32.mrb[0].mxu0
        %v1211 = vadd.f32 %v1021, %v1210
        %v1212 = vpop.f32.mrb[0].mxu0
        %1213 = vmatprep.mubr.f32.mxu0 0.0
        %v1214 = vand.u32 %v442, 4294901760
        %v1215 = vsub.f32 %v442, %v1214
        %v1216 = vand.u32 %v1215, 4294901760
        %1217 = vmatmul.mubr.f32.gmra.mrb[0].mxu0 %v1216
        %v1218 = vpop.f32.mrb[0].mxu0
        %v1219 = vadd.f32 %v1028, %v1218
        %v1220 = vpop.f32.mrb[0].mxu0
        %1221 = vmatprep.mubr.f32.mxu0 0.0
        %v1222 = vand.u32 %v445, 4294901760
        %v1223 = vsub.f32 %v445, %v1222
        %v1224 = vand.u32 %v1223, 4294901760
        %1225 = vmatmul.mubr.f32.gmra.mrb[0].mxu0 %v1224
        %v1226 = vpop.f32.mrb[0].mxu0
        %v1227 = vadd.f32 %v1035, %v1226
        %v1228 = vpop.f32.mrb[0].mxu0
        %1229 = vmatprep.mubr.f32.mxu0 0.0
        %v1230 = vand.u32 %v448, 4294901760
        %v1231 = vsub.f32 %v448, %v1230
        %v1232 = vand.u32 %v1231, 4294901760
        %1233 = vmatmul.mubr.f32.gmra.mrb[0].mxu0 %v1232
        %v1234 = vpop.f32.mrb[0].mxu0
        %v1235 = vadd.f32 %v1042, %v1234
        %v1236 = vpop.f32.mrb[0].mxu0
        %1237 = vmatprep.mubr.f32.mxu0 0.0
        %v1238 = vand.u32 %v451, 4294901760
        %v1239 = vsub.f32 %v451, %v1238
        %v1240 = vand.u32 %v1239, 4294901760
        %1241 = vmatmul.mubr.f32.gmra.mrb[0].mxu0 %v1240
        %v1242 = vpop.f32.mrb[0].mxu0
        %v1243 = vadd.f32 %v1049, %v1242
        %v1244 = vpop.f32.mrb[0].mxu0
        %1245 = vmatprep.mubr.f32.mxu0 0.0
        %v1246 = vand.u32 %v454, 4294901760
        %v1247 = vsub.f32 %v454, %v1246
        %v1248 = vand.u32 %v1247, 4294901760
        %1249 = vmatmul.mubr.f32.gmra.mrb[0].mxu0 %v1248
        %v1250 = vpop.f32.mrb[0].mxu0
        %v1251 = vadd.f32 %v1056, %v1250
        %v1252 = vpop.f32.mrb[0].mxu0
        %1253 = vmatprep.mubr.f32.mxu0 0.0
        %v1254 = vand.u32 %v457, 4294901760
        %v1255 = vsub.f32 %v457, %v1254
        %v1256 = vand.u32 %v1255, 4294901760
        %1257 = vmatmul.mubr.f32.gmra.mrb[0].mxu0 %v1256
        %v1258 = vpop.f32.mrb[0].mxu0
        %v1259 = vadd.f32 %v1063, %v1258
        %v1260 = vpop.f32.mrb[0].mxu0
        %1261 = vmatprep.mubr.f32.mxu0 0.0
        %v1262 = vand.u32 %v460, 4294901760
        %v1263 = vsub.f32 %v460, %v1262
        %v1264 = vand.u32 %v1263, 4294901760
        %1265 = vmatmul.mubr.f32.gmra.mrb[0].mxu0 %v1264
        %v1266 = vpop.f32.mrb[0].mxu0
        %v1267 = vadd.f32 %v1070, %v1266
        %v1268 = vpop.f32.mrb[0].mxu0
        %1269 = vmatprep.mubr.f32.mxu0 0.0
        %v1270 = vand.u32 %v463, 4294901760
        %v1271 = vsub.f32 %v463, %v1270
        %v1272 = vand.u32 %v1271, 4294901760
        %1273 = vmatmul.mubr.f32.gmra.mrb[0].mxu0 %v1272
        %v1274 = vpop.f32.mrb[0].mxu0
        %v1275 = vadd.f32 %v1077, %v1274
        %v1276 = vpop.f32.mrb[0].mxu0
        %1277 = vmatprep.mubr.f32.mxu0 0.0
        %v1278 = vand.u32 %v466, 4294901760
        %v1279 = vsub.f32 %v466, %v1278
        %v1280 = vand.u32 %v1279, 4294901760
        %1281 = vmatmul.mubr.f32.gmra.mrb[0].mxu0 %v1280
        %v1282 = vpop.f32.mrb[0].mxu0
        %v1283 = vadd.f32 %v1084, %v1282
        %v1284 = vpop.f32.mrb[0].mxu0
        %1285 = vmatprep.mubr.f32.mxu0 0.0
        %v1286 = vand.u32 %v469, 4294901760
        %v1287 = vsub.f32 %v469, %v1286
        %v1288 = vand.u32 %v1287, 4294901760
        %1289 = vmatmul.mubr.f32.gmra.mrb[0].mxu0 %v1288
        %v1290 = vpop.f32.mrb[0].mxu0
        %v1291 = vadd.f32 %v1091, %v1290
        %v1292 = vpop.f32.mrb[0].mxu0
        %1293 = vmatprep.mubr.f32.mxu0 0.0
        %v1294 = vand.u32 %v472, 4294901760
        %v1295 = vsub.f32 %v472, %v1294
        %v1296 = vand.u32 %v1295, 4294901760
        %1297 = vmatmul.mubr.f32.gmra.mrb[0].mxu0 %v1296
        %v1298 = vpop.f32.mrb[0].mxu0
        %v1299 = vadd.f32 %v1098, %v1298
        %v1300 = vpop.f32.mrb[0].mxu0
        %1301 = vdwg.mxu0
        %1302 = vmatprep.subr.mxu0 0.0
        %v1303 = vand.u32 %v385, 4294901760
        %v1304 = vsub.f32 %v385, %v1303
        %v1305 = vand.u32 %v1304, 4294901760
        %1306 = vmatpush1.msra.mxu0 %v1305
        %1307 = vmatprep.subr.mxu0 0.0
        %v1308 = vand.u32 %v386, 4294901760
        %v1309 = vsub.f32 %v386, %v1308
        %v1310 = vand.u32 %v1309, 4294901760
        %1311 = vmatpush1.msra.mxu0 %v1310
        %1312 = vmatprep.subr.mxu0 0.0
        %v1313 = vand.u32 %v387, 4294901760
        %v1314 = vsub.f32 %v387, %v1313
        %v1315 = vand.u32 %v1314, 4294901760
        %1316 = vmatpush1.msra.mxu0 %v1315
        %1317 = vmatprep.subr.mxu0 0.0
        %v1318 = vand.u32 %v388, 4294901760
        %v1319 = vsub.f32 %v388, %v1318
        %v1320 = vand.u32 %v1319, 4294901760
        %1321 = vmatpush1.msra.mxu0 %v1320
        %1322 = vmatprep.subr.mxu0 0.0
        %v1323 = vand.u32 %v389, 4294901760
        %v1324 = vsub.f32 %v389, %v1323
        %v1325 = vand.u32 %v1324, 4294901760
        %1326 = vmatpush1.msra.mxu0 %v1325
        %1327 = vmatprep.subr.mxu0 0.0
        %v1328 = vand.u32 %v390, 4294901760
        %v1329 = vsub.f32 %v390, %v1328
        %v1330 = vand.u32 %v1329, 4294901760
        %1331 = vmatpush1.msra.mxu0 %v1330
        %1332 = vmatprep.subr.mxu0 0.0
        %v1333 = vand.u32 %v391, 4294901760
        %v1334 = vsub.f32 %v391, %v1333
        %v1335 = vand.u32 %v1334, 4294901760
        %1336 = vmatpush1.msra.mxu0 %v1335
        %1337 = vmatprep.subr.mxu0 0.0
        %v1338 = vand.u32 %v392, 4294901760
        %v1339 = vsub.f32 %v392, %v1338
        %v1340 = vand.u32 %v1339, 4294901760
        %1341 = vmatpush1.msra.mxu0 %v1340
        %1342 = vmatprep.subr.mxu0 0.0
        %1343 = vmatpush1.msra.mxu0 0.0
        %1344 = vmatprep.subr.mxu0 0.0
        %1345 = vmatpush1.msra.mxu0 0.0
        %1346 = vmatprep.subr.mxu0 0.0
        %1347 = vmatpush1.msra.mxu0 0.0
        %1348 = vmatprep.subr.mxu0 0.0
        %1349 = vmatpush1.msra.mxu0 0.0
        %1350 = vmatprep.subr.mxu0 0.0
        %1351 = vmatpush1.msra.mxu0 0.0
        %1352 = vmatprep.subr.mxu0 0.0
        %1353 = vmatpush1.msra.mxu0 0.0
        %1354 = vmatprep.subr.mxu0 0.0
        %1355 = vmatpush1.msra.mxu0 0.0
        %1356 = vmatprep.subr.mxu0 0.0
        %1357 = vmatpush1.msra.mxu0 0.0
        %1358 = vmatprep.subr.mxu0 0.0
        %1359 = vmatpush1.msra.mxu0 0.0
        %1360 = vmatprep.subr.mxu0 0.0
        %1361 = vmatpush1.msra.mxu0 0.0
        %1362 = vmatprep.subr.mxu0 0.0
        %1363 = vmatpush1.msra.mxu0 0.0
        %1364 = vmatprep.subr.mxu0 0.0
        %1365 = vmatpush1.msra.mxu0 0.0
        %1366 = vmatprep.subr.mxu0 0.0
        %1367 = vmatpush1.msra.mxu0 0.0
        %1368 = vmatprep.subr.mxu0 0.0
        %1369 = vmatpush1.msra.mxu0 0.0
        %1370 = vmatprep.subr.mxu0 0.0
        %1371 = vmatpush1.msra.mxu0 0.0
        %1372 = vmatprep.subr.mxu0 0.0
        %1373 = vmatpush1.msra.mxu0 0.0
        %1374 = vmatprep.subr.mxu0 0.0
        %1375 = vmatpush1.msra.mxu0 0.0
        %1376 = vmatprep.subr.mxu0 0.0
        %1377 = vmatpush1.msra.mxu0 0.0
        %1378 = vmatprep.subr.mxu0 0.0
        %1379 = vmatpush1.msra.mxu0 0.0
        %1380 = vmatprep.subr.mxu0 0.0
        %1381 = vmatpush1.msra.mxu0 0.0
        %1382 = vmatprep.subr.mxu0 0.0
        %1383 = vmatpush1.msra.mxu0 0.0
        %1384 = vmatprep.subr.mxu0 0.0
        %1385 = vmatpush1.msra.mxu0 0.0
        %1386 = vmatprep.subr.mxu0 0.0
        %1387 = vmatpush1.msra.mxu0 0.0
        %1388 = vmatprep.subr.mxu0 0.0
        %1389 = vmatpush1.msra.mxu0 0.0
        %1390 = vmatprep.mubr.f32.mxu0 0.0
        %v1391 = vand.u32 %v427, 4294901760
        %1392 = vmatmul.mubr.f32.gmra.mrb[0].mxu0 %v1391
        %v1393 = vpop.f32.mrb[0].mxu0
        %v1394 = vadd.f32 %v1179, %v1393
        %v1395 = vpop.f32.mrb[0].mxu0
        %1396 = vmatprep.mubr.f32.mxu0 0.0
        %v1397 = vand.u32 %v430, 4294901760
        %1398 = vmatmul.mubr.f32.gmra.mrb[0].mxu0 %v1397
        %v1399 = vpop.f32.mrb[0].mxu0
        %v1400 = vadd.f32 %v1187, %v1399
        %v1401 = vpop.f32.mrb[0].mxu0
        %1402 = vmatprep.mubr.f32.mxu0 0.0
        %v1403 = vand.u32 %v433, 4294901760
        %1404 = vmatmul.mubr.f32.gmra.mrb[0].mxu0 %v1403
        %v1405 = vpop.f32.mrb[0].mxu0
        %v1406 = vadd.f32 %v1195, %v1405
        %v1407 = vpop.f32.mrb[0].mxu0
        %1408 = vmatprep.mubr.f32.mxu0 0.0
        %v1409 = vand.u32 %v436, 4294901760
        %1410 = vmatmul.mubr.f32.gmra.mrb[0].mxu0 %v1409
        %v1411 = vpop.f32.mrb[0].mxu0
        %v1412 = vadd.f32 %v1203, %v1411
        %v1413 = vpop.f32.mrb[0].mxu0
        %1414 = vmatprep.mubr.f32.mxu0 0.0
        %v1415 = vand.u32 %v439, 4294901760
        %1416 = vmatmul.mubr.f32.gmra.mrb[0].mxu0 %v1415
        %v1417 = vpop.f32.mrb[0].mxu0
        %v1418 = vadd.f32 %v1211, %v1417
        %v1419 = vpop.f32.mrb[0].mxu0
        %1420 = vmatprep.mubr.f32.mxu0 0.0
        %v1421 = vand.u32 %v442, 4294901760
        %1422 = vmatmul.mubr.f32.gmra.mrb[0].mxu0 %v1421
        %v1423 = vpop.f32.mrb[0].mxu0
        %v1424 = vadd.f32 %v1219, %v1423
        %v1425 = vpop.f32.mrb[0].mxu0
        %1426 = vmatprep.mubr.f32.mxu0 0.0
        %v1427 = vand.u32 %v445, 4294901760
        %1428 = vmatmul.mubr.f32.gmra.mrb[0].mxu0 %v1427
        %v1429 = vpop.f32.mrb[0].mxu0
        %v1430 = vadd.f32 %v1227, %v1429
        %v1431 = vpop.f32.mrb[0].mxu0
        %1432 = vmatprep.mubr.f32.mxu0 0.0
        %v1433 = vand.u32 %v448, 4294901760
        %1434 = vmatmul.mubr.f32.gmra.mrb[0].mxu0 %v1433
        %v1435 = vpop.f32.mrb[0].mxu0
        %v1436 = vadd.f32 %v1235, %v1435
        %v1437 = vpop.f32.mrb[0].mxu0
        %1438 = vmatprep.mubr.f32.mxu0 0.0
        %v1439 = vand.u32 %v451, 4294901760
        %1440 = vmatmul.mubr.f32.gmra.mrb[0].mxu0 %v1439
        %v1441 = vpop.f32.mrb[0].mxu0
        %v1442 = vadd.f32 %v1243, %v1441
        %v1443 = vpop.f32.mrb[0].mxu0
        %1444 = vmatprep.mubr.f32.mxu0 0.0
        %v1445 = vand.u32 %v454, 4294901760
        %1446 = vmatmul.mubr.f32.gmra.mrb[0].mxu0 %v1445
        %v1447 = vpop.f32.mrb[0].mxu0
        %v1448 = vadd.f32 %v1251, %v1447
        %v1449 = vpop.f32.mrb[0].mxu0
        %1450 = vmatprep.mubr.f32.mxu0 0.0
        %v1451 = vand.u32 %v457, 4294901760
        %1452 = vmatmul.mubr.f32.gmra.mrb[0].mxu0 %v1451
        %v1453 = vpop.f32.mrb[0].mxu0
        %v1454 = vadd.f32 %v1259, %v1453
        %v1455 = vpop.f32.mrb[0].mxu0
        %1456 = vmatprep.mubr.f32.mxu0 0.0
        %v1457 = vand.u32 %v460, 4294901760
        %1458 = vmatmul.mubr.f32.gmra.mrb[0].mxu0 %v1457
        %v1459 = vpop.f32.mrb[0].mxu0
        %v1460 = vadd.f32 %v1267, %v1459
        %v1461 = vpop.f32.mrb[0].mxu0
        %1462 = vmatprep.mubr.f32.mxu0 0.0
        %v1463 = vand.u32 %v463, 4294901760
        %1464 = vmatmul.mubr.f32.gmra.mrb[0].mxu0 %v1463
        %v1465 = vpop.f32.mrb[0].mxu0
        %v1466 = vadd.f32 %v1275, %v1465
        %v1467 = vpop.f32.mrb[0].mxu0
        %1468 = vmatprep.mubr.f32.mxu0 0.0
        %v1469 = vand.u32 %v466, 4294901760
        %1470 = vmatmul.mubr.f32.gmra.mrb[0].mxu0 %v1469
        %v1471 = vpop.f32.mrb[0].mxu0
        %v1472 = vadd.f32 %v1283, %v1471
        %v1473 = vpop.f32.mrb[0].mxu0
        %1474 = vmatprep.mubr.f32.mxu0 0.0
        %v1475 = vand.u32 %v469, 4294901760
        %1476 = vmatmul.mubr.f32.gmra.mrb[0].mxu0 %v1475
        %v1477 = vpop.f32.mrb[0].mxu0
        %v1478 = vadd.f32 %v1291, %v1477
        %v1479 = vpop.f32.mrb[0].mxu0
        %1480 = vmatprep.mubr.f32.mxu0 0.0
        %v1481 = vand.u32 %v472, 4294901760
        %1482 = vmatmul.mubr.f32.gmra.mrb[0].mxu0 %v1481
        %v1483 = vpop.f32.mrb[0].mxu0
        %v1484 = vadd.f32 %v1299, %v1483
        %v1485 = vpop.f32.mrb[0].mxu0
        %1486 = vdwg.mxu0
        %1487 = vmatprep.subr.mxu0 0.0
        %v1488 = vand.u32 %v385, 4294901760
        %1489 = vmatpush1.msra.mxu0 %v1488
        %1490 = vmatprep.subr.mxu0 0.0
        %v1491 = vand.u32 %v386, 4294901760
        %1492 = vmatpush1.msra.mxu0 %v1491
        %1493 = vmatprep.subr.mxu0 0.0
        %v1494 = vand.u32 %v387, 4294901760
        %1495 = vmatpush1.msra.mxu0 %v1494
        %1496 = vmatprep.subr.mxu0 0.0
        %v1497 = vand.u32 %v388, 4294901760
        %1498 = vmatpush1.msra.mxu0 %v1497
        %1499 = vmatprep.subr.mxu0 0.0
        %v1500 = vand.u32 %v389, 4294901760
        %1501 = vmatpush1.msra.mxu0 %v1500
        %1502 = vmatprep.subr.mxu0 0.0
        %v1503 = vand.u32 %v390, 4294901760
        %1504 = vmatpush1.msra.mxu0 %v1503
        %1505 = vmatprep.subr.mxu0 0.0
        %v1506 = vand.u32 %v391, 4294901760
        %1507 = vmatpush1.msra.mxu0 %v1506
        %1508 = vmatprep.subr.mxu0 0.0
        %v1509 = vand.u32 %v392, 4294901760
        %1510 = vmatpush1.msra.mxu0 %v1509
        %1511 = vmatprep.subr.mxu0 0.0
        %1512 = vmatpush1.msra.mxu0 0.0
        %1513 = vmatprep.subr.mxu0 0.0
        %1514 = vmatpush1.msra.mxu0 0.0
        %1515 = vmatprep.subr.mxu0 0.0
        %1516 = vmatpush1.msra.mxu0 0.0
        %1517 = vmatprep.subr.mxu0 0.0
        %1518 = vmatpush1.msra.mxu0 0.0
        %1519 = vmatprep.subr.mxu0 0.0
        %1520 = vmatpush1.msra.mxu0 0.0
        %1521 = vmatprep.subr.mxu0 0.0
        %1522 = vmatpush1.msra.mxu0 0.0
        %1523 = vmatprep.subr.mxu0 0.0
        %1524 = vmatpush1.msra.mxu0 0.0
        %1525 = vmatprep.subr.mxu0 0.0
        %1526 = vmatpush1.msra.mxu0 0.0
        %1527 = vmatprep.subr.mxu0 0.0
        %1528 = vmatpush1.msra.mxu0 0.0
        %1529 = vmatprep.subr.mxu0 0.0
        %1530 = vmatpush1.msra.mxu0 0.0
        %1531 = vmatprep.subr.mxu0 0.0
        %1532 = vmatpush1.msra.mxu0 0.0
        %1533 = vmatprep.subr.mxu0 0.0
        %1534 = vmatpush1.msra.mxu0 0.0
        %1535 = vmatprep.subr.mxu0 0.0
        %1536 = vmatpush1.msra.mxu0 0.0
        %1537 = vmatprep.subr.mxu0 0.0
        %1538 = vmatpush1.msra.mxu0 0.0
        %1539 = vmatprep.subr.mxu0 0.0
        %1540 = vmatpush1.msra.mxu0 0.0
        %1541 = vmatprep.subr.mxu0 0.0
        %1542 = vmatpush1.msra.mxu0 0.0
        %1543 = vmatprep.subr.mxu0 0.0
        %1544 = vmatpush1.msra.mxu0 0.0
        %1545 = vmatprep.subr.mxu0 0.0
        %1546 = vmatpush1.msra.mxu0 0.0
        %1547 = vmatprep.subr.mxu0 0.0
        %1548 = vmatpush1.msra.mxu0 0.0
        %1549 = vmatprep.subr.mxu0 0.0
        %1550 = vmatpush1.msra.mxu0 0.0
        %1551 = vmatprep.subr.mxu0 0.0
        %1552 = vmatpush1.msra.mxu0 0.0
        %1553 = vmatprep.subr.mxu0 0.0
        %1554 = vmatpush1.msra.mxu0 0.0
        %1555 = vmatprep.subr.mxu0 0.0
        %1556 = vmatpush1.msra.mxu0 0.0
        %1557 = vmatprep.subr.mxu0 0.0
        %1558 = vmatpush1.msra.mxu0 0.0
        %1559 = vmatprep.mubr.f32.mxu0 0.0
        %v1560 = vand.u32 %v427, 4294901760
        %1561 = vmatmul.mubr.f32.gmra.mrb[0].mxu0 %v1560
        %v1562 = vpop.f32.mrb[0].mxu0
        %v1563 = vadd.f32 %v1394, %v1562
        %v1564 = vpop.f32.mrb[0].mxu0
        %1565 = vmatprep.mubr.f32.mxu0 0.0
        %v1566 = vand.u32 %v430, 4294901760
        %1567 = vmatmul.mubr.f32.gmra.mrb[0].mxu0 %v1566
        %v1568 = vpop.f32.mrb[0].mxu0
        %v1569 = vadd.f32 %v1400, %v1568
        %v1570 = vpop.f32.mrb[0].mxu0
        %1571 = vmatprep.mubr.f32.mxu0 0.0
        %v1572 = vand.u32 %v433, 4294901760
        %1573 = vmatmul.mubr.f32.gmra.mrb[0].mxu0 %v1572
        %v1574 = vpop.f32.mrb[0].mxu0
        %v1575 = vadd.f32 %v1406, %v1574
        %v1576 = vpop.f32.mrb[0].mxu0
        %1577 = vmatprep.mubr.f32.mxu0 0.0
        %v1578 = vand.u32 %v436, 4294901760
        %1579 = vmatmul.mubr.f32.gmra.mrb[0].mxu0 %v1578
        %v1580 = vpop.f32.mrb[0].mxu0
        %v1581 = vadd.f32 %v1412, %v1580
        %v1582 = vpop.f32.mrb[0].mxu0
        %1583 = vmatprep.mubr.f32.mxu0 0.0
        %v1584 = vand.u32 %v439, 4294901760
        %1585 = vmatmul.mubr.f32.gmra.mrb[0].mxu0 %v1584
        %v1586 = vpop.f32.mrb[0].mxu0
        %v1587 = vadd.f32 %v1418, %v1586
        %v1588 = vpop.f32.mrb[0].mxu0
        %1589 = vmatprep.mubr.f32.mxu0 0.0
        %v1590 = vand.u32 %v442, 4294901760
        %1591 = vmatmul.mubr.f32.gmra.mrb[0].mxu0 %v1590
        %v1592 = vpop.f32.mrb[0].mxu0
        %v1593 = vadd.f32 %v1424, %v1592
        %v1594 = vpop.f32.mrb[0].mxu0
        %1595 = vmatprep.mubr.f32.mxu0 0.0
        %v1596 = vand.u32 %v445, 4294901760
        %1597 = vmatmul.mubr.f32.gmra.mrb[0].mxu0 %v1596
        %v1598 = vpop.f32.mrb[0].mxu0
        %v1599 = vadd.f32 %v1430, %v1598
        %v1600 = vpop.f32.mrb[0].mxu0
        %1601 = vmatprep.mubr.f32.mxu0 0.0
        %v1602 = vand.u32 %v448, 4294901760
        %1603 = vmatmul.mubr.f32.gmra.mrb[0].mxu0 %v1602
        %v1604 = vpop.f32.mrb[0].mxu0
        %v1605 = vadd.f32 %v1436, %v1604
        %v1606 = vpop.f32.mrb[0].mxu0
        %1607 = vmatprep.mubr.f32.mxu0 0.0
        %v1608 = vand.u32 %v451, 4294901760
        %1609 = vmatmul.mubr.f32.gmra.mrb[0].mxu0 %v1608
        %v1610 = vpop.f32.mrb[0].mxu0
        %v1611 = vadd.f32 %v1442, %v1610
        %v1612 = vpop.f32.mrb[0].mxu0
        %1613 = vmatprep.mubr.f32.mxu0 0.0
        %v1614 = vand.u32 %v454, 4294901760
        %1615 = vmatmul.mubr.f32.gmra.mrb[0].mxu0 %v1614
        %v1616 = vpop.f32.mrb[0].mxu0
        %v1617 = vadd.f32 %v1448, %v1616
        %v1618 = vpop.f32.mrb[0].mxu0
        %1619 = vmatprep.mubr.f32.mxu0 0.0
        %v1620 = vand.u32 %v457, 4294901760
        %1621 = vmatmul.mubr.f32.gmra.mrb[0].mxu0 %v1620
        %v1622 = vpop.f32.mrb[0].mxu0
        %v1623 = vadd.f32 %v1454, %v1622
        %v1624 = vpop.f32.mrb[0].mxu0
        %1625 = vmatprep.mubr.f32.mxu0 0.0
        %v1626 = vand.u32 %v460, 4294901760
        %1627 = vmatmul.mubr.f32.gmra.mrb[0].mxu0 %v1626
        %v1628 = vpop.f32.mrb[0].mxu0
        %v1629 = vadd.f32 %v1460, %v1628
        %v1630 = vpop.f32.mrb[0].mxu0
        %1631 = vmatprep.mubr.f32.mxu0 0.0
        %v1632 = vand.u32 %v463, 4294901760
        %1633 = vmatmul.mubr.f32.gmra.mrb[0].mxu0 %v1632
        %v1634 = vpop.f32.mrb[0].mxu0
        %v1635 = vadd.f32 %v1466, %v1634
        %v1636 = vpop.f32.mrb[0].mxu0
        %1637 = vmatprep.mubr.f32.mxu0 0.0
        %v1638 = vand.u32 %v466, 4294901760
        %1639 = vmatmul.mubr.f32.gmra.mrb[0].mxu0 %v1638
        %v1640 = vpop.f32.mrb[0].mxu0
        %v1641 = vadd.f32 %v1472, %v1640
        %v1642 = vpop.f32.mrb[0].mxu0
        %1643 = vmatprep.mubr.f32.mxu0 0.0
        %v1644 = vand.u32 %v469, 4294901760
        %1645 = vmatmul.mubr.f32.gmra.mrb[0].mxu0 %v1644
        %v1646 = vpop.f32.mrb[0].mxu0
        %v1647 = vadd.f32 %v1478, %v1646
        %v1648 = vpop.f32.mrb[0].mxu0
        %1649 = vmatprep.mubr.f32.mxu0 0.0
        %v1650 = vand.u32 %v472, 4294901760
        %1651 = vmatmul.mubr.f32.gmra.mrb[0].mxu0 %v1650
        %v1652 = vpop.f32.mrb[0].mxu0
        %v1653 = vadd.f32 %v1484, %v1652
        %v1654 = vpop.f32.mrb[0].mxu0
        %1655 = vdwg.mxu0
        %1657 = vset.pattern.permute.xlu0 0
        %1658 = vperm.xlu0 %1657, %v409
        %v1659 = vpop.permute.xlu0 %1658
        %1662 = vset.pattern.permute.xlu0 0
        %1663 = vperm.xlu0 %1662, %v410
        %v1664 = vpop.permute.xlu0 %1663
        %1667 = vset.pattern.permute.xlu0 0
        %1668 = vperm.xlu0 %1667, %v411
        %v1669 = vpop.permute.xlu0 %1668
        %1672 = vset.pattern.permute.xlu0 0
        %1673 = vperm.xlu0 %1672, %v412
        %v1674 = vpop.permute.xlu0 %1673
        %1677 = vset.pattern.permute.xlu0 0
        %1678 = vperm.xlu0 %1677, %v413
        %v1679 = vpop.permute.xlu0 %1678
        %1682 = vset.pattern.permute.xlu0 0
        %1683 = vperm.xlu0 %1682, %v414
        %v1684 = vpop.permute.xlu0 %1683
        %1687 = vset.pattern.permute.xlu0 0
        %1688 = vperm.xlu0 %1687, %v415
        %v1689 = vpop.permute.xlu0 %1688
        %1692 = vset.pattern.permute.xlu0 0
        %1693 = vperm.xlu0 %1692, %v416
        %v1694 = vpop.permute.xlu0 %1693
        %1697 = vset.pattern.permute.xlu0 0
        %1698 = vperm.xlu0 %1697, %v417
        %v1699 = vpop.permute.xlu0 %1698
        %1702 = vset.pattern.permute.xlu0 0
        %1703 = vperm.xlu0 %1702, %v418
        %v1704 = vpop.permute.xlu0 %1703
        %1707 = vset.pattern.permute.xlu0 0
        %1708 = vperm.xlu0 %1707, %v419
        %v1709 = vpop.permute.xlu0 %1708
        %1712 = vset.pattern.permute.xlu0 0
        %1713 = vperm.xlu0 %1712, %v420
        %v1714 = vpop.permute.xlu0 %1713
        %1717 = vset.pattern.permute.xlu0 0
        %1718 = vperm.xlu0 %1717, %v421
        %v1719 = vpop.permute.xlu0 %1718
        %1722 = vset.pattern.permute.xlu0 0
        %1723 = vperm.xlu0 %1722, %v422
        %v1724 = vpop.permute.xlu0 %1723
        %1727 = vset.pattern.permute.xlu0 0
        %1728 = vperm.xlu0 %1727, %v423
        %v1729 = vpop.permute.xlu0 %1728
        %1732 = vset.pattern.permute.xlu0 0
        %1733 = vperm.xlu0 %1732, %v424
        %v1734 = vpop.permute.xlu0 %1733
        %v1736 = vsub.f32 %v1659, %v1563
        %v1737 = vsub.f32 %v1664, %v1569
        %v1738 = vsub.f32 %v1669, %v1575
        %v1739 = vsub.f32 %v1674, %v1581
        %v1740 = vsub.f32 %v1679, %v1587
        %v1741 = vsub.f32 %v1684, %v1593
        %v1742 = vsub.f32 %v1689, %v1599
        %v1743 = vsub.f32 %v1694, %v1605
        %v1744 = vsub.f32 %v1699, %v1611
        %v1745 = vsub.f32 %v1704, %v1617
        %v1746 = vsub.f32 %v1709, %v1623
        %v1747 = vsub.f32 %v1714, %v1629
        %v1748 = vsub.f32 %v1719, %v1635
        %v1749 = vsub.f32 %v1724, %v1641
        %v1750 = vsub.f32 %v1729, %v1647
        %v1751 = vsub.f32 %v1734, %v1653
        %v1752 = vmin.f32 %v1736, %v1740
        %v1753 = vmin.f32 %v1737, %v1741
        %v1754 = vmin.f32 %v1738, %v1742
        %v1755 = vmin.f32 %v1739, %v1743
        %v1756 = vmin.f32 %v1752, %v1744
        %v1757 = vmin.f32 %v1753, %v1745
        %v1758 = vmin.f32 %v1754, %v1746
        %v1759 = vmin.f32 %v1755, %v1747
        %v1760 = vmin.f32 %v1756, %v1748
        %v1761 = vmin.f32 %v1757, %v1749
        %v1762 = vmin.f32 %v1758, %v1750
        %v1763 = vmin.f32 %v1759, %v1751
        %v1764 = vmin.f32 %v1760, %v1761
        %v1765 = vmin.f32 %v1762, %v1763
        %v1766 = vmin.f32 %v1764, %v1765
        %v1767 = vrot.slane %v1766, 4
        %v1768 = vmin.f32 %v1766, %v1767
        %v1769 = vrot.slane %v1768, 2
        %v1770 = vmin.f32 %v1768, %v1769
        %v1771 = vrot.slane %v1770, 1
        %v1772 = vmin.f32 %v1770, %v1771
        %v1773 = vlaneseq
        %v1774 = vshrl.u32 %v1773, 7
        %v1775 = vadd.s32 %v1774, 8
        %v1776 = vadd.s32 %v1774, 16
        %v1777 = vadd.s32 %v1774, 24
        %v1778 = vadd.s32 %v1774, 32
        %v1779 = vadd.s32 %v1774, 40
        %v1780 = vadd.s32 %v1774, 48
        %v1781 = vadd.s32 %v1774, 56
        %v1782 = vadd.s32 %v1774, 64
        %v1783 = vadd.s32 %v1774, 72
        %v1784 = vadd.s32 %v1774, 80
        %v1785 = vadd.s32 %v1774, 88
        %v1786 = vadd.s32 %v1774, 96
        %v1787 = vadd.s32 %v1774, 104
        %v1788 = vadd.s32 %v1774, 112
        %v1789 = vadd.s32 %v1774, 120
        %vm1790 = vcmp.eq.f32.partialorder %v1736, %v1772
        %vm1791 = vcmp.eq.f32.partialorder %v1737, %v1772
        %vm1792 = vcmp.eq.f32.partialorder %v1738, %v1772
        %vm1793 = vcmp.eq.f32.partialorder %v1739, %v1772
        %vm1794 = vcmp.eq.f32.partialorder %v1740, %v1772
        %vm1795 = vcmp.eq.f32.partialorder %v1741, %v1772
        %vm1796 = vcmp.eq.f32.partialorder %v1742, %v1772
        %vm1797 = vcmp.eq.f32.partialorder %v1743, %v1772
        %vm1798 = vcmp.eq.f32.partialorder %v1744, %v1772
        %vm1799 = vcmp.eq.f32.partialorder %v1745, %v1772
        %vm1800 = vcmp.eq.f32.partialorder %v1746, %v1772
        %vm1801 = vcmp.eq.f32.partialorder %v1747, %v1772
        %vm1802 = vcmp.eq.f32.partialorder %v1748, %v1772
        %vm1803 = vcmp.eq.f32.partialorder %v1749, %v1772
        %vm1804 = vcmp.eq.f32.partialorder %v1750, %v1772
        %vm1805 = vcmp.eq.f32.partialorder %v1751, %v1772
        %v1806 = vsel %vm1790, %v1774, 128
        %v1807 = vsel %vm1791, %v1775, 128
        %v1808 = vsel %vm1792, %v1776, 128
        %v1809 = vsel %vm1793, %v1777, 128
        %v1810 = vsel %vm1794, %v1778, 128
        %v1811 = vsel %vm1795, %v1779, 128
        %v1812 = vsel %vm1796, %v1780, 128
        %v1813 = vsel %vm1797, %v1781, 128
        %v1814 = vsel %vm1798, %v1782, 128
        %v1815 = vsel %vm1799, %v1783, 128
        %v1816 = vsel %vm1800, %v1784, 128
        %v1817 = vsel %vm1801, %v1785, 128
        %v1818 = vsel %vm1802, %v1786, 128
        %v1819 = vsel %vm1803, %v1787, 128
        %v1820 = vsel %vm1804, %v1788, 128
        %v1821 = vsel %vm1805, %v1789, 128
        %vm1822 = vcmp.lt.s32.totalorder %v1806, %v1810
        %v1823 = vsel %vm1822, %v1806, %v1810
        %vm1824 = vcmp.lt.s32.totalorder %v1807, %v1811
        %v1825 = vsel %vm1824, %v1807, %v1811
        %vm1826 = vcmp.lt.s32.totalorder %v1808, %v1812
        %v1827 = vsel %vm1826, %v1808, %v1812
        %vm1828 = vcmp.lt.s32.totalorder %v1809, %v1813
        %v1829 = vsel %vm1828, %v1809, %v1813
        %vm1830 = vcmp.lt.s32.totalorder %v1823, %v1814
        %v1831 = vsel %vm1830, %v1823, %v1814
        %vm1832 = vcmp.lt.s32.totalorder %v1825, %v1815
        %v1833 = vsel %vm1832, %v1825, %v1815
        %vm1834 = vcmp.lt.s32.totalorder %v1827, %v1816
        %v1835 = vsel %vm1834, %v1827, %v1816
        %vm1836 = vcmp.lt.s32.totalorder %v1829, %v1817
        %v1837 = vsel %vm1836, %v1829, %v1817
        %vm1838 = vcmp.lt.s32.totalorder %v1831, %v1818
        %v1839 = vsel %vm1838, %v1831, %v1818
        %vm1840 = vcmp.lt.s32.totalorder %v1833, %v1819
        %v1841 = vsel %vm1840, %v1833, %v1819
        %vm1842 = vcmp.lt.s32.totalorder %v1835, %v1820
        %v1843 = vsel %vm1842, %v1835, %v1820
        %vm1844 = vcmp.lt.s32.totalorder %v1837, %v1821
        %v1845 = vsel %vm1844, %v1837, %v1821
        %vm1846 = vcmp.lt.s32.totalorder %v1839, %v1841
        %v1847 = vsel %vm1846, %v1839, %v1841
        %vm1848 = vcmp.lt.s32.totalorder %v1843, %v1845
        %v1849 = vsel %vm1848, %v1843, %v1845
        %vm1850 = vcmp.lt.s32.totalorder %v1847, %v1849
        %v1851 = vsel %vm1850, %v1847, %v1849
        %v1852 = vrot.slane %v1851, 4
        %vm1853 = vcmp.lt.s32.totalorder %v1851, %v1852
        %v1854 = vsel %vm1853, %v1851, %v1852
        %v1855 = vrot.slane %v1854, 2
        %vm1856 = vcmp.lt.s32.totalorder %v1854, %v1855
        %v1857 = vsel %vm1856, %v1854, %v1855
        %v1858 = vrot.slane %v1857, 1
        %vm1859 = vcmp.lt.s32.totalorder %v1857, %v1858
        %v1860 = vsel %vm1859, %v1857, %v1858
        %vm1861 = vcmp.eq.s32.totalorder %v1774, %v1860
        %vm1862 = vcmp.eq.s32.totalorder %v1775, %v1860
        %vm1863 = vcmp.eq.s32.totalorder %v1776, %v1860
        %vm1864 = vcmp.eq.s32.totalorder %v1777, %v1860
        %vm1865 = vcmp.eq.s32.totalorder %v1778, %v1860
        %vm1866 = vcmp.eq.s32.totalorder %v1779, %v1860
        %vm1867 = vcmp.eq.s32.totalorder %v1780, %v1860
        %vm1868 = vcmp.eq.s32.totalorder %v1781, %v1860
        %vm1869 = vcmp.eq.s32.totalorder %v1782, %v1860
        %vm1870 = vcmp.eq.s32.totalorder %v1783, %v1860
        %vm1871 = vcmp.eq.s32.totalorder %v1784, %v1860
        %vm1872 = vcmp.eq.s32.totalorder %v1785, %v1860
        %vm1873 = vcmp.eq.s32.totalorder %v1786, %v1860
        %vm1874 = vcmp.eq.s32.totalorder %v1787, %v1860
        %vm1875 = vcmp.eq.s32.totalorder %v1788, %v1860
        %vm1876 = vcmp.eq.s32.totalorder %v1789, %v1860
        %v1877 = vsel %vm1861, 1, 0
        %v1878 = vsel %vm1862, 1, 0
        %v1879 = vsel %vm1863, 1, 0
        %v1880 = vsel %vm1864, 1, 0
        %v1881 = vsel %vm1865, 1, 0
        %v1882 = vsel %vm1866, 1, 0
        %v1883 = vsel %vm1867, 1, 0
        %v1884 = vsel %vm1868, 1, 0
        %v1885 = vsel %vm1869, 1, 0
        %v1886 = vsel %vm1870, 1, 0
        %v1887 = vsel %vm1871, 1, 0
        %v1888 = vsel %vm1872, 1, 0
        %v1889 = vsel %vm1873, 1, 0
        %v1890 = vsel %vm1874, 1, 0
        %v1891 = vsel %vm1875, 1, 0
        %v1892 = vsel %vm1876, 1, 0
        %v1893 = vcvt.s32.f32 %v1877
        %v1894 = vcvt.s32.f32 %v1878
        %v1895 = vcvt.s32.f32 %v1879
        %v1896 = vcvt.s32.f32 %v1880
        %v1897 = vcvt.s32.f32 %v1881
        %v1898 = vcvt.s32.f32 %v1882
        %v1899 = vcvt.s32.f32 %v1883
        %v1900 = vcvt.s32.f32 %v1884
        %v1901 = vcvt.s32.f32 %v1885
        %v1902 = vcvt.s32.f32 %v1886
        %v1903 = vcvt.s32.f32 %v1887
        %v1904 = vcvt.s32.f32 %v1888
        %v1905 = vcvt.s32.f32 %v1889
        %v1906 = vcvt.s32.f32 %v1890
        %v1907 = vcvt.s32.f32 %v1891
        %v1908 = vcvt.s32.f32 %v1892
        %1909 = vxpose.xlu0.b32.start [1/16] %v393, 128
        %1910 = vxpose.xlu0.b32.cont [2/16] %v394, 128
        %1911 = vxpose.xlu0.b32.cont [3/16] %v395, 128
        %1912 = vxpose.xlu0.b32.cont [4/16] %v396, 128
        %1913 = vxpose.xlu0.b32.cont [5/16] %v397, 128
        %1914 = vxpose.xlu0.b32.cont [6/16] %v398, 128
        %1915 = vxpose.xlu0.b32.cont [7/16] %v399, 128
        %1916 = vxpose.xlu0.b32.cont [8/16] %v400, 128
        %1917 = vxpose.xlu0.b32.cont [9/16] %v401, 128
        %1918 = vxpose.xlu0.b32.cont [10/16] %v402, 128
        %1919 = vxpose.xlu0.b32.cont [11/16] %v403, 128
        %1920 = vxpose.xlu0.b32.cont [12/16] %v404, 128
        %1921 = vxpose.xlu0.b32.cont [13/16] %v405, 128
        %1922 = vxpose.xlu0.b32.cont [14/16] %v406, 128
        %1923 = vxpose.xlu0.b32.cont [15/16] %v407, 128
        %1924 = vxpose.xlu0.b32.end [16/16] %v408, 128
        %v1925 = vpop.trf.xlu0
        %v1926 = vpop.trf.xlu0
        %v1927 = vpop.trf.xlu0
        %v1928 = vpop.trf.xlu0
        %v1929 = vpop.trf.xlu0
        %v1930 = vpop.trf.xlu0
        %v1931 = vpop.trf.xlu0
        %v1932 = vpop.trf.xlu0
        %v1933 = vpop.trf.xlu0
        %v1934 = vpop.trf.xlu0
        %v1935 = vpop.trf.xlu0
        %v1936 = vpop.trf.xlu0
        %v1937 = vpop.trf.xlu0
        %v1938 = vpop.trf.xlu0
        %v1939 = vpop.trf.xlu0
        %v1940 = vpop.trf.xlu0
        %1941 = vmatprep.subr.mxu0 0.0
        %v1942 = vand.u32 %v1893, 4294901760
        %1943 = vmatpush1.msra.mxu0 %v1942
        %1944 = vmatprep.subr.mxu0 0.0
        %v1945 = vand.u32 %v1894, 4294901760
        %1946 = vmatpush1.msra.mxu0 %v1945
        %1947 = vmatprep.subr.mxu0 0.0
        %v1948 = vand.u32 %v1895, 4294901760
        %1949 = vmatpush1.msra.mxu0 %v1948
        %1950 = vmatprep.subr.mxu0 0.0
        %v1951 = vand.u32 %v1896, 4294901760
        %1952 = vmatpush1.msra.mxu0 %v1951
        %1953 = vmatprep.subr.mxu0 0.0
        %v1954 = vand.u32 %v1897, 4294901760
        %1955 = vmatpush1.msra.mxu0 %v1954
        %1956 = vmatprep.subr.mxu0 0.0
        %v1957 = vand.u32 %v1898, 4294901760
        %1958 = vmatpush1.msra.mxu0 %v1957
        %1959 = vmatprep.subr.mxu0 0.0
        %v1960 = vand.u32 %v1899, 4294901760
        %1961 = vmatpush1.msra.mxu0 %v1960
        %1962 = vmatprep.subr.mxu0 0.0
        %v1963 = vand.u32 %v1900, 4294901760
        %1964 = vmatpush1.msra.mxu0 %v1963
        %1965 = vmatprep.subr.mxu0 0.0
        %v1966 = vand.u32 %v1901, 4294901760
        %1967 = vmatpush1.msra.mxu0 %v1966
        %1968 = vmatprep.subr.mxu0 0.0
        %v1969 = vand.u32 %v1902, 4294901760
        %1970 = vmatpush1.msra.mxu0 %v1969
        %1971 = vmatprep.subr.mxu0 0.0
        %v1972 = vand.u32 %v1903, 4294901760
        %1973 = vmatpush1.msra.mxu0 %v1972
        %1974 = vmatprep.subr.mxu0 0.0
        %v1975 = vand.u32 %v1904, 4294901760
        %1976 = vmatpush1.msra.mxu0 %v1975
        %1977 = vmatprep.subr.mxu0 0.0
        %v1978 = vand.u32 %v1905, 4294901760
        %1979 = vmatpush1.msra.mxu0 %v1978
        %1980 = vmatprep.subr.mxu0 0.0
        %v1981 = vand.u32 %v1906, 4294901760
        %1982 = vmatpush1.msra.mxu0 %v1981
        %1983 = vmatprep.subr.mxu0 0.0
        %v1984 = vand.u32 %v1907, 4294901760
        %1985 = vmatpush1.msra.mxu0 %v1984
        %1986 = vmatprep.subr.mxu0 0.0
        %v1987 = vand.u32 %v1908, 4294901760
        %1988 = vmatpush1.msra.mxu0 %v1987
        %1989 = vmatprep.subr.mxu0 0.0
        %1990 = vmatpush1.msra.mxu0 0.0
        %1991 = vmatprep.subr.mxu0 0.0
        %1992 = vmatpush1.msra.mxu0 0.0
        %1993 = vmatprep.subr.mxu0 0.0
        %1994 = vmatpush1.msra.mxu0 0.0
        %1995 = vmatprep.subr.mxu0 0.0
        %1996 = vmatpush1.msra.mxu0 0.0
        %1997 = vmatprep.subr.mxu0 0.0
        %1998 = vmatpush1.msra.mxu0 0.0
        %1999 = vmatprep.subr.mxu0 0.0
        %2000 = vmatpush1.msra.mxu0 0.0
        %2001 = vmatprep.subr.mxu0 0.0
        %2002 = vmatpush1.msra.mxu0 0.0
        %2003 = vmatprep.subr.mxu0 0.0
        %2004 = vmatpush1.msra.mxu0 0.0
        %2005 = vmatprep.subr.mxu0 0.0
        %2006 = vmatpush1.msra.mxu0 0.0
        %2007 = vmatprep.subr.mxu0 0.0
        %2008 = vmatpush1.msra.mxu0 0.0
        %2009 = vmatprep.subr.mxu0 0.0
        %2010 = vmatpush1.msra.mxu0 0.0
        %2011 = vmatprep.subr.mxu0 0.0
        %2012 = vmatpush1.msra.mxu0 0.0
        %2013 = vmatprep.subr.mxu0 0.0
        %2014 = vmatpush1.msra.mxu0 0.0
        %2015 = vmatprep.subr.mxu0 0.0
        %2016 = vmatpush1.msra.mxu0 0.0
        %2017 = vmatprep.subr.mxu0 0.0
        %2018 = vmatpush1.msra.mxu0 0.0
        %2019 = vmatprep.subr.mxu0 0.0
        %2020 = vmatpush1.msra.mxu0 0.0
        %2021 = vmatprep.mubr.f32.mxu0 0.0
        %v2022 = vand.u32 %v1925, 4294901760
        %v2023 = vsub.f32 %v1925, %v2022
        %v2024 = vand.u32 %v2023, 4294901760
        %v2025 = vsub.f32 %v2023, %v2024
        %v2026 = vand.u32 %v2025, 4294901760
        %2027 = vmatmul.mubr.f32.gmra.mrb[0].mxu0 %v2026
        %v2028 = vpop.f32.mrb[0].mxu0
        %v2029 = vadd.f32 0.0, %v2028
        %v2030 = vpop.f32.mrb[0].mxu0
        %2031 = vmatprep.mubr.f32.mxu0 0.0
        %v2032 = vand.u32 %v1926, 4294901760
        %v2033 = vsub.f32 %v1926, %v2032
        %v2034 = vand.u32 %v2033, 4294901760
        %v2035 = vsub.f32 %v2033, %v2034
        %v2036 = vand.u32 %v2035, 4294901760
        %2037 = vmatmul.mubr.f32.gmra.mrb[0].mxu0 %v2036
        %v2038 = vpop.f32.mrb[0].mxu0
        %v2039 = vadd.f32 0.0, %v2038
        %v2040 = vpop.f32.mrb[0].mxu0
        %2041 = vmatprep.mubr.f32.mxu0 0.0
        %v2042 = vand.u32 %v1927, 4294901760
        %v2043 = vsub.f32 %v1927, %v2042
        %v2044 = vand.u32 %v2043, 4294901760
        %v2045 = vsub.f32 %v2043, %v2044
        %v2046 = vand.u32 %v2045, 4294901760
        %2047 = vmatmul.mubr.f32.gmra.mrb[0].mxu0 %v2046
        %v2048 = vpop.f32.mrb[0].mxu0
        %v2049 = vadd.f32 0.0, %v2048
        %v2050 = vpop.f32.mrb[0].mxu0
        %2051 = vmatprep.mubr.f32.mxu0 0.0
        %v2052 = vand.u32 %v1928, 4294901760
        %v2053 = vsub.f32 %v1928, %v2052
        %v2054 = vand.u32 %v2053, 4294901760
        %v2055 = vsub.f32 %v2053, %v2054
        %v2056 = vand.u32 %v2055, 4294901760
        %2057 = vmatmul.mubr.f32.gmra.mrb[0].mxu0 %v2056
        %v2058 = vpop.f32.mrb[0].mxu0
        %v2059 = vadd.f32 0.0, %v2058
        %v2060 = vpop.f32.mrb[0].mxu0
        %2061 = vmatprep.mubr.f32.mxu0 0.0
        %v2062 = vand.u32 %v1929, 4294901760
        %v2063 = vsub.f32 %v1929, %v2062
        %v2064 = vand.u32 %v2063, 4294901760
        %v2065 = vsub.f32 %v2063, %v2064
        %v2066 = vand.u32 %v2065, 4294901760
        %2067 = vmatmul.mubr.f32.gmra.mrb[0].mxu0 %v2066
        %v2068 = vpop.f32.mrb[0].mxu0
        %v2069 = vadd.f32 0.0, %v2068
        %v2070 = vpop.f32.mrb[0].mxu0
        %2071 = vmatprep.mubr.f32.mxu0 0.0
        %v2072 = vand.u32 %v1930, 4294901760
        %v2073 = vsub.f32 %v1930, %v2072
        %v2074 = vand.u32 %v2073, 4294901760
        %v2075 = vsub.f32 %v2073, %v2074
        %v2076 = vand.u32 %v2075, 4294901760
        %2077 = vmatmul.mubr.f32.gmra.mrb[0].mxu0 %v2076
        %v2078 = vpop.f32.mrb[0].mxu0
        %v2079 = vadd.f32 0.0, %v2078
        %v2080 = vpop.f32.mrb[0].mxu0
        %2081 = vmatprep.mubr.f32.mxu0 0.0
        %v2082 = vand.u32 %v1931, 4294901760
        %v2083 = vsub.f32 %v1931, %v2082
        %v2084 = vand.u32 %v2083, 4294901760
        %v2085 = vsub.f32 %v2083, %v2084
        %v2086 = vand.u32 %v2085, 4294901760
        %2087 = vmatmul.mubr.f32.gmra.mrb[0].mxu0 %v2086
        %v2088 = vpop.f32.mrb[0].mxu0
        %v2089 = vadd.f32 0.0, %v2088
        %v2090 = vpop.f32.mrb[0].mxu0
        %2091 = vmatprep.mubr.f32.mxu0 0.0
        %v2092 = vand.u32 %v1932, 4294901760
        %v2093 = vsub.f32 %v1932, %v2092
        %v2094 = vand.u32 %v2093, 4294901760
        %v2095 = vsub.f32 %v2093, %v2094
        %v2096 = vand.u32 %v2095, 4294901760
        %2097 = vmatmul.mubr.f32.gmra.mrb[0].mxu0 %v2096
        %v2098 = vpop.f32.mrb[0].mxu0
        %v2099 = vadd.f32 0.0, %v2098
        %v2100 = vpop.f32.mrb[0].mxu0
        %2101 = vdwg.mxu0
        %2102 = vmatprep.subr.mxu0 0.0
        %v2103 = vand.u32 %v1893, 4294901760
        %v2104 = vsub.f32 %v1893, %v2103
        %v2105 = vand.u32 %v2104, 4294901760
        %v2106 = vsub.f32 %v2104, %v2105
        %v2107 = vand.u32 %v2106, 4294901760
        %2108 = vmatpush1.msra.mxu0 %v2107
        %2109 = vmatprep.subr.mxu0 0.0
        %v2110 = vand.u32 %v1894, 4294901760
        %v2111 = vsub.f32 %v1894, %v2110
        %v2112 = vand.u32 %v2111, 4294901760
        %v2113 = vsub.f32 %v2111, %v2112
        %v2114 = vand.u32 %v2113, 4294901760
        %2115 = vmatpush1.msra.mxu0 %v2114
        %2116 = vmatprep.subr.mxu0 0.0
        %v2117 = vand.u32 %v1895, 4294901760
        %v2118 = vsub.f32 %v1895, %v2117
        %v2119 = vand.u32 %v2118, 4294901760
        %v2120 = vsub.f32 %v2118, %v2119
        %v2121 = vand.u32 %v2120, 4294901760
        %2122 = vmatpush1.msra.mxu0 %v2121
        %2123 = vmatprep.subr.mxu0 0.0
        %v2124 = vand.u32 %v1896, 4294901760
        %v2125 = vsub.f32 %v1896, %v2124
        %v2126 = vand.u32 %v2125, 4294901760
        %v2127 = vsub.f32 %v2125, %v2126
        %v2128 = vand.u32 %v2127, 4294901760
        %2129 = vmatpush1.msra.mxu0 %v2128
        %2130 = vmatprep.subr.mxu0 0.0
        %v2131 = vand.u32 %v1897, 4294901760
        %v2132 = vsub.f32 %v1897, %v2131
        %v2133 = vand.u32 %v2132, 4294901760
        %v2134 = vsub.f32 %v2132, %v2133
        %v2135 = vand.u32 %v2134, 4294901760
        %2136 = vmatpush1.msra.mxu0 %v2135
        %2137 = vmatprep.subr.mxu0 0.0
        %v2138 = vand.u32 %v1898, 4294901760
        %v2139 = vsub.f32 %v1898, %v2138
        %v2140 = vand.u32 %v2139, 4294901760
        %v2141 = vsub.f32 %v2139, %v2140
        %v2142 = vand.u32 %v2141, 4294901760
        %2143 = vmatpush1.msra.mxu0 %v2142
        %2144 = vmatprep.subr.mxu0 0.0
        %v2145 = vand.u32 %v1899, 4294901760
        %v2146 = vsub.f32 %v1899, %v2145
        %v2147 = vand.u32 %v2146, 4294901760
        %v2148 = vsub.f32 %v2146, %v2147
        %v2149 = vand.u32 %v2148, 4294901760
        %2150 = vmatpush1.msra.mxu0 %v2149
        %2151 = vmatprep.subr.mxu0 0.0
        %v2152 = vand.u32 %v1900, 4294901760
        %v2153 = vsub.f32 %v1900, %v2152
        %v2154 = vand.u32 %v2153, 4294901760
        %v2155 = vsub.f32 %v2153, %v2154
        %v2156 = vand.u32 %v2155, 4294901760
        %2157 = vmatpush1.msra.mxu0 %v2156
        %2158 = vmatprep.subr.mxu0 0.0
        %v2159 = vand.u32 %v1901, 4294901760
        %v2160 = vsub.f32 %v1901, %v2159
        %v2161 = vand.u32 %v2160, 4294901760
        %v2162 = vsub.f32 %v2160, %v2161
        %v2163 = vand.u32 %v2162, 4294901760
        %2164 = vmatpush1.msra.mxu0 %v2163
        %2165 = vmatprep.subr.mxu0 0.0
        %v2166 = vand.u32 %v1902, 4294901760
        %v2167 = vsub.f32 %v1902, %v2166
        %v2168 = vand.u32 %v2167, 4294901760
        %v2169 = vsub.f32 %v2167, %v2168
        %v2170 = vand.u32 %v2169, 4294901760
        %2171 = vmatpush1.msra.mxu0 %v2170
        %2172 = vmatprep.subr.mxu0 0.0
        %v2173 = vand.u32 %v1903, 4294901760
        %v2174 = vsub.f32 %v1903, %v2173
        %v2175 = vand.u32 %v2174, 4294901760
        %v2176 = vsub.f32 %v2174, %v2175
        %v2177 = vand.u32 %v2176, 4294901760
        %2178 = vmatpush1.msra.mxu0 %v2177
        %2179 = vmatprep.subr.mxu0 0.0
        %v2180 = vand.u32 %v1904, 4294901760
        %v2181 = vsub.f32 %v1904, %v2180
        %v2182 = vand.u32 %v2181, 4294901760
        %v2183 = vsub.f32 %v2181, %v2182
        %v2184 = vand.u32 %v2183, 4294901760
        %2185 = vmatpush1.msra.mxu0 %v2184
        %2186 = vmatprep.subr.mxu0 0.0
        %v2187 = vand.u32 %v1905, 4294901760
        %v2188 = vsub.f32 %v1905, %v2187
        %v2189 = vand.u32 %v2188, 4294901760
        %v2190 = vsub.f32 %v2188, %v2189
        %v2191 = vand.u32 %v2190, 4294901760
        %2192 = vmatpush1.msra.mxu0 %v2191
        %2193 = vmatprep.subr.mxu0 0.0
        %v2194 = vand.u32 %v1906, 4294901760
        %v2195 = vsub.f32 %v1906, %v2194
        %v2196 = vand.u32 %v2195, 4294901760
        %v2197 = vsub.f32 %v2195, %v2196
        %v2198 = vand.u32 %v2197, 4294901760
        %2199 = vmatpush1.msra.mxu0 %v2198
        %2200 = vmatprep.subr.mxu0 0.0
        %v2201 = vand.u32 %v1907, 4294901760
        %v2202 = vsub.f32 %v1907, %v2201
        %v2203 = vand.u32 %v2202, 4294901760
        %v2204 = vsub.f32 %v2202, %v2203
        %v2205 = vand.u32 %v2204, 4294901760
        %2206 = vmatpush1.msra.mxu0 %v2205
        %2207 = vmatprep.subr.mxu0 0.0
        %v2208 = vand.u32 %v1908, 4294901760
        %v2209 = vsub.f32 %v1908, %v2208
        %v2210 = vand.u32 %v2209, 4294901760
        %v2211 = vsub.f32 %v2209, %v2210
        %v2212 = vand.u32 %v2211, 4294901760
        %2213 = vmatpush1.msra.mxu0 %v2212
        %2214 = vmatprep.subr.mxu0 0.0
        %2215 = vmatpush1.msra.mxu0 0.0
        %2216 = vmatprep.subr.mxu0 0.0
        %2217 = vmatpush1.msra.mxu0 0.0
        %2218 = vmatprep.subr.mxu0 0.0
        %2219 = vmatpush1.msra.mxu0 0.0
        %2220 = vmatprep.subr.mxu0 0.0
        %2221 = vmatpush1.msra.mxu0 0.0
        %2222 = vmatprep.subr.mxu0 0.0
        %2223 = vmatpush1.msra.mxu0 0.0
        %2224 = vmatprep.subr.mxu0 0.0
        %2225 = vmatpush1.msra.mxu0 0.0
        %2226 = vmatprep.subr.mxu0 0.0
        %2227 = vmatpush1.msra.mxu0 0.0
        %2228 = vmatprep.subr.mxu0 0.0
        %2229 = vmatpush1.msra.mxu0 0.0
        %2230 = vmatprep.subr.mxu0 0.0
        %2231 = vmatpush1.msra.mxu0 0.0
        %2232 = vmatprep.subr.mxu0 0.0
        %2233 = vmatpush1.msra.mxu0 0.0
        %2234 = vmatprep.subr.mxu0 0.0
        %2235 = vmatpush1.msra.mxu0 0.0
        %2236 = vmatprep.subr.mxu0 0.0
        %2237 = vmatpush1.msra.mxu0 0.0
        %2238 = vmatprep.subr.mxu0 0.0
        %2239 = vmatpush1.msra.mxu0 0.0
        %2240 = vmatprep.subr.mxu0 0.0
        %2241 = vmatpush1.msra.mxu0 0.0
        %2242 = vmatprep.subr.mxu0 0.0
        %2243 = vmatpush1.msra.mxu0 0.0
        %2244 = vmatprep.subr.mxu0 0.0
        %2245 = vmatpush1.msra.mxu0 0.0
        %2246 = vmatprep.mubr.f32.mxu0 0.0
        %v2247 = vand.u32 %v1925, 4294901760
        %2248 = vmatmul.mubr.f32.gmra.mrb[0].mxu0 %v2247
        %v2249 = vpop.f32.mrb[0].mxu0
        %v2250 = vadd.f32 %v2029, %v2249
        %v2251 = vpop.f32.mrb[0].mxu0
        %2252 = vmatprep.mubr.f32.mxu0 0.0
        %v2253 = vand.u32 %v1926, 4294901760
        %2254 = vmatmul.mubr.f32.gmra.mrb[0].mxu0 %v2253
        %v2255 = vpop.f32.mrb[0].mxu0
        %v2256 = vadd.f32 %v2039, %v2255
        %v2257 = vpop.f32.mrb[0].mxu0
        %2258 = vmatprep.mubr.f32.mxu0 0.0
        %v2259 = vand.u32 %v1927, 4294901760
        %2260 = vmatmul.mubr.f32.gmra.mrb[0].mxu0 %v2259
        %v2261 = vpop.f32.mrb[0].mxu0
        %v2262 = vadd.f32 %v2049, %v2261
        %v2263 = vpop.f32.mrb[0].mxu0
        %2264 = vmatprep.mubr.f32.mxu0 0.0
        %v2265 = vand.u32 %v1928, 4294901760
        %2266 = vmatmul.mubr.f32.gmra.mrb[0].mxu0 %v2265
        %v2267 = vpop.f32.mrb[0].mxu0
        %v2268 = vadd.f32 %v2059, %v2267
        %v2269 = vpop.f32.mrb[0].mxu0
        %2270 = vmatprep.mubr.f32.mxu0 0.0
        %v2271 = vand.u32 %v1929, 4294901760
        %2272 = vmatmul.mubr.f32.gmra.mrb[0].mxu0 %v2271
        %v2273 = vpop.f32.mrb[0].mxu0
        %v2274 = vadd.f32 %v2069, %v2273
        %v2275 = vpop.f32.mrb[0].mxu0
        %2276 = vmatprep.mubr.f32.mxu0 0.0
        %v2277 = vand.u32 %v1930, 4294901760
        %2278 = vmatmul.mubr.f32.gmra.mrb[0].mxu0 %v2277
        %v2279 = vpop.f32.mrb[0].mxu0
        %v2280 = vadd.f32 %v2079, %v2279
        %v2281 = vpop.f32.mrb[0].mxu0
        %2282 = vmatprep.mubr.f32.mxu0 0.0
        %v2283 = vand.u32 %v1931, 4294901760
        %2284 = vmatmul.mubr.f32.gmra.mrb[0].mxu0 %v2283
        %v2285 = vpop.f32.mrb[0].mxu0
        %v2286 = vadd.f32 %v2089, %v2285
        %v2287 = vpop.f32.mrb[0].mxu0
        %2288 = vmatprep.mubr.f32.mxu0 0.0
        %v2289 = vand.u32 %v1932, 4294901760
        %2290 = vmatmul.mubr.f32.gmra.mrb[0].mxu0 %v2289
        %v2291 = vpop.f32.mrb[0].mxu0
        %v2292 = vadd.f32 %v2099, %v2291
        %v2293 = vpop.f32.mrb[0].mxu0
        %2294 = vdwg.mxu0
        %2295 = vmatprep.subr.mxu0 0.0
        %v2296 = vand.u32 %v1893, 4294901760
        %v2297 = vsub.f32 %v1893, %v2296
        %2298 = vmatpush1.msra.mxu0 %v2297
        %2299 = vmatprep.subr.mxu0 0.0
        %v2300 = vand.u32 %v1894, 4294901760
        %v2301 = vsub.f32 %v1894, %v2300
        %2302 = vmatpush1.msra.mxu0 %v2301
        %2303 = vmatprep.subr.mxu0 0.0
        %v2304 = vand.u32 %v1895, 4294901760
        %v2305 = vsub.f32 %v1895, %v2304
        %2306 = vmatpush1.msra.mxu0 %v2305
        %2307 = vmatprep.subr.mxu0 0.0
        %v2308 = vand.u32 %v1896, 4294901760
        %v2309 = vsub.f32 %v1896, %v2308
        %2310 = vmatpush1.msra.mxu0 %v2309
        %2311 = vmatprep.subr.mxu0 0.0
        %v2312 = vand.u32 %v1897, 4294901760
        %v2313 = vsub.f32 %v1897, %v2312
        %2314 = vmatpush1.msra.mxu0 %v2313
        %2315 = vmatprep.subr.mxu0 0.0
        %v2316 = vand.u32 %v1898, 4294901760
        %v2317 = vsub.f32 %v1898, %v2316
        %2318 = vmatpush1.msra.mxu0 %v2317
        %2319 = vmatprep.subr.mxu0 0.0
        %v2320 = vand.u32 %v1899, 4294901760
        %v2321 = vsub.f32 %v1899, %v2320
        %2322 = vmatpush1.msra.mxu0 %v2321
        %2323 = vmatprep.subr.mxu0 0.0
        %v2324 = vand.u32 %v1900, 4294901760
        %v2325 = vsub.f32 %v1900, %v2324
        %2326 = vmatpush1.msra.mxu0 %v2325
        %2327 = vmatprep.subr.mxu0 0.0
        %v2328 = vand.u32 %v1901, 4294901760
        %v2329 = vsub.f32 %v1901, %v2328
        %2330 = vmatpush1.msra.mxu0 %v2329
        %2331 = vmatprep.subr.mxu0 0.0
        %v2332 = vand.u32 %v1902, 4294901760
        %v2333 = vsub.f32 %v1902, %v2332
        %2334 = vmatpush1.msra.mxu0 %v2333
        %2335 = vmatprep.subr.mxu0 0.0
        %v2336 = vand.u32 %v1903, 4294901760
        %v2337 = vsub.f32 %v1903, %v2336
        %2338 = vmatpush1.msra.mxu0 %v2337
        %2339 = vmatprep.subr.mxu0 0.0
        %v2340 = vand.u32 %v1904, 4294901760
        %v2341 = vsub.f32 %v1904, %v2340
        %2342 = vmatpush1.msra.mxu0 %v2341
        %2343 = vmatprep.subr.mxu0 0.0
        %v2344 = vand.u32 %v1905, 4294901760
        %v2345 = vsub.f32 %v1905, %v2344
        %2346 = vmatpush1.msra.mxu0 %v2345
        %2347 = vmatprep.subr.mxu0 0.0
        %v2348 = vand.u32 %v1906, 4294901760
        %v2349 = vsub.f32 %v1906, %v2348
        %2350 = vmatpush1.msra.mxu0 %v2349
        %2351 = vmatprep.subr.mxu0 0.0
        %v2352 = vand.u32 %v1907, 4294901760
        %v2353 = vsub.f32 %v1907, %v2352
        %2354 = vmatpush1.msra.mxu0 %v2353
        %2355 = vmatprep.subr.mxu0 0.0
        %v2356 = vand.u32 %v1908, 4294901760
        %v2357 = vsub.f32 %v1908, %v2356
        %2358 = vmatpush1.msra.mxu0 %v2357
        %2359 = vmatprep.subr.mxu0 0.0
        %2360 = vmatpush1.msra.mxu0 0.0
        %2361 = vmatprep.subr.mxu0 0.0
        %2362 = vmatpush1.msra.mxu0 0.0
        %2363 = vmatprep.subr.mxu0 0.0
        %2364 = vmatpush1.msra.mxu0 0.0
        %2365 = vmatprep.subr.mxu0 0.0
        %2366 = vmatpush1.msra.mxu0 0.0
        %2367 = vmatprep.subr.mxu0 0.0
        %2368 = vmatpush1.msra.mxu0 0.0
        %2369 = vmatprep.subr.mxu0 0.0
        %2370 = vmatpush1.msra.mxu0 0.0
        %2371 = vmatprep.subr.mxu0 0.0
        %2372 = vmatpush1.msra.mxu0 0.0
        %2373 = vmatprep.subr.mxu0 0.0
        %2374 = vmatpush1.msra.mxu0 0.0
        %2375 = vmatprep.subr.mxu0 0.0
        %2376 = vmatpush1.msra.mxu0 0.0
        %2377 = vmatprep.subr.mxu0 0.0
        %2378 = vmatpush1.msra.mxu0 0.0
        %2379 = vmatprep.subr.mxu0 0.0
        %2380 = vmatpush1.msra.mxu0 0.0
        %2381 = vmatprep.subr.mxu0 0.0
        %2382 = vmatpush1.msra.mxu0 0.0
        %2383 = vmatprep.subr.mxu0 0.0
        %2384 = vmatpush1.msra.mxu0 0.0
        %2385 = vmatprep.subr.mxu0 0.0
        %2386 = vmatpush1.msra.mxu0 0.0
        %2387 = vmatprep.subr.mxu0 0.0
        %2388 = vmatpush1.msra.mxu0 0.0
        %2389 = vmatprep.subr.mxu0 0.0
        %2390 = vmatpush1.msra.mxu0 0.0
        %2391 = vmatprep.mubr.f32.mxu0 0.0
        %v2392 = vand.u32 %v1925, 4294901760
        %v2393 = vsub.f32 %v1925, %v2392
        %2394 = vmatmul.mubr.f32.gmra.mrb[0].mxu0 %v2393
        %v2395 = vpop.f32.mrb[0].mxu0
        %v2396 = vadd.f32 %v2250, %v2395
        %v2397 = vpop.f32.mrb[0].mxu0
        %2398 = vmatprep.mubr.f32.mxu0 0.0
        %v2399 = vand.u32 %v1926, 4294901760
        %v2400 = vsub.f32 %v1926, %v2399
        %2401 = vmatmul.mubr.f32.gmra.mrb[0].mxu0 %v2400
        %v2402 = vpop.f32.mrb[0].mxu0
        %v2403 = vadd.f32 %v2256, %v2402
        %v2404 = vpop.f32.mrb[0].mxu0
        %2405 = vmatprep.mubr.f32.mxu0 0.0
        %v2406 = vand.u32 %v1927, 4294901760
        %v2407 = vsub.f32 %v1927, %v2406
        %2408 = vmatmul.mubr.f32.gmra.mrb[0].mxu0 %v2407
        %v2409 = vpop.f32.mrb[0].mxu0
        %v2410 = vadd.f32 %v2262, %v2409
        %v2411 = vpop.f32.mrb[0].mxu0
        %2412 = vmatprep.mubr.f32.mxu0 0.0
        %v2413 = vand.u32 %v1928, 4294901760
        %v2414 = vsub.f32 %v1928, %v2413
        %2415 = vmatmul.mubr.f32.gmra.mrb[0].mxu0 %v2414
        %v2416 = vpop.f32.mrb[0].mxu0
        %v2417 = vadd.f32 %v2268, %v2416
        %v2418 = vpop.f32.mrb[0].mxu0
        %2419 = vmatprep.mubr.f32.mxu0 0.0
        %v2420 = vand.u32 %v1929, 4294901760
        %v2421 = vsub.f32 %v1929, %v2420
        %2422 = vmatmul.mubr.f32.gmra.mrb[0].mxu0 %v2421
        %v2423 = vpop.f32.mrb[0].mxu0
        %v2424 = vadd.f32 %v2274, %v2423
        %v2425 = vpop.f32.mrb[0].mxu0
        %2426 = vmatprep.mubr.f32.mxu0 0.0
        %v2427 = vand.u32 %v1930, 4294901760
        %v2428 = vsub.f32 %v1930, %v2427
        %2429 = vmatmul.mubr.f32.gmra.mrb[0].mxu0 %v2428
        %v2430 = vpop.f32.mrb[0].mxu0
        %v2431 = vadd.f32 %v2280, %v2430
        %v2432 = vpop.f32.mrb[0].mxu0
        %2433 = vmatprep.mubr.f32.mxu0 0.0
        %v2434 = vand.u32 %v1931, 4294901760
        %v2435 = vsub.f32 %v1931, %v2434
        %2436 = vmatmul.mubr.f32.gmra.mrb[0].mxu0 %v2435
        %v2437 = vpop.f32.mrb[0].mxu0
        %v2438 = vadd.f32 %v2286, %v2437
        %v2439 = vpop.f32.mrb[0].mxu0
        %2440 = vmatprep.mubr.f32.mxu0 0.0
        %v2441 = vand.u32 %v1932, 4294901760
        %v2442 = vsub.f32 %v1932, %v2441
        %2443 = vmatmul.mubr.f32.gmra.mrb[0].mxu0 %v2442
        %v2444 = vpop.f32.mrb[0].mxu0
        %v2445 = vadd.f32 %v2292, %v2444
        %v2446 = vpop.f32.mrb[0].mxu0
        %2447 = vdwg.mxu0
        %2448 = vmatprep.subr.mxu0 0.0
        %v2449 = vand.u32 %v1893, 4294901760
        %2450 = vmatpush1.msra.mxu0 %v2449
        %2451 = vmatprep.subr.mxu0 0.0
        %v2452 = vand.u32 %v1894, 4294901760
        %2453 = vmatpush1.msra.mxu0 %v2452
        %2454 = vmatprep.subr.mxu0 0.0
        %v2455 = vand.u32 %v1895, 4294901760
        %2456 = vmatpush1.msra.mxu0 %v2455
        %2457 = vmatprep.subr.mxu0 0.0
        %v2458 = vand.u32 %v1896, 4294901760
        %2459 = vmatpush1.msra.mxu0 %v2458
        %2460 = vmatprep.subr.mxu0 0.0
        %v2461 = vand.u32 %v1897, 4294901760
        %2462 = vmatpush1.msra.mxu0 %v2461
        %2463 = vmatprep.subr.mxu0 0.0
        %v2464 = vand.u32 %v1898, 4294901760
        %2465 = vmatpush1.msra.mxu0 %v2464
        %2466 = vmatprep.subr.mxu0 0.0
        %v2467 = vand.u32 %v1899, 4294901760
        %2468 = vmatpush1.msra.mxu0 %v2467
        %2469 = vmatprep.subr.mxu0 0.0
        %v2470 = vand.u32 %v1900, 4294901760
        %2471 = vmatpush1.msra.mxu0 %v2470
        %2472 = vmatprep.subr.mxu0 0.0
        %v2473 = vand.u32 %v1901, 4294901760
        %2474 = vmatpush1.msra.mxu0 %v2473
        %2475 = vmatprep.subr.mxu0 0.0
        %v2476 = vand.u32 %v1902, 4294901760
        %2477 = vmatpush1.msra.mxu0 %v2476
        %2478 = vmatprep.subr.mxu0 0.0
        %v2479 = vand.u32 %v1903, 4294901760
        %2480 = vmatpush1.msra.mxu0 %v2479
        %2481 = vmatprep.subr.mxu0 0.0
        %v2482 = vand.u32 %v1904, 4294901760
        %2483 = vmatpush1.msra.mxu0 %v2482
        %2484 = vmatprep.subr.mxu0 0.0
        %v2485 = vand.u32 %v1905, 4294901760
        %2486 = vmatpush1.msra.mxu0 %v2485
        %2487 = vmatprep.subr.mxu0 0.0
        %v2488 = vand.u32 %v1906, 4294901760
        %2489 = vmatpush1.msra.mxu0 %v2488
        %2490 = vmatprep.subr.mxu0 0.0
        %v2491 = vand.u32 %v1907, 4294901760
        %2492 = vmatpush1.msra.mxu0 %v2491
        %2493 = vmatprep.subr.mxu0 0.0
        %v2494 = vand.u32 %v1908, 4294901760
        %2495 = vmatpush1.msra.mxu0 %v2494
        %2496 = vmatprep.subr.mxu0 0.0
        %2497 = vmatpush1.msra.mxu0 0.0
        %2498 = vmatprep.subr.mxu0 0.0
        %2499 = vmatpush1.msra.mxu0 0.0
        %2500 = vmatprep.subr.mxu0 0.0
        %2501 = vmatpush1.msra.mxu0 0.0
        %2502 = vmatprep.subr.mxu0 0.0
        %2503 = vmatpush1.msra.mxu0 0.0
        %2504 = vmatprep.subr.mxu0 0.0
        %2505 = vmatpush1.msra.mxu0 0.0
        %2506 = vmatprep.subr.mxu0 0.0
        %2507 = vmatpush1.msra.mxu0 0.0
        %2508 = vmatprep.subr.mxu0 0.0
        %2509 = vmatpush1.msra.mxu0 0.0
        %2510 = vmatprep.subr.mxu0 0.0
        %2511 = vmatpush1.msra.mxu0 0.0
        %2512 = vmatprep.subr.mxu0 0.0
        %2513 = vmatpush1.msra.mxu0 0.0
        %2514 = vmatprep.subr.mxu0 0.0
        %2515 = vmatpush1.msra.mxu0 0.0
        %2516 = vmatprep.subr.mxu0 0.0
        %2517 = vmatpush1.msra.mxu0 0.0
        %2518 = vmatprep.subr.mxu0 0.0
        %2519 = vmatpush1.msra.mxu0 0.0
        %2520 = vmatprep.subr.mxu0 0.0
        %2521 = vmatpush1.msra.mxu0 0.0
        %2522 = vmatprep.subr.mxu0 0.0
        %2523 = vmatpush1.msra.mxu0 0.0
        %2524 = vmatprep.subr.mxu0 0.0
        %2525 = vmatpush1.msra.mxu0 0.0
        %2526 = vmatprep.subr.mxu0 0.0
        %2527 = vmatpush1.msra.mxu0 0.0
        %2528 = vmatprep.mubr.f32.mxu0 0.0
        %v2529 = vand.u32 %v1925, 4294901760
        %v2530 = vsub.f32 %v1925, %v2529
        %v2531 = vand.u32 %v2530, 4294901760
        %2532 = vmatmul.mubr.f32.gmra.mrb[0].mxu0 %v2531
        %v2533 = vpop.f32.mrb[0].mxu0
        %v2534 = vadd.f32 %v2396, %v2533
        %v2535 = vpop.f32.mrb[0].mxu0
        %2536 = vmatprep.mubr.f32.mxu0 0.0
        %v2537 = vand.u32 %v1926, 4294901760
        %v2538 = vsub.f32 %v1926, %v2537
        %v2539 = vand.u32 %v2538, 4294901760
        %2540 = vmatmul.mubr.f32.gmra.mrb[0].mxu0 %v2539
        %v2541 = vpop.f32.mrb[0].mxu0
        %v2542 = vadd.f32 %v2403, %v2541
        %v2543 = vpop.f32.mrb[0].mxu0
        %2544 = vmatprep.mubr.f32.mxu0 0.0
        %v2545 = vand.u32 %v1927, 4294901760
        %v2546 = vsub.f32 %v1927, %v2545
        %v2547 = vand.u32 %v2546, 4294901760
        %2548 = vmatmul.mubr.f32.gmra.mrb[0].mxu0 %v2547
        %v2549 = vpop.f32.mrb[0].mxu0
        %v2550 = vadd.f32 %v2410, %v2549
        %v2551 = vpop.f32.mrb[0].mxu0
        %2552 = vmatprep.mubr.f32.mxu0 0.0
        %v2553 = vand.u32 %v1928, 4294901760
        %v2554 = vsub.f32 %v1928, %v2553
        %v2555 = vand.u32 %v2554, 4294901760
        %2556 = vmatmul.mubr.f32.gmra.mrb[0].mxu0 %v2555
        %v2557 = vpop.f32.mrb[0].mxu0
        %v2558 = vadd.f32 %v2417, %v2557
        %v2559 = vpop.f32.mrb[0].mxu0
        %2560 = vmatprep.mubr.f32.mxu0 0.0
        %v2561 = vand.u32 %v1929, 4294901760
        %v2562 = vsub.f32 %v1929, %v2561
        %v2563 = vand.u32 %v2562, 4294901760
        %2564 = vmatmul.mubr.f32.gmra.mrb[0].mxu0 %v2563
        %v2565 = vpop.f32.mrb[0].mxu0
        %v2566 = vadd.f32 %v2424, %v2565
        %v2567 = vpop.f32.mrb[0].mxu0
        %2568 = vmatprep.mubr.f32.mxu0 0.0
        %v2569 = vand.u32 %v1930, 4294901760
        %v2570 = vsub.f32 %v1930, %v2569
        %v2571 = vand.u32 %v2570, 4294901760
        %2572 = vmatmul.mubr.f32.gmra.mrb[0].mxu0 %v2571
        %v2573 = vpop.f32.mrb[0].mxu0
        %v2574 = vadd.f32 %v2431, %v2573
        %v2575 = vpop.f32.mrb[0].mxu0
        %2576 = vmatprep.mubr.f32.mxu0 0.0
        %v2577 = vand.u32 %v1931, 4294901760
        %v2578 = vsub.f32 %v1931, %v2577
        %v2579 = vand.u32 %v2578, 4294901760
        %2580 = vmatmul.mubr.f32.gmra.mrb[0].mxu0 %v2579
        %v2581 = vpop.f32.mrb[0].mxu0
        %v2582 = vadd.f32 %v2438, %v2581
        %v2583 = vpop.f32.mrb[0].mxu0
        %2584 = vmatprep.mubr.f32.mxu0 0.0
        %v2585 = vand.u32 %v1932, 4294901760
        %v2586 = vsub.f32 %v1932, %v2585
        %v2587 = vand.u32 %v2586, 4294901760
        %2588 = vmatmul.mubr.f32.gmra.mrb[0].mxu0 %v2587
        %v2589 = vpop.f32.mrb[0].mxu0
        %v2590 = vadd.f32 %v2445, %v2589
        %v2591 = vpop.f32.mrb[0].mxu0
        %2592 = vdwg.mxu0
        %2593 = vmatprep.subr.mxu0 0.0
        %v2594 = vand.u32 %v1893, 4294901760
        %v2595 = vsub.f32 %v1893, %v2594
        %v2596 = vand.u32 %v2595, 4294901760
        %2597 = vmatpush1.msra.mxu0 %v2596
        %2598 = vmatprep.subr.mxu0 0.0
        %v2599 = vand.u32 %v1894, 4294901760
        %v2600 = vsub.f32 %v1894, %v2599
        %v2601 = vand.u32 %v2600, 4294901760
        %2602 = vmatpush1.msra.mxu0 %v2601
        %2603 = vmatprep.subr.mxu0 0.0
        %v2604 = vand.u32 %v1895, 4294901760
        %v2605 = vsub.f32 %v1895, %v2604
        %v2606 = vand.u32 %v2605, 4294901760
        %2607 = vmatpush1.msra.mxu0 %v2606
        %2608 = vmatprep.subr.mxu0 0.0
        %v2609 = vand.u32 %v1896, 4294901760
        %v2610 = vsub.f32 %v1896, %v2609
        %v2611 = vand.u32 %v2610, 4294901760
        %2612 = vmatpush1.msra.mxu0 %v2611
        %2613 = vmatprep.subr.mxu0 0.0
        %v2614 = vand.u32 %v1897, 4294901760
        %v2615 = vsub.f32 %v1897, %v2614
        %v2616 = vand.u32 %v2615, 4294901760
        %2617 = vmatpush1.msra.mxu0 %v2616
        %2618 = vmatprep.subr.mxu0 0.0
        %v2619 = vand.u32 %v1898, 4294901760
        %v2620 = vsub.f32 %v1898, %v2619
        %v2621 = vand.u32 %v2620, 4294901760
        %2622 = vmatpush1.msra.mxu0 %v2621
        %2623 = vmatprep.subr.mxu0 0.0
        %v2624 = vand.u32 %v1899, 4294901760
        %v2625 = vsub.f32 %v1899, %v2624
        %v2626 = vand.u32 %v2625, 4294901760
        %2627 = vmatpush1.msra.mxu0 %v2626
        %2628 = vmatprep.subr.mxu0 0.0
        %v2629 = vand.u32 %v1900, 4294901760
        %v2630 = vsub.f32 %v1900, %v2629
        %v2631 = vand.u32 %v2630, 4294901760
        %2632 = vmatpush1.msra.mxu0 %v2631
        %2633 = vmatprep.subr.mxu0 0.0
        %v2634 = vand.u32 %v1901, 4294901760
        %v2635 = vsub.f32 %v1901, %v2634
        %v2636 = vand.u32 %v2635, 4294901760
        %2637 = vmatpush1.msra.mxu0 %v2636
        %2638 = vmatprep.subr.mxu0 0.0
        %v2639 = vand.u32 %v1902, 4294901760
        %v2640 = vsub.f32 %v1902, %v2639
        %v2641 = vand.u32 %v2640, 4294901760
        %2642 = vmatpush1.msra.mxu0 %v2641
        %2643 = vmatprep.subr.mxu0 0.0
        %v2644 = vand.u32 %v1903, 4294901760
        %v2645 = vsub.f32 %v1903, %v2644
        %v2646 = vand.u32 %v2645, 4294901760
        %2647 = vmatpush1.msra.mxu0 %v2646
        %2648 = vmatprep.subr.mxu0 0.0
        %v2649 = vand.u32 %v1904, 4294901760
        %v2650 = vsub.f32 %v1904, %v2649
        %v2651 = vand.u32 %v2650, 4294901760
        %2652 = vmatpush1.msra.mxu0 %v2651
        %2653 = vmatprep.subr.mxu0 0.0
        %v2654 = vand.u32 %v1905, 4294901760
        %v2655 = vsub.f32 %v1905, %v2654
        %v2656 = vand.u32 %v2655, 4294901760
        %2657 = vmatpush1.msra.mxu0 %v2656
        %2658 = vmatprep.subr.mxu0 0.0
        %v2659 = vand.u32 %v1906, 4294901760
        %v2660 = vsub.f32 %v1906, %v2659
        %v2661 = vand.u32 %v2660, 4294901760
        %2662 = vmatpush1.msra.mxu0 %v2661
        %2663 = vmatprep.subr.mxu0 0.0
        %v2664 = vand.u32 %v1907, 4294901760
        %v2665 = vsub.f32 %v1907, %v2664
        %v2666 = vand.u32 %v2665, 4294901760
        %2667 = vmatpush1.msra.mxu0 %v2666
        %2668 = vmatprep.subr.mxu0 0.0
        %v2669 = vand.u32 %v1908, 4294901760
        %v2670 = vsub.f32 %v1908, %v2669
        %v2671 = vand.u32 %v2670, 4294901760
        %2672 = vmatpush1.msra.mxu0 %v2671
        %2673 = vmatprep.subr.mxu0 0.0
        %2674 = vmatpush1.msra.mxu0 0.0
        %2675 = vmatprep.subr.mxu0 0.0
        %2676 = vmatpush1.msra.mxu0 0.0
        %2677 = vmatprep.subr.mxu0 0.0
        %2678 = vmatpush1.msra.mxu0 0.0
        %2679 = vmatprep.subr.mxu0 0.0
        %2680 = vmatpush1.msra.mxu0 0.0
        %2681 = vmatprep.subr.mxu0 0.0
        %2682 = vmatpush1.msra.mxu0 0.0
        %2683 = vmatprep.subr.mxu0 0.0
        %2684 = vmatpush1.msra.mxu0 0.0
        %2685 = vmatprep.subr.mxu0 0.0
        %2686 = vmatpush1.msra.mxu0 0.0
        %2687 = vmatprep.subr.mxu0 0.0
        %2688 = vmatpush1.msra.mxu0 0.0
        %2689 = vmatprep.subr.mxu0 0.0
        %2690 = vmatpush1.msra.mxu0 0.0
        %2691 = vmatprep.subr.mxu0 0.0
        %2692 = vmatpush1.msra.mxu0 0.0
        %2693 = vmatprep.subr.mxu0 0.0
        %2694 = vmatpush1.msra.mxu0 0.0
        %2695 = vmatprep.subr.mxu0 0.0
        %2696 = vmatpush1.msra.mxu0 0.0
        %2697 = vmatprep.subr.mxu0 0.0
        %2698 = vmatpush1.msra.mxu0 0.0
        %2699 = vmatprep.subr.mxu0 0.0
        %2700 = vmatpush1.msra.mxu0 0.0
        %2701 = vmatprep.subr.mxu0 0.0
        %2702 = vmatpush1.msra.mxu0 0.0
        %2703 = vmatprep.subr.mxu0 0.0
        %2704 = vmatpush1.msra.mxu0 0.0
        %2705 = vmatprep.mubr.f32.mxu0 0.0
        %v2706 = vand.u32 %v1925, 4294901760
        %2707 = vmatmul.mubr.f32.gmra.mrb[0].mxu0 %v2706
        %v2708 = vpop.f32.mrb[0].mxu0
        %v2709 = vadd.f32 %v2534, %v2708
        %v2710 = vpop.f32.mrb[0].mxu0
        %2711 = vmatprep.mubr.f32.mxu0 0.0
        %v2712 = vand.u32 %v1926, 4294901760
        %2713 = vmatmul.mubr.f32.gmra.mrb[0].mxu0 %v2712
        %v2714 = vpop.f32.mrb[0].mxu0
        %v2715 = vadd.f32 %v2542, %v2714
        %v2716 = vpop.f32.mrb[0].mxu0
        %2717 = vmatprep.mubr.f32.mxu0 0.0
        %v2718 = vand.u32 %v1927, 4294901760
        %2719 = vmatmul.mubr.f32.gmra.mrb[0].mxu0 %v2718
        %v2720 = vpop.f32.mrb[0].mxu0
        %v2721 = vadd.f32 %v2550, %v2720
        %v2722 = vpop.f32.mrb[0].mxu0
        %2723 = vmatprep.mubr.f32.mxu0 0.0
        %v2724 = vand.u32 %v1928, 4294901760
        %2725 = vmatmul.mubr.f32.gmra.mrb[0].mxu0 %v2724
        %v2726 = vpop.f32.mrb[0].mxu0
        %v2727 = vadd.f32 %v2558, %v2726
        %v2728 = vpop.f32.mrb[0].mxu0
        %2729 = vmatprep.mubr.f32.mxu0 0.0
        %v2730 = vand.u32 %v1929, 4294901760
        %2731 = vmatmul.mubr.f32.gmra.mrb[0].mxu0 %v2730
        %v2732 = vpop.f32.mrb[0].mxu0
        %v2733 = vadd.f32 %v2566, %v2732
        %v2734 = vpop.f32.mrb[0].mxu0
        %2735 = vmatprep.mubr.f32.mxu0 0.0
        %v2736 = vand.u32 %v1930, 4294901760
        %2737 = vmatmul.mubr.f32.gmra.mrb[0].mxu0 %v2736
        %v2738 = vpop.f32.mrb[0].mxu0
        %v2739 = vadd.f32 %v2574, %v2738
        %v2740 = vpop.f32.mrb[0].mxu0
        %2741 = vmatprep.mubr.f32.mxu0 0.0
        %v2742 = vand.u32 %v1931, 4294901760
        %2743 = vmatmul.mubr.f32.gmra.mrb[0].mxu0 %v2742
        %v2744 = vpop.f32.mrb[0].mxu0
        %v2745 = vadd.f32 %v2582, %v2744
        %v2746 = vpop.f32.mrb[0].mxu0
        %2747 = vmatprep.mubr.f32.mxu0 0.0
        %v2748 = vand.u32 %v1932, 4294901760
        %2749 = vmatmul.mubr.f32.gmra.mrb[0].mxu0 %v2748
        %v2750 = vpop.f32.mrb[0].mxu0
        %v2751 = vadd.f32 %v2590, %v2750
        %v2752 = vpop.f32.mrb[0].mxu0
        %2753 = vdwg.mxu0
        %2754 = vmatprep.subr.mxu0 0.0
        %v2755 = vand.u32 %v1893, 4294901760
        %2756 = vmatpush1.msra.mxu0 %v2755
        %2757 = vmatprep.subr.mxu0 0.0
        %v2758 = vand.u32 %v1894, 4294901760
        %2759 = vmatpush1.msra.mxu0 %v2758
        %2760 = vmatprep.subr.mxu0 0.0
        %v2761 = vand.u32 %v1895, 4294901760
        %2762 = vmatpush1.msra.mxu0 %v2761
        %2763 = vmatprep.subr.mxu0 0.0
        %v2764 = vand.u32 %v1896, 4294901760
        %2765 = vmatpush1.msra.mxu0 %v2764
        %2766 = vmatprep.subr.mxu0 0.0
        %v2767 = vand.u32 %v1897, 4294901760
        %2768 = vmatpush1.msra.mxu0 %v2767
        %2769 = vmatprep.subr.mxu0 0.0
        %v2770 = vand.u32 %v1898, 4294901760
        %2771 = vmatpush1.msra.mxu0 %v2770
        %2772 = vmatprep.subr.mxu0 0.0
        %v2773 = vand.u32 %v1899, 4294901760
        %2774 = vmatpush1.msra.mxu0 %v2773
        %2775 = vmatprep.subr.mxu0 0.0
        %v2776 = vand.u32 %v1900, 4294901760
        %2777 = vmatpush1.msra.mxu0 %v2776
        %2778 = vmatprep.subr.mxu0 0.0
        %v2779 = vand.u32 %v1901, 4294901760
        %2780 = vmatpush1.msra.mxu0 %v2779
        %2781 = vmatprep.subr.mxu0 0.0
        %v2782 = vand.u32 %v1902, 4294901760
        %2783 = vmatpush1.msra.mxu0 %v2782
        %2784 = vmatprep.subr.mxu0 0.0
        %v2785 = vand.u32 %v1903, 4294901760
        %2786 = vmatpush1.msra.mxu0 %v2785
        %2787 = vmatprep.subr.mxu0 0.0
        %v2788 = vand.u32 %v1904, 4294901760
        %2789 = vmatpush1.msra.mxu0 %v2788
        %2790 = vmatprep.subr.mxu0 0.0
        %v2791 = vand.u32 %v1905, 4294901760
        %2792 = vmatpush1.msra.mxu0 %v2791
        %2793 = vmatprep.subr.mxu0 0.0
        %v2794 = vand.u32 %v1906, 4294901760
        %2795 = vmatpush1.msra.mxu0 %v2794
        %2796 = vmatprep.subr.mxu0 0.0
        %v2797 = vand.u32 %v1907, 4294901760
        %2798 = vmatpush1.msra.mxu0 %v2797
        %2799 = vmatprep.subr.mxu0 0.0
        %v2800 = vand.u32 %v1908, 4294901760
        %2801 = vmatpush1.msra.mxu0 %v2800
        %2802 = vmatprep.subr.mxu0 0.0
        %2803 = vmatpush1.msra.mxu0 0.0
        %2804 = vmatprep.subr.mxu0 0.0
        %2805 = vmatpush1.msra.mxu0 0.0
        %2806 = vmatprep.subr.mxu0 0.0
        %2807 = vmatpush1.msra.mxu0 0.0
        %2808 = vmatprep.subr.mxu0 0.0
        %2809 = vmatpush1.msra.mxu0 0.0
        %2810 = vmatprep.subr.mxu0 0.0
        %2811 = vmatpush1.msra.mxu0 0.0
        %2812 = vmatprep.subr.mxu0 0.0
        %2813 = vmatpush1.msra.mxu0 0.0
        %2814 = vmatprep.subr.mxu0 0.0
        %2815 = vmatpush1.msra.mxu0 0.0
        %2816 = vmatprep.subr.mxu0 0.0
        %2817 = vmatpush1.msra.mxu0 0.0
        %2818 = vmatprep.subr.mxu0 0.0
        %2819 = vmatpush1.msra.mxu0 0.0
        %2820 = vmatprep.subr.mxu0 0.0
        %2821 = vmatpush1.msra.mxu0 0.0
        %2822 = vmatprep.subr.mxu0 0.0
        %2823 = vmatpush1.msra.mxu0 0.0
        %2824 = vmatprep.subr.mxu0 0.0
        %2825 = vmatpush1.msra.mxu0 0.0
        %2826 = vmatprep.subr.mxu0 0.0
        %2827 = vmatpush1.msra.mxu0 0.0
        %2828 = vmatprep.subr.mxu0 0.0
        %2829 = vmatpush1.msra.mxu0 0.0
        %2830 = vmatprep.subr.mxu0 0.0
        %2831 = vmatpush1.msra.mxu0 0.0
        %2832 = vmatprep.subr.mxu0 0.0
        %2833 = vmatpush1.msra.mxu0 0.0
        %2834 = vmatprep.mubr.f32.mxu0 0.0
        %v2835 = vand.u32 %v1925, 4294901760
        %2836 = vmatmul.mubr.f32.gmra.mrb[0].mxu0 %v2835
        %v2837 = vpop.f32.mrb[0].mxu0
        %v2838 = vadd.f32 %v2709, %v2837
        %v2839 = vpop.f32.mrb[0].mxu0
        %2840 = vmatprep.mubr.f32.mxu0 0.0
        %v2841 = vand.u32 %v1926, 4294901760
        %2842 = vmatmul.mubr.f32.gmra.mrb[0].mxu0 %v2841
        %v2843 = vpop.f32.mrb[0].mxu0
        %v2844 = vadd.f32 %v2715, %v2843
        %v2845 = vpop.f32.mrb[0].mxu0
        %2846 = vmatprep.mubr.f32.mxu0 0.0
        %v2847 = vand.u32 %v1927, 4294901760
        %2848 = vmatmul.mubr.f32.gmra.mrb[0].mxu0 %v2847
        %v2849 = vpop.f32.mrb[0].mxu0
        %v2850 = vadd.f32 %v2721, %v2849
        %v2851 = vpop.f32.mrb[0].mxu0
        %2852 = vmatprep.mubr.f32.mxu0 0.0
        %v2853 = vand.u32 %v1928, 4294901760
        %2854 = vmatmul.mubr.f32.gmra.mrb[0].mxu0 %v2853
        %v2855 = vpop.f32.mrb[0].mxu0
        %v2856 = vadd.f32 %v2727, %v2855
        %v2857 = vpop.f32.mrb[0].mxu0
        %2858 = vmatprep.mubr.f32.mxu0 0.0
        %v2859 = vand.u32 %v1929, 4294901760
        %2860 = vmatmul.mubr.f32.gmra.mrb[0].mxu0 %v2859
        %v2861 = vpop.f32.mrb[0].mxu0
        %v2862 = vadd.f32 %v2733, %v2861
        %v2863 = vpop.f32.mrb[0].mxu0
        %2864 = vmatprep.mubr.f32.mxu0 0.0
        %v2865 = vand.u32 %v1930, 4294901760
        %2866 = vmatmul.mubr.f32.gmra.mrb[0].mxu0 %v2865
        %v2867 = vpop.f32.mrb[0].mxu0
        %v2868 = vadd.f32 %v2739, %v2867
        %v2869 = vpop.f32.mrb[0].mxu0
        %2870 = vmatprep.mubr.f32.mxu0 0.0
        %v2871 = vand.u32 %v1931, 4294901760
        %2872 = vmatmul.mubr.f32.gmra.mrb[0].mxu0 %v2871
        %v2873 = vpop.f32.mrb[0].mxu0
        %v2874 = vadd.f32 %v2745, %v2873
        %v2875 = vpop.f32.mrb[0].mxu0
        %2876 = vmatprep.mubr.f32.mxu0 0.0
        %v2877 = vand.u32 %v1932, 4294901760
        %2878 = vmatmul.mubr.f32.gmra.mrb[0].mxu0 %v2877
        %v2879 = vpop.f32.mrb[0].mxu0
        %v2880 = vadd.f32 %v2751, %v2879
        %v2881 = vpop.f32.mrb[0].mxu0
        %2882 = vdwg.mxu0
        %2883 = vst [vmem:[%s332] sm:$0xff] %v2838
        %2884 = vst [vmem:[%s332 + $0x8] sm:$0xff] %v2844
        %2885 = vst [vmem:[%s332 + $0x10] sm:$0xff] %v2850
        %2886 = vst [vmem:[%s332 + $0x18] sm:$0xff] %v2856
        %2887 = vst [vmem:[%s332 + $0x20] sm:$0xff] %v2862
        %2888 = vst [vmem:[%s332 + $0x28] sm:$0xff] %v2868
        %2889 = vst [vmem:[%s332 + $0x30] sm:$0xff] %v2874
        %2890 = vst [vmem:[%s332 + $0x38] sm:$0xff] %v2880
        %2891 = vst [vmem:[%s368] sm:$0x1] %v1860
        %v2892 = vmul.f32 %v385, %v385
        %v2893 = vmul.f32 %v386, %v386
        %v2894 = vmul.f32 %v387, %v387
        %v2895 = vmul.f32 %v388, %v388
        %v2896 = vmul.f32 %v389, %v389
        %v2897 = vmul.f32 %v390, %v390
        %v2898 = vmul.f32 %v391, %v391
        %v2899 = vmul.f32 %v392, %v392
        %v2900 = vadd.f32 %v2892, %v2893
        %v2901 = vadd.f32 %v2900, %v2894
        %v2902 = vadd.f32 %v2901, %v2895
        %v2903 = vadd.f32 %v2902, %v2896
        %v2904 = vadd.f32 %v2903, %v2897
        %v2905 = vadd.f32 %v2904, %v2898
        %v2906 = vadd.f32 %v2905, %v2899
        %v2907 = vrot.slane %v2906, 4
        %v2908 = vadd.f32 %v2906, %v2907
        %v2909 = vrot.slane %v2908, 2
        %v2910 = vadd.f32 %v2908, %v2909
        %v2911 = vrot.slane %v2910, 1
        %v2912 = vadd.f32 %v2910, %v2911
        %v2913 = vmul.f32 %v1772, 2.0
        %v2914 = vadd.f32 %v2912, %v2913
        %v2915 = vmax.f32 %v2914, 0.0
        %vm2916 = vcmask 1040384
        %v2917 = vsel %vm2916, %v2915, 0.0
        %2918 = vadd.xlane.f32.xlu0 %v2917
        %v2919 = vpop.xlane.xlu0 %2918
        %v2920 = vrot.slane %v2919, 4
        %v2921 = vadd.f32 %v2919, %v2920
        %v2922 = vrot.slane %v2921, 2
        %v2923 = vadd.f32 %v2921, %v2922
        %v2924 = vrot.slane %v2923, 1
        %v2925 = vadd.f32 %v2923, %v2924
        %s2926 = vtos %v2925
        %v2927 = vstv %s2926
        %vm2928 = vcmask 0
        %2929 = vst.msk [vmem:[%s375] sm:$0x1] %vm2928, %v2927
        %2930 = vadd.xlane.f32.xlu0 %v1893
        %v2931 = vpop.xlane.xlu0 %2930
        %2932 = vadd.xlane.f32.xlu0 %v1894
        %v2933 = vpop.xlane.xlu0 %2932
        %2934 = vadd.xlane.f32.xlu0 %v1895
        %v2935 = vpop.xlane.xlu0 %2934
        %2936 = vadd.xlane.f32.xlu0 %v1896
        %v2937 = vpop.xlane.xlu0 %2936
        %2938 = vadd.xlane.f32.xlu0 %v1897
        %v2939 = vpop.xlane.xlu0 %2938
        %2940 = vadd.xlane.f32.xlu0 %v1898
        %v2941 = vpop.xlane.xlu0 %2940
        %2942 = vadd.xlane.f32.xlu0 %v1899
        %v2943 = vpop.xlane.xlu0 %2942
        %2944 = vadd.xlane.f32.xlu0 %v1900
        %v2945 = vpop.xlane.xlu0 %2944
        %2946 = vadd.xlane.f32.xlu0 %v1901
        %v2947 = vpop.xlane.xlu0 %2946
        %2948 = vadd.xlane.f32.xlu0 %v1902
        %v2949 = vpop.xlane.xlu0 %2948
        %2950 = vadd.xlane.f32.xlu0 %v1903
        %v2951 = vpop.xlane.xlu0 %2950
        %2952 = vadd.xlane.f32.xlu0 %v1904
        %v2953 = vpop.xlane.xlu0 %2952
        %2954 = vadd.xlane.f32.xlu0 %v1905
        %v2955 = vpop.xlane.xlu0 %2954
        %2956 = vadd.xlane.f32.xlu0 %v1906
        %v2957 = vpop.xlane.xlu0 %2956
        %2958 = vadd.xlane.f32.xlu0 %v1907
        %v2959 = vpop.xlane.xlu0 %2958
        %2960 = vadd.xlane.f32.xlu0 %v1908
        %v2961 = vpop.xlane.xlu0 %2960
        %vm2962 = vcmask 7168
        %2963 = vst.msk [vmem:[%s384] sm:$0xff] %vm2962, %v2931
        %2964 = vst.msk [vmem:[%s384 + $0x8] sm:$0xff] %vm2962, %v2933
        %2965 = vst.msk [vmem:[%s384 + $0x10] sm:$0xff] %vm2962, %v2935
        %2966 = vst.msk [vmem:[%s384 + $0x18] sm:$0xff] %vm2962, %v2937
        %2967 = vst.msk [vmem:[%s384 + $0x20] sm:$0xff] %vm2962, %v2939
        %2968 = vst.msk [vmem:[%s384 + $0x28] sm:$0xff] %vm2962, %v2941
        %2969 = vst.msk [vmem:[%s384 + $0x30] sm:$0xff] %vm2962, %v2943
        %2970 = vst.msk [vmem:[%s384 + $0x38] sm:$0xff] %vm2962, %v2945
        %2971 = vst.msk [vmem:[%s384 + $0x40] sm:$0xff] %vm2962, %v2947
        %2972 = vst.msk [vmem:[%s384 + $0x48] sm:$0xff] %vm2962, %v2949
        %2973 = vst.msk [vmem:[%s384 + $0x50] sm:$0xff] %vm2962, %v2951
        %2974 = vst.msk [vmem:[%s384 + $0x58] sm:$0xff] %vm2962, %v2953
        %2975 = vst.msk [vmem:[%s384 + $0x60] sm:$0xff] %vm2962, %v2955
        %2976 = vst.msk [vmem:[%s384 + $0x68] sm:$0xff] %vm2962, %v2957
        %2977 = vst.msk [vmem:[%s384 + $0x70] sm:$0xff] %vm2962, %v2959
        %2978 = vst.msk [vmem:[%s384 + $0x78] sm:$0xff] %vm2962, %v2961
        %s2979 = sand.u32 %s110, 1
        %s2980 = sand.u32 %s110, 1
        %s2981 = smul.addr %s2980, 64
        %s2982 = scalar_lea.vmem [#allocation3], %s2981
        %p2983 = scmp.lt.s32.totalorder %s22, 1
        %s2984 = scalar_select %p2983, %s22, 1
        %p2985 = scmp.lt.s32.totalorder %s23, 1
        %s2986 = scalar_select %p2985, %s23, 1
        %s2987 = smul.addr %s2984, 2
        %s2988 = sadd.s32 %s2986, %s2987
        %s2989 = scalar_lea.vmem %s4, %s2988
        %p2990 = scmp.lt.s32.totalorder %s22, 1
        %s2991 = scalar_select %p2990, %s22, 1
        %p2992 = scmp.lt.s32.totalorder %s23, 1
        %s2993 = scalar_select %p2992, %s23, 1
        %s2994 = smul.addr %s2991, 2
        %s2995 = sadd.s32 %s2993, %s2994
        %s2996 = scalar_lea.vmem %s5, %s2995
        %p2997 = scmp.lt.s32.totalorder %s22, 1
        %s2998 = scalar_select %p2997, %s22, 1
        %p2999 = scmp.lt.s32.totalorder %s23, 1
        %s3000 = scalar_select %p2999, %s23, 1
        %s3001 = smul.addr %s3000, 16
        %s3002 = smul.addr %s2998, 32
        %s3003 = sadd.s32 %s3001, %s3002
        %s3004 = smul.addr %s3003, 8
        %s3005 = scalar_lea.vmem %s6, %s3004
        // Predicated region
        $region71: #{vector_quantizer_ema_forward.1} parent=65 // pred_check
          %p3006 = pneg %p120
        $region72: #{vector_quantizer_ema_forward.1} parent=65 // pred_check_branch
          %3008 = sbr.rel (%p3006) target = $region74
        $region73: #{vector_quantizer_ema_forward.1} parent=65 // pred_region
          %s3009 = smul.addr %s22, 16
          %s3010 = sadd.s32 %s23, %s3009
          %s3011 = smul.addr %s3010, 8
          %s3012 = scalar_lea.vmem %s3, %s3011
          // Predicated region
          $region75: #{vector_quantizer_ema_forward.1} parent=73 // pred_check
            _
          $region76: #{vector_quantizer_ema_forward.1} parent=73 // pred_check_branch
            %3014 = sbr.rel (0) target = $region78
          $region77: #{vector_quantizer_ema_forward.1} parent=73 // pred_region
            // Predicated region
            $region79: #{vector_quantizer_ema_forward.1} parent=77 // pred_check
              _
            $region80: #{vector_quantizer_ema_forward.1} parent=77 // pred_check_branch
              %3016 = sbr.rel (0) target = $region82
            $region81: #{vector_quantizer_ema_forward.1} parent=77 // pred_region
              // Predicated region
              $region94: #{vector_quantizer_ema_forward.1} parent=81 // pred_check
                _
              $region95: #{vector_quantizer_ema_forward.1} parent=81 // pred_check_branch
                %3045 = sbr.rel (0) target = $region97
              $region96: #{vector_quantizer_ema_forward.1} parent=81 // pred_region
                loop: start=0, step=1, limit=1
                $region98: #{vector_quantizer_ema_forward.1} parent=96 // loop_pre_header
                  _
                $region99: #{vector_quantizer_ema_forward.1} parent=96 // loop_header
                  %s3047 = sphi 0, %s3051
                  %p3048 = scmp.ge.s32.totalorder %s3047, 1
                  %s3052 = sphi %s2982, %s2982
                  %s3053 = sphi %s3012, %s3012
                $region100: #{vector_quantizer_ema_forward.1} parent=96 // loop_header_branch
                  %3050 = sbr.rel (%p3048) target = $region104
                $region101: #{vector_quantizer_ema_forward.1} parent=96 // loop_body
                  %v3054 = vld [vmem:[%s3052] sm:$0xff]
                  %3055 = vst [vmem:[%s3053] sm:$0xff] %v3054
                  %v3056 = vld [vmem:[%s3052 + $0x8] sm:$0xff]
                  %3057 = vst [vmem:[%s3053 + $0x10] sm:$0xff] %v3056
                  %v3058 = vld [vmem:[%s3052 + $0x10] sm:$0xff]
                  %3059 = vst [vmem:[%s3053 + $0x20] sm:$0xff] %v3058
                  %v3060 = vld [vmem:[%s3052 + $0x18] sm:$0xff]
                  %3061 = vst [vmem:[%s3053 + $0x30] sm:$0xff] %v3060
                  %v3062 = vld [vmem:[%s3052 + $0x20] sm:$0xff]
                  %3063 = vst [vmem:[%s3053 + $0x40] sm:$0xff] %v3062
                  %v3064 = vld [vmem:[%s3052 + $0x28] sm:$0xff]
                  %3065 = vst [vmem:[%s3053 + $0x50] sm:$0xff] %v3064
                  %v3066 = vld [vmem:[%s3052 + $0x30] sm:$0xff]
                  %3067 = vst [vmem:[%s3053 + $0x60] sm:$0xff] %v3066
                  %v3068 = vld [vmem:[%s3052 + $0x38] sm:$0xff]
                  %3069 = vst [vmem:[%s3053 + $0x70] sm:$0xff] %v3068
                $region102: #{vector_quantizer_ema_forward.1} parent=96 // loop_footer
                  %s3051 = sadd.s32 1, %s3047
                $region103: #{vector_quantizer_ema_forward.1} parent=96 // loop_footer_branch
                  %3046 = sbr.rel target = $region99
                $region104: #{vector_quantizer_ema_forward.1} parent=96 // loop_exit
                  _
              $region97: #{vector_quantizer_ema_forward.1} parent=81 // pred_fallthru
                _
              // Predicated region
              $region105: #{vector_quantizer_ema_forward.1} parent=81 // pred_check
                _
              $region106: #{vector_quantizer_ema_forward.1} parent=81 // pred_check_branch
                %3071 = sbr.rel target = $region108
              $region107: #{vector_quantizer_ema_forward.1} parent=81 // pred_region
                _
              $region108: #{vector_quantizer_ema_forward.1} parent=81 // pred_fallthru
                _
            $region82: #{vector_quantizer_ema_forward.1} parent=77 // pred_fallthru
              _
            // Predicated region
            $region83: #{vector_quantizer_ema_forward.1} parent=77 // pred_check
              _
            $region84: #{vector_quantizer_ema_forward.1} parent=77 // pred_check_branch
              %3018 = sbr.rel target = $region86
            $region85: #{vector_quantizer_ema_forward.1} parent=77 // pred_region
              loop: start=0, step=1, limit=1
              $region87: #{vector_quantizer_ema_forward.1} parent=85 // loop_pre_header
                _
              $region88: #{vector_quantizer_ema_forward.1} parent=85 // loop_header
                %s3021 = sphi 0, %s3025
                %p3022 = scmp.ge.s32.totalorder %s3021, 1
                %s3026 = sphi %s2982, %s2982
                %s3027 = sphi %s3012, %s3012
              $region89: #{vector_quantizer_ema_forward.1} parent=85 // loop_header_branch
                %3024 = sbr.rel (%p3022) target = $region93
              $region90: #{vector_quantizer_ema_forward.1} parent=85 // loop_body
                %v3028 = vld [vmem:[%s3026] sm:$0xff]
                %3029 = vst [vmem:[%s3027] sm:$0xff] %v3028
                %v3030 = vld [vmem:[%s3026 + $0x8] sm:$0xff]
                %3031 = vst [vmem:[%s3027 + $0x10] sm:$0xff] %v3030
                %v3032 = vld [vmem:[%s3026 + $0x10] sm:$0xff]
                %3033 = vst [vmem:[%s3027 + $0x20] sm:$0xff] %v3032
                %v3034 = vld [vmem:[%s3026 + $0x18] sm:$0xff]
                %3035 = vst [vmem:[%s3027 + $0x30] sm:$0xff] %v3034
                %v3036 = vld [vmem:[%s3026 + $0x20] sm:$0xff]
                %3037 = vst [vmem:[%s3027 + $0x40] sm:$0xff] %v3036
                %v3038 = vld [vmem:[%s3026 + $0x28] sm:$0xff]
                %3039 = vst [vmem:[%s3027 + $0x50] sm:$0xff] %v3038
                %v3040 = vld [vmem:[%s3026 + $0x30] sm:$0xff]
                %3041 = vst [vmem:[%s3027 + $0x60] sm:$0xff] %v3040
                %v3042 = vld [vmem:[%s3026 + $0x38] sm:$0xff]
                %3043 = vst [vmem:[%s3027 + $0x70] sm:$0xff] %v3042
              $region91: #{vector_quantizer_ema_forward.1} parent=85 // loop_footer
                %s3025 = sadd.s32 1, %s3021
              $region92: #{vector_quantizer_ema_forward.1} parent=85 // loop_footer_branch
                %3020 = sbr.rel target = $region88
              $region93: #{vector_quantizer_ema_forward.1} parent=85 // loop_exit
                _
            $region86: #{vector_quantizer_ema_forward.1} parent=77 // pred_fallthru
              _
          $region78: #{vector_quantizer_ema_forward.1} parent=73 // pred_fallthru
            _
          %3072 = vnop
        $region74: #{vector_quantizer_ema_forward.1} parent=65 // pred_fallthru
          _
        // Predicated region
        $region109: #{vector_quantizer_ema_forward.1} parent=65 // pred_check
          %p3073 = pneg %p148
        $region110: #{vector_quantizer_ema_forward.1} parent=65 // pred_check_branch
          %3075 = sbr.rel (%p3073) target = $region112
        $region111: #{vector_quantizer_ema_forward.1} parent=65 // pred_region
          _
        $region112: #{vector_quantizer_ema_forward.1} parent=65 // pred_fallthru
          _
        // Predicated region
        $region113: #{vector_quantizer_ema_forward.1} parent=65 // pred_check
          %p3076 = pneg %p176
        $region114: #{vector_quantizer_ema_forward.1} parent=65 // pred_check_branch
          %3078 = sbr.rel (%p3076) target = $region116
        $region115: #{vector_quantizer_ema_forward.1} parent=65 // pred_region
          _
        $region116: #{vector_quantizer_ema_forward.1} parent=65 // pred_fallthru
          _
        // Predicated region
        $region117: #{vector_quantizer_ema_forward.1} parent=65 // pred_check
          %p3079 = pneg %p204
        $region118: #{vector_quantizer_ema_forward.1} parent=65 // pred_check_branch
          %3081 = sbr.rel (%p3079) target = $region120
        $region119: #{vector_quantizer_ema_forward.1} parent=65 // pred_region
          _
        $region120: #{vector_quantizer_ema_forward.1} parent=65 // pred_fallthru
          _
      $region66: #{vector_quantizer_ema_forward.1} parent=5 // pred_fallthru
        _
      %p3082 = scmp.le.s32.totalorder 2, %s13
      // Predicated region
      $region121: #{vector_quantizer_ema_forward.1} parent=5 // pred_check
        %p3083 = pneg %p3082
      $region122: #{vector_quantizer_ema_forward.1} parent=5 // pred_check_branch
        %3085 = sbr.rel (%p3083) target = $region124
      $region123: #{vector_quantizer_ema_forward.1} parent=5 // pred_region
        %s3086 = ssub.s32 %s13, 2
        // Predicated region
        $region125: #{vector_quantizer_ema_forward.1} parent=123 // pred_check
          %p3087 = pneg %p126
        $region126: #{vector_quantizer_ema_forward.1} parent=123 // pred_check_branch
          %3089 = sbr.rel (%p3087) target = $region128
        $region127: #{vector_quantizer_ema_forward.1} parent=123 // pred_region
          %s3090 = sand.u32 %s111, 1
          %s3091 = sand.u32 %s111, 1
          %s3092 = smul.addr %s3091, 64
          %s3093 = scalar_lea.vmem [#allocation3], %s3092
        $region128: #{vector_quantizer_ema_forward.1} parent=123 // pred_fallthru
          _
        // Predicated region
        $region129: #{vector_quantizer_ema_forward.1} parent=123 // pred_check
          %p3094 = pneg %p154
        $region130: #{vector_quantizer_ema_forward.1} parent=123 // pred_check_branch
          %3096 = sbr.rel (%p3094) target = $region132
        $region131: #{vector_quantizer_ema_forward.1} parent=123 // pred_region
          %p3097 = scmp.lt.s32.totalorder %s24, 1
          %s3098 = scalar_select %p3097, %s24, 1
          %p3099 = scmp.lt.s32.totalorder %s25, 1
          %s3100 = scalar_select %p3099, %s25, 1
          %s3101 = smul.addr %s3098, 2
          %s3102 = sadd.s32 %s3100, %s3101
          %s3103 = scalar_lea.vmem %s4, %s3102
        $region132: #{vector_quantizer_ema_forward.1} parent=123 // pred_fallthru
          _
        // Predicated region
        $region133: #{vector_quantizer_ema_forward.1} parent=123 // pred_check
          %p3104 = pneg %p182
        $region134: #{vector_quantizer_ema_forward.1} parent=123 // pred_check_branch
          %3106 = sbr.rel (%p3104) target = $region136
        $region135: #{vector_quantizer_ema_forward.1} parent=123 // pred_region
          %p3107 = scmp.lt.s32.totalorder %s24, 1
          %s3108 = scalar_select %p3107, %s24, 1
          %p3109 = scmp.lt.s32.totalorder %s25, 1
          %s3110 = scalar_select %p3109, %s25, 1
          %s3111 = smul.addr %s3108, 2
          %s3112 = sadd.s32 %s3110, %s3111
          %s3113 = scalar_lea.vmem %s5, %s3112
        $region136: #{vector_quantizer_ema_forward.1} parent=123 // pred_fallthru
          _
        // Predicated region
        $region137: #{vector_quantizer_ema_forward.1} parent=123 // pred_check
          %p3114 = pneg %p210
        $region138: #{vector_quantizer_ema_forward.1} parent=123 // pred_check_branch
          %3116 = sbr.rel (%p3114) target = $region140
        $region139: #{vector_quantizer_ema_forward.1} parent=123 // pred_region
          %p3117 = scmp.lt.s32.totalorder %s24, 1
          %s3118 = scalar_select %p3117, %s24, 1
          %p3119 = scmp.lt.s32.totalorder %s25, 1
          %s3120 = scalar_select %p3119, %s25, 1
          %s3121 = smul.addr %s3120, 16
          %s3122 = smul.addr %s3118, 32
          %s3123 = sadd.s32 %s3121, %s3122
          %s3124 = smul.addr %s3123, 8
          %s3125 = scalar_lea.vmem %s6, %s3124
        $region140: #{vector_quantizer_ema_forward.1} parent=123 // pred_fallthru
          _
      $region124: #{vector_quantizer_ema_forward.1} parent=5 // pred_fallthru
        _
    $region6: #{vector_quantizer_ema_forward.1} parent=1 // loop_footer
      %s17 = sadd.s32 1, %s13
    $region7: #{vector_quantizer_ema_forward.1} parent=1 // loop_footer_branch
      %12 = sbr.rel target = $region3
    $region8: #{vector_quantizer_ema_forward.1} parent=1 // loop_exit
      _

</llo_original>
